<compile_context>
chip_gen: v7x
topology: tpu7x:2x2x1
jax: 0.10.0
libtpu: 0.0.40
codegen_flags: <defaults>
</compile_context>

<pallas_src>
import functools

import jax
import jax.numpy as jnp
from jax import lax
from jax.experimental import pallas as pl
from jax.experimental.pallas import tpu as pltpu


def _round_up(x, m):
    return (x + m - 1) // m * m


def _lane_pad(n):        # last (lane) dim -> multiple of 128
    return _round_up(max(n, 128), 128)


def _sublane_pad(n):     # second-to-last (sublane) dim -> multiple of 8
    return _round_up(max(n, 8), 8)


def _sigmoid(x):
    # One EUP op (tanh) instead of exp + divide: sigmoid(x) = 0.5*tanh(x/2) + 0.5.
    return 0.5 * jnp.tanh(0.5 * x) + 0.5


# ----------------------------------------------------------------------------
# Single fused Pallas kernel: all LSTM layers over the whole sequence + FC head.
# ----------------------------------------------------------------------------
def fused_lstm_kernel(*refs, layer_dim, seq_len, hidden_pad, batch_pad,
                      out_pad, output_dim, activation):
    L, T, H, B = layer_dim, seq_len, hidden_pad, batch_pad

    x_ref = refs[0]                                     # (T*Bp, Dp)    bf16
    wx_refs = [refs[1 + 3 * l] for l in range(L)]       # (Din_p, 4Hp)  bf16
    wh_refs = [refs[2 + 3 * l] for l in range(L)]       # (Hp, 4Hp)     bf16
    b_refs = [refs[3 + 3 * l] for l in range(L)]        # (1, 4Hp)      f32
    fc_w_ref = refs[1 + 3 * L]                          # (Hp, Op)      bf16
    fc_b_ref = refs[2 + 3 * L]                          # (1, Op)       f32
    h0_ref = refs[3 + 3 * L]                            # (L, Bp, Hp)   f32
    c0_ref = refs[4 + 3 * L]                            # (L, Bp, Hp)   f32
    out_ref = refs[5 + 3 * L]                           # (Bp, Op)      f32
    proj_ref = refs[6 + 3 * L]                          # (T, Bp, 4Hp)  f32 scratch
    hseq_ref = refs[7 + 3 * L]                          # (T, Bp, Hp)   f32 scratch

    fully_unroll = (T * L) <= 64

    h_top = None
    for l in range(L):
        # ---- Batched input projection, hoisted off the recurrence chain --------
        if l == 0:
            inp_flat = x_ref[...]                                    # (T*Bp, Dp) bf16
        else:
            inp_flat = hseq_ref[...].reshape(T * B, H).astype(jnp.bfloat16)
        proj = jnp.dot(inp_flat, wx_refs[l][...],
                       preferred_element_type=jnp.float32) + b_refs[l][...]
        proj_ref[...] = proj.reshape(T, B, 4 * H)

        is_top = (l == L - 1)
        wh_ref = wh_refs[l]

        # ---- Time recurrence: only h_{t-1} @ W_hh + gate math on the chain -----
        def step(t, carry, wh_ref=wh_ref, is_top=is_top):
            h, c = carry
            gates = proj_ref[t] + jnp.dot(h.astype(jnp.bfloat16), wh_ref[...],
                                          preferred_element_type=jnp.float32)
            # Gate slices land exactly on 128-lane tile boundaries (H padded to 128).
            i_g = _sigmoid(gates[:, 0 * H:1 * H])
            f_g = _sigmoid(gates[:, 1 * H:2 * H])
            g_g = jnp.tanh(gates[:, 2 * H:3 * H])
            o_g = _sigmoid(gates[:, 3 * H:4 * H])
            c_new = f_g * c + i_g * g_g
            h_new = o_g * jnp.tanh(c_new)
            if not is_top:                    # next layer's batched projection input
                hseq_ref[t] = h_new
            return h_new, c_new

        carry = (h0_ref[l], c0_ref[l])
        if fully_unroll:
            for t in range(T):                # concrete t, full unroll (small T*L)
                carry = step(t, carry)
        else:
            carry = lax.fori_loop(0, T, step, carry, unroll=2)
        if is_top:
            h_top = carry[0]                  # == h[-1] after the full time loop

    # Dropout: eval-mode identity (see TODO at top).  Fused bf16 FC head:
    logits = jnp.dot(h_top.astype(jnp.bfloat16), fc_w_ref[...],
                     preferred_element_type=jnp.float32) + fc_b_ref[...]
    if activation == "sigmoid":
        out = _sigmoid(logits)
    elif activation == "softmax":
        # Mask lane-padding columns so the softmax normalizes over real logits only.
        col = lax.broadcasted_iota(jnp.int32, (B, out_pad), 1)
        logits = jnp.where(col < output_dim, logits, jnp.float32(-1e30))
        m = jnp.max(logits, axis=-1, keepdims=True)
        e = jnp.exp(logits - m)
        out = e * pl.reciprocal(jnp.sum(e, axis=-1, keepdims=True), approx=True)
    else:
        out = logits
    out_ref[...] = out.astype(out_ref.dtype)


# ----------------------------------------------------------------------------
# Parameter init (PyTorch-style uniform(-1/sqrt(H), 1/sqrt(H)), raw layout)
# ----------------------------------------------------------------------------
def init_params(key, input_dim, hidden_dim, layer_dim, output_dim):
    bound = 1.0 / float(hidden_dim) ** 0.5
    cells = []
    for layer in range(layer_dim):
        d_in = input_dim if layer == 0 else hidden_dim
        key, k1, k2, k3, k4 = jax.random.split(key, 5)
        w_ih = jax.random.uniform(k1, (4 * hidden_dim, d_in),
                                  minval=-bound, maxval=bound, dtype=jnp.float32)
        w_hh = jax.random.uniform(k2, (4 * hidden_dim, hidden_dim),
                                  minval=-bound, maxval=bound, dtype=jnp.float32)
        b_ih = jax.random.uniform(k3, (4 * hidden_dim,),
                                  minval=-bound, maxval=bound, dtype=jnp.float32)
        b_hh = jax.random.uniform(k4, (4 * hidden_dim,),
                                  minval=-bound, maxval=bound, dtype=jnp.float32)
        cells.append({"w_ih": w_ih, "w_hh": w_hh, "b": b_ih + b_hh})
    key, k5, k6 = jax.random.split(key, 3)
    fc_w = jax.random.uniform(k5, (output_dim, hidden_dim),
                              minval=-bound, maxval=bound, dtype=jnp.float32)
    fc_b = jax.random.uniform(k6, (output_dim,),
                              minval=-bound, maxval=bound, dtype=jnp.float32)
    return {"cells": cells, "fc_w": fc_w, "fc_b": fc_b}


def init_hidden(batch_size, hidden_dim, layer_dim):
    h = [jnp.zeros((batch_size, hidden_dim), jnp.float32) for _ in range(layer_dim)]
    c = [jnp.zeros((batch_size, hidden_dim), jnp.float32) for _ in range(layer_dim)]
    return h, c


# ----------------------------------------------------------------------------
# Weight packing: split W_x / W_h, zero-pad to (8,128)-aligned shapes, re-lay the
# 4H gate axis so each i/f/g/o block starts on a 128-lane boundary, bf16 matmul
# operands.  FC head padded to a lane-dense (Hp, O_pad=128) bf16 weight.
# ----------------------------------------------------------------------------
def _pad_gate_blocks(arr, H, H_pad):
    blocks = []
    for k in range(4):
        blk = arr[..., k * H:(k + 1) * H]
        pad = [(0, 0)] * (arr.ndim - 1) + [(0, H_pad - H)]
        blocks.append(jnp.pad(blk, pad))
    return jnp.concatenate(blocks, axis=-1)


def pack_params(params, input_dim, hidden_dim, layer_dim, output_dim):
    H_pad = _lane_pad(hidden_dim)
    O_pad = _lane_pad(output_dim)
    packed = {"cells": []}
    for layer, cell in enumerate(params["cells"]):
        d_in = input_dim if layer == 0 else hidden_dim
        d_in_pad = _lane_pad(d_in)
        w_x = jnp.pad(cell["w_ih"].T, ((0, d_in_pad - d_in), (0, 0)))      # (Dp, 4H)
        w_h = jnp.pad(cell["w_hh"].T, ((0, H_pad - hidden_dim), (0, 0)))   # (Hp, 4H)
        w_x = _pad_gate_blocks(w_x, hidden_dim, H_pad)                     # (Dp, 4Hp)
        w_h = _pad_gate_blocks(w_h, hidden_dim, H_pad)                     # (Hp, 4Hp)
        b = _pad_gate_blocks(cell["b"].reshape(1, -1), hidden_dim, H_pad)  # (1, 4Hp)
        packed["cells"].append({"w_x": w_x.astype(jnp.bfloat16),
                                "w_h": w_h.astype(jnp.bfloat16),
                                "b": b.astype(jnp.float32)})
    packed["fc_w"] = jnp.pad(
        params["fc_w"].T,
        ((0, H_pad - hidden_dim), (0, O_pad - output_dim))).astype(jnp.bfloat16)
    packed["fc_b"] = jnp.pad(
        params["fc_b"].reshape(1, -1),
        ((0, 0), (0, O_pad - output_dim))).astype(jnp.float32)
    return packed


# ----------------------------------------------------------------------------
# Full forward (mirrors LSTM.forward): pad + time-major + bf16 cast in one pass,
# then one fused kernel.
# ----------------------------------------------------------------------------
def lstm_forward(x, hidden, packed, *, hidden_dim, layer_dim, output_dim,
                 output_activation=None):
    B, T, D = x.shape
    B_pad = _sublane_pad(B)
    D_pad = _lane_pad(D)
    H_pad = _lane_pad(hidden_dim)
    O_pad = _lane_pad(output_dim)

    h_list, c_list = hidden
    h0 = jnp.pad(jnp.stack(h_list),
                 ((0, 0), (0, B_pad - B), (0, H_pad - hidden_dim))).astype(jnp.float32)
    c0 = jnp.pad(jnp.stack(c_list),
                 ((0, 0), (0, B_pad - B), (0, H_pad - hidden_dim))).astype(jnp.float32)

    # Time-major transpose + pad + bf16 cast + (T,Bp)->T*Bp flatten, fused under jit.
    x_flat = jnp.pad(jnp.transpose(x, (1, 0, 2)),
                     ((0, 0), (0, B_pad - B), (0, D_pad - D)))
    x_flat = x_flat.astype(jnp.bfloat16).reshape(T * B_pad, D_pad)

    flat = []
    for cell in packed["cells"]:
        flat.extend((cell["w_x"], cell["w_h"], cell["b"]))
    inputs = (x_flat, *flat, packed["fc_w"], packed["fc_b"], h0, c0)

    # Size VMEM from the actual buffers (double-buffer margin for I/O) and cap by
    # the device's physical VMEM (64 MiB on v7x vs 128 MiB on v5e/v6e).
    io_bytes = sum(int(a.size) * a.dtype.itemsize for a in inputs)
    io_bytes += B_pad * O_pad * 4
    scratch_bytes = T * B_pad * (4 * H_pad + H_pad) * 4
    need = 2 * io_bytes + scratch_bytes + (2 << 20)
    cap = 100 << 20
    try:
        cap = min(cap, int(pltpu.get_tpu_info().vmem_capacity_bytes) - (8 << 20))
    except Exception:
        pass
    vmem_limit = int(min(max(need, 32 << 20), max(cap, 16 << 20)))

    kernel = functools.partial(
        fused_lstm_kernel, layer_dim=layer_dim, seq_len=T, hidden_pad=H_pad,
        batch_pad=B_pad, out_pad=O_pad, output_dim=output_dim,
        activation=output_activation)

    out_pad = pl.pallas_call(
        kernel,
        out_shape=jax.ShapeDtypeStruct((B_pad, O_pad), jnp.float32),
        scratch_shapes=[pltpu.VMEM((T, B_pad, 4 * H_pad), jnp.float32),
                        pltpu.VMEM((T, B_pad, H_pad), jnp.float32)],
        compiler_params=pltpu.CompilerParams(vmem_limit_bytes=vmem_limit),
    )(*inputs)
    return out_pad[:B, :output_dim]


# ----------------------------------------------------------------------------
# Pure-JAX reference (f32, raw layout) for a correctness check.
# ----------------------------------------------------------------------------
def reference_forward(x, hidden, params, layer_dim, output_activation=None):
    h = [a for a in hidden[0]]
    c = [a for a in hidden[1]]
    B, T, D = x.shape
    for t in range(T):
        inp = x[:, t, :]
        for l in range(layer_dim):
            cell = params["cells"][l]
            gates = inp @ cell["w_ih"].T + h[l] @ cell["w_hh"].T + cell["b"]
            H = h[l].shape[-1]
            i_g = jax.nn.sigmoid(gates[:, 0 * H:1 * H])
            f_g = jax.nn.sigmoid(gates[:, 1 * H:2 * H])
            g_g = jnp.tanh(gates[:, 2 * H:3 * H])
            o_g = jax.nn.sigmoid(gates[:, 3 * H:4 * H])
            c[l] = f_g * c[l] + i_g * g_g
            h[l] = o_g * jnp.tanh(c[l])
            inp = h[l]
    out = h[-1] @ params["fc_w"].T + params["fc_b"]
    if output_activation == "sigmoid":
        out = jax.nn.sigmoid(out)
    elif output_activation == "softmax":
        out = jax.nn.softmax(out, axis=-1)
    return out


if __name__ == "__main__":
    batch_size, seq_length = 2, 8
    input_dim, hidden_dim, layer_dim, output_dim = 16, 32, 2, 8
    output_activation = None

    key = jax.random.PRNGKey(0)
    key, kx = jax.random.split(key)
    x = jax.random.normal(kx, (batch_size, seq_length, input_dim), dtype=jnp.float32)

    params = init_params(key, input_dim, hidden_dim, layer_dim, output_dim)
    packed = pack_params(params, input_dim, hidden_dim, layer_dim, output_dim)
    hidden = init_hidden(batch_size, hidden_dim, layer_dim)

    fwd = jax.jit(functools.partial(
        lstm_forward, hidden_dim=hidden_dim, layer_dim=layer_dim,
        output_dim=output_dim, output_activation=output_activation))
    out = jax.block_until_ready(fwd(x, hidden, packed))
    assert out.shape == (batch_size, output_dim)

    ref = reference_forward(x, hidden, params, layer_dim, output_activation)
    max_err = float(jnp.max(jnp.abs(out - ref)))
    assert max_err < 5e-2, f"max abs error vs f32 reference too large: {max_err}"

    print("KERNEL_OK")
</pallas_src>

<mosaic_0001>
module attributes {stable_mosaic.version = 11 : i64} {
  func.func @fused_lstm_kernel(%arg0: memref<64x128xbf16, #tpu.memory_space<vmem>>, %arg1: memref<128x512xbf16, #tpu.memory_space<vmem>>, %arg2: memref<128x512xbf16, #tpu.memory_space<vmem>>, %arg3: memref<1x512xf32, #tpu.memory_space<vmem>>, %arg4: memref<128x512xbf16, #tpu.memory_space<vmem>>, %arg5: memref<128x512xbf16, #tpu.memory_space<vmem>>, %arg6: memref<1x512xf32, #tpu.memory_space<vmem>>, %arg7: memref<128x128xbf16, #tpu.memory_space<vmem>>, %arg8: memref<1x128xf32, #tpu.memory_space<vmem>>, %arg9: memref<2x8x128xf32, #tpu.memory_space<vmem>>, %arg10: memref<2x8x128xf32, #tpu.memory_space<vmem>>, %arg11: memref<8x128xf32, #tpu.memory_space<vmem>>, %arg12: memref<8x8x512xf32, #tpu.memory_space<vmem>>, %arg13: memref<8x8x128xf32, #tpu.memory_space<vmem>>) attributes {dimension_semantics = [], scalar_prefetch = 0 : i64, scratch_operands = 2 : i64, tpu.core_type = #tpu.core_type<tc>} {
    %c0 = arith.constant 0 : index
    %c0_0 = arith.constant 0 : index
    %0 = vector.load %arg0[%c0, %c0_0] : memref<64x128xbf16, #tpu.memory_space<vmem>>, vector<64x128xbf16>
    %c0_1 = arith.constant 0 : index
    %c0_2 = arith.constant 0 : index
    %1 = vector.load %arg1[%c0_1, %c0_2] : memref<128x512xbf16, #tpu.memory_space<vmem>>, vector<128x512xbf16>
    %cst = arith.constant dense<0.000000e+00> : vector<64x512xf32>
    %2 = tpu.matmul %0, %1, %cst {dimension_numbers = #tpu.dot_dimension_numbers<[1], [0], [0], [1], [0, 0, 1, 1], [], []>} : vector<64x128xbf16>, vector<128x512xbf16>, vector<64x512xf32> -> vector<64x512xf32>
    %c0_3 = arith.constant 0 : index
    %c0_4 = arith.constant 0 : index
    %3 = vector.load %arg3[%c0_3, %c0_4] : memref<1x512xf32, #tpu.memory_space<vmem>>, vector<1x512xf32>
    %4 = vector.broadcast %3 : vector<1x512xf32> to vector<64x512xf32>
    %5 = arith.addf %2, %4 : vector<64x512xf32>
    %6 = vector.shape_cast %5 : vector<64x512xf32> to vector<8x8x512xf32>
    %c0_5 = arith.constant 0 : index
    %c0_6 = arith.constant 0 : index
    %c0_7 = arith.constant 0 : index
    %7 = vector.load %arg12[%c0_5, %c0_6, %c0_7] : memref<8x8x512xf32, #tpu.memory_space<vmem>>, vector<8x8x512xf32>
    tpu.vector_store %arg12[%c0_5, %c0_6, %c0_7], %6 {strides = array<i32>} : memref<8x8x512xf32, #tpu.memory_space<vmem>>, vector<8x8x512xf32>,
    %c0_8 = arith.constant 0 : index
    %c0_9 = arith.constant 0 : index
    %c0_10 = arith.constant 0 : index
    %8 = vector.load %arg9[%c0_8, %c0_9, %c0_10] : memref<2x8x128xf32, #tpu.memory_space<vmem>>, vector<1x8x128xf32>
    %9 = vector.shape_cast %8 : vector<1x8x128xf32> to vector<8x128xf32>
    %c0_11 = arith.constant 0 : index
    %c0_12 = arith.constant 0 : index
    %c0_13 = arith.constant 0 : index
    %10 = vector.load %arg10[%c0_11, %c0_12, %c0_13] : memref<2x8x128xf32, #tpu.memory_space<vmem>>, vector<1x8x128xf32>
    %11 = vector.shape_cast %10 : vector<1x8x128xf32> to vector<8x128xf32>
    %c0_14 = arith.constant 0 : index
    %c0_15 = arith.constant 0 : index
    %c0_16 = arith.constant 0 : index
    %12 = vector.load %arg12[%c0_14, %c0_15, %c0_16] : memref<8x8x512xf32, #tpu.memory_space<vmem>>, vector<1x8x512xf32>
    %13 = vector.shape_cast %12 : vector<1x8x512xf32> to vector<8x512xf32>
    %14 = arith.truncf %9 : vector<8x128xf32> to vector<8x128xbf16>
    %c0_17 = arith.constant 0 : index
    %c0_18 = arith.constant 0 : index
    %15 = vector.load %arg2[%c0_17, %c0_18] : memref<128x512xbf16, #tpu.memory_space<vmem>>, vector<128x512xbf16>
    %cst_19 = arith.constant dense<0.000000e+00> : vector<8x512xf32>
    %16 = tpu.matmul %14, %15, %cst_19 {dimension_numbers = #tpu.dot_dimension_numbers<[1], [0], [0], [1], [0, 0, 1, 1], [], []>} : vector<8x128xbf16>, vector<128x512xbf16>, vector<8x512xf32> -> vector<8x512xf32>
    %17 = arith.addf %13, %16 : vector<8x512xf32>
    %18 = vector.extract_strided_slice %17 {offsets = [0, 0], sizes = [8, 128], strides = [1, 1]} : vector<8x512xf32> to vector<8x128xf32>
    %cst_20 = arith.constant 5.000000e-01 : f32
    %19 = vector.broadcast %cst_20 : f32 to vector<8x128xf32>
    %20 = arith.mulf %19, %18 : vector<8x128xf32>
    %21 = math.tanh %20 : vector<8x128xf32>
    %cst_21 = arith.constant 5.000000e-01 : f32
    %22 = vector.broadcast %cst_21 : f32 to vector<8x128xf32>
    %23 = arith.mulf %22, %21 : vector<8x128xf32>
    %cst_22 = arith.constant 5.000000e-01 : f32
    %24 = vector.broadcast %cst_22 : f32 to vector<8x128xf32>
    %25 = arith.addf %23, %24 : vector<8x128xf32>
    %26 = vector.extract_strided_slice %17 {offsets = [0, 128], sizes = [8, 128], strides = [1, 1]} : vector<8x512xf32> to vector<8x128xf32>
    %cst_23 = arith.constant 5.000000e-01 : f32
    %27 = vector.broadcast %cst_23 : f32 to vector<8x128xf32>
    %28 = arith.mulf %27, %26 : vector<8x128xf32>
    %29 = math.tanh %28 : vector<8x128xf32>
    %cst_24 = arith.constant 5.000000e-01 : f32
    %30 = vector.broadcast %cst_24 : f32 to vector<8x128xf32>
    %31 = arith.mulf %30, %29 : vector<8x128xf32>
    %cst_25 = arith.constant 5.000000e-01 : f32
    %32 = vector.broadcast %cst_25 : f32 to vector<8x128xf32>
    %33 = arith.addf %31, %32 : vector<8x128xf32>
    %34 = vector.extract_strided_slice %17 {offsets = [0, 256], sizes = [8, 128], strides = [1, 1]} : vector<8x512xf32> to vector<8x128xf32>
    %35 = math.tanh %34 : vector<8x128xf32>
    %36 = vector.extract_strided_slice %17 {offsets = [0, 384], sizes = [8, 128], strides = [1, 1]} : vector<8x512xf32> to vector<8x128xf32>
    %cst_26 = arith.constant 5.000000e-01 : f32
    %37 = vector.broadcast %cst_26 : f32 to vector<8x128xf32>
    %38 = arith.mulf %37, %36 : vector<8x128xf32>
    %39 = math.tanh %38 : vector<8x128xf32>
    %cst_27 = arith.constant 5.000000e-01 : f32
    %40 = vector.broadcast %cst_27 : f32 to vector<8x128xf32>
    %41 = arith.mulf %40, %39 : vector<8x128xf32>
    %cst_28 = arith.constant 5.000000e-01 : f32
    %42 = vector.broadcast %cst_28 : f32 to vector<8x128xf32>
    %43 = arith.addf %41, %42 : vector<8x128xf32>
    %44 = arith.mulf %33, %11 : vector<8x128xf32>
    %45 = arith.mulf %25, %35 : vector<8x128xf32>
    %46 = arith.addf %44, %45 : vector<8x128xf32>
    %47 = math.tanh %46 : vector<8x128xf32>
    %48 = arith.mulf %43, %47 : vector<8x128xf32>
    %c0_29 = arith.constant 0 : index
    %c0_30 = arith.constant 0 : index
    %c0_31 = arith.constant 0 : index
    %49 = vector.load %arg13[%c0_29, %c0_30, %c0_31] : memref<8x8x128xf32, #tpu.memory_space<vmem>>, vector<1x8x128xf32>
    %50 = vector.shape_cast %49 : vector<1x8x128xf32> to vector<8x128xf32>
    %51 = vector.shape_cast %48 : vector<8x128xf32> to vector<1x8x128xf32>
    tpu.vector_store %arg13[%c0_29, %c0_30, %c0_31], %51 {strides = array<i32>} : memref<8x8x128xf32, #tpu.memory_space<vmem>>, vector<1x8x128xf32>,
    %c1 = arith.constant 1 : index
    %c0_32 = arith.constant 0 : index
    %c0_33 = arith.constant 0 : index
    %52 = vector.load %arg12[%c1, %c0_32, %c0_33] : memref<8x8x512xf32, #tpu.memory_space<vmem>>, vector<1x8x512xf32>
    %53 = vector.shape_cast %52 : vector<1x8x512xf32> to vector<8x512xf32>
    %54 = arith.truncf %48 : vector<8x128xf32> to vector<8x128xbf16>
    %c0_34 = arith.constant 0 : index
    %c0_35 = arith.constant 0 : index
    %55 = vector.load %arg2[%c0_34, %c0_35] : memref<128x512xbf16, #tpu.memory_space<vmem>>, vector<128x512xbf16>
    %cst_36 = arith.constant dense<0.000000e+00> : vector<8x512xf32>
    %56 = tpu.matmul %54, %55, %cst_36 {dimension_numbers = #tpu.dot_dimension_numbers<[1], [0], [0], [1], [0, 0, 1, 1], [], []>} : vector<8x128xbf16>, vector<128x512xbf16>, vector<8x512xf32> -> vector<8x512xf32>
    %57 = arith.addf %53, %56 : vector<8x512xf32>
    %58 = vector.extract_strided_slice %57 {offsets = [0, 0], sizes = [8, 128], strides = [1, 1]} : vector<8x512xf32> to vector<8x128xf32>
    %cst_37 = arith.constant 5.000000e-01 : f32
    %59 = vector.broadcast %cst_37 : f32 to vector<8x128xf32>
    %60 = arith.mulf %59, %58 : vector<8x128xf32>
    %61 = math.tanh %60 : vector<8x128xf32>
    %cst_38 = arith.constant 5.000000e-01 : f32
    %62 = vector.broadcast %cst_38 : f32 to vector<8x128xf32>
    %63 = arith.mulf %62, %61 : vector<8x128xf32>
    %cst_39 = arith.constant 5.000000e-01 : f32
    %64 = vector.broadcast %cst_39 : f32 to vector<8x128xf32>
    %65 = arith.addf %63, %64 : vector<8x128xf32>
    %66 = vector.extract_strided_slice %57 {offsets = [0, 128], sizes = [8, 128], strides = [1, 1]} : vector<8x512xf32> to vector<8x128xf32>
    %cst_40 = arith.constant 5.000000e-01 : f32
    %67 = vector.broadcast %cst_40 : f32 to vector<8x128xf32>
    %68 = arith.mulf %67, %66 : vector<8x128xf32>
    %69 = math.tanh %68 : vector<8x128xf32>
    %cst_41 = arith.constant 5.000000e-01 : f32
    %70 = vector.broadcast %cst_41 : f32 to vector<8x128xf32>
    %71 = arith.mulf %70, %69 : vector<8x128xf32>
    %cst_42 = arith.constant 5.000000e-01 : f32
    %72 = vector.broadcast %cst_42 : f32 to vector<8x128xf32>
    %73 = arith.addf %71, %72 : vector<8x128xf32>
    %74 = vector.extract_strided_slice %57 {offsets = [0, 256], sizes = [8, 128], strides = [1, 1]} : vector<8x512xf32> to vector<8x128xf32>
    %75 = math.tanh %74 : vector<8x128xf32>
    %76 = vector.extract_strided_slice %57 {offsets = [0, 384], sizes = [8, 128], strides = [1, 1]} : vector<8x512xf32> to vector<8x128xf32>
    %cst_43 = arith.constant 5.000000e-01 : f32
    %77 = vector.broadcast %cst_43 : f32 to vector<8x128xf32>
    %78 = arith.mulf %77, %76 : vector<8x128xf32>
    %79 = math.tanh %78 : vector<8x128xf32>
    %cst_44 = arith.constant 5.000000e-01 : f32
    %80 = vector.broadcast %cst_44 : f32 to vector<8x128xf32>
    %81 = arith.mulf %80, %79 : vector<8x128xf32>
    %cst_45 = arith.constant 5.000000e-01 : f32
    %82 = vector.broadcast %cst_45 : f32 to vector<8x128xf32>
    %83 = arith.addf %81, %82 : vector<8x128xf32>
    %84 = arith.mulf %73, %46 : vector<8x128xf32>
    %85 = arith.mulf %65, %75 : vector<8x128xf32>
    %86 = arith.addf %84, %85 : vector<8x128xf32>
    %87 = math.tanh %86 : vector<8x128xf32>
    %88 = arith.mulf %83, %87 : vector<8x128xf32>
    %c1_46 = arith.constant 1 : index
    %c0_47 = arith.constant 0 : index
    %c0_48 = arith.constant 0 : index
    %89 = vector.load %arg13[%c1_46, %c0_47, %c0_48] : memref<8x8x128xf32, #tpu.memory_space<vmem>>, vector<1x8x128xf32>
    %90 = vector.shape_cast %89 : vector<1x8x128xf32> to vector<8x128xf32>
    %91 = vector.shape_cast %88 : vector<8x128xf32> to vector<1x8x128xf32>
    tpu.vector_store %arg13[%c1_46, %c0_47, %c0_48], %91 {strides = array<i32>} : memref<8x8x128xf32, #tpu.memory_space<vmem>>, vector<1x8x128xf32>,
    %c2 = arith.constant 2 : index
    %c0_49 = arith.constant 0 : index
    %c0_50 = arith.constant 0 : index
    %92 = vector.load %arg12[%c2, %c0_49, %c0_50] : memref<8x8x512xf32, #tpu.memory_space<vmem>>, vector<1x8x512xf32>
    %93 = vector.shape_cast %92 : vector<1x8x512xf32> to vector<8x512xf32>
    %94 = arith.truncf %88 : vector<8x128xf32> to vector<8x128xbf16>
    %c0_51 = arith.constant 0 : index
    %c0_52 = arith.constant 0 : index
    %95 = vector.load %arg2[%c0_51, %c0_52] : memref<128x512xbf16, #tpu.memory_space<vmem>>, vector<128x512xbf16>
    %cst_53 = arith.constant dense<0.000000e+00> : vector<8x512xf32>
    %96 = tpu.matmul %94, %95, %cst_53 {dimension_numbers = #tpu.dot_dimension_numbers<[1], [0], [0], [1], [0, 0, 1, 1], [], []>} : vector<8x128xbf16>, vector<128x512xbf16>, vector<8x512xf32> -> vector<8x512xf32>
    %97 = arith.addf %93, %96 : vector<8x512xf32>
    %98 = vector.extract_strided_slice %97 {offsets = [0, 0], sizes = [8, 128], strides = [1, 1]} : vector<8x512xf32> to vector<8x128xf32>
    %cst_54 = arith.constant 5.000000e-01 : f32
    %99 = vector.broadcast %cst_54 : f32 to vector<8x128xf32>
    %100 = arith.mulf %99, %98 : vector<8x128xf32>
    %101 = math.tanh %100 : vector<8x128xf32>
    %cst_55 = arith.constant 5.000000e-01 : f32
    %102 = vector.broadcast %cst_55 : f32 to vector<8x128xf32>
    %103 = arith.mulf %102, %101 : vector<8x128xf32>
    %cst_56 = arith.constant 5.000000e-01 : f32
    %104 = vector.broadcast %cst_56 : f32 to vector<8x128xf32>
    %105 = arith.addf %103, %104 : vector<8x128xf32>
    %106 = vector.extract_strided_slice %97 {offsets = [0, 128], sizes = [8, 128], strides = [1, 1]} : vector<8x512xf32> to vector<8x128xf32>
    %cst_57 = arith.constant 5.000000e-01 : f32
    %107 = vector.broadcast %cst_57 : f32 to vector<8x128xf32>
    %108 = arith.mulf %107, %106 : vector<8x128xf32>
    %109 = math.tanh %108 : vector<8x128xf32>
    %cst_58 = arith.constant 5.000000e-01 : f32
    %110 = vector.broadcast %cst_58 : f32 to vector<8x128xf32>
    %111 = arith.mulf %110, %109 : vector<8x128xf32>
    %cst_59 = arith.constant 5.000000e-01 : f32
    %112 = vector.broadcast %cst_59 : f32 to vector<8x128xf32>
    %113 = arith.addf %111, %112 : vector<8x128xf32>
    %114 = vector.extract_strided_slice %97 {offsets = [0, 256], sizes = [8, 128], strides = [1, 1]} : vector<8x512xf32> to vector<8x128xf32>
    %115 = math.tanh %114 : vector<8x128xf32>
    %116 = vector.extract_strided_slice %97 {offsets = [0, 384], sizes = [8, 128], strides = [1, 1]} : vector<8x512xf32> to vector<8x128xf32>
    %cst_60 = arith.constant 5.000000e-01 : f32
    %117 = vector.broadcast %cst_60 : f32 to vector<8x128xf32>
    %118 = arith.mulf %117, %116 : vector<8x128xf32>
    %119 = math.tanh %118 : vector<8x128xf32>
    %cst_61 = arith.constant 5.000000e-01 : f32
    %120 = vector.broadcast %cst_61 : f32 to vector<8x128xf32>
    %121 = arith.mulf %120, %119 : vector<8x128xf32>
    %cst_62 = arith.constant 5.000000e-01 : f32
    %122 = vector.broadcast %cst_62 : f32 to vector<8x128xf32>
    %123 = arith.addf %121, %122 : vector<8x128xf32>
    %124 = arith.mulf %113, %86 : vector<8x128xf32>
    %125 = arith.mulf %105, %115 : vector<8x128xf32>
    %126 = arith.addf %124, %125 : vector<8x128xf32>
    %127 = math.tanh %126 : vector<8x128xf32>
    %128 = arith.mulf %123, %127 : vector<8x128xf32>
    %c2_63 = arith.constant 2 : index
    %c0_64 = arith.constant 0 : index
    %c0_65 = arith.constant 0 : index
    %129 = vector.load %arg13[%c2_63, %c0_64, %c0_65] : memref<8x8x128xf32, #tpu.memory_space<vmem>>, vector<1x8x128xf32>
    %130 = vector.shape_cast %129 : vector<1x8x128xf32> to vector<8x128xf32>
    %131 = vector.shape_cast %128 : vector<8x128xf32> to vector<1x8x128xf32>
    tpu.vector_store %arg13[%c2_63, %c0_64, %c0_65], %131 {strides = array<i32>} : memref<8x8x128xf32, #tpu.memory_space<vmem>>, vector<1x8x128xf32>,
    %c3 = arith.constant 3 : index
    %c0_66 = arith.constant 0 : index
    %c0_67 = arith.constant 0 : index
    %132 = vector.load %arg12[%c3, %c0_66, %c0_67] : memref<8x8x512xf32, #tpu.memory_space<vmem>>, vector<1x8x512xf32>
    %133 = vector.shape_cast %132 : vector<1x8x512xf32> to vector<8x512xf32>
    %134 = arith.truncf %128 : vector<8x128xf32> to vector<8x128xbf16>
    %c0_68 = arith.constant 0 : index
    %c0_69 = arith.constant 0 : index
    %135 = vector.load %arg2[%c0_68, %c0_69] : memref<128x512xbf16, #tpu.memory_space<vmem>>, vector<128x512xbf16>
    %cst_70 = arith.constant dense<0.000000e+00> : vector<8x512xf32>
    %136 = tpu.matmul %134, %135, %cst_70 {dimension_numbers = #tpu.dot_dimension_numbers<[1], [0], [0], [1], [0, 0, 1, 1], [], []>} : vector<8x128xbf16>, vector<128x512xbf16>, vector<8x512xf32> -> vector<8x512xf32>
    %137 = arith.addf %133, %136 : vector<8x512xf32>
    %138 = vector.extract_strided_slice %137 {offsets = [0, 0], sizes = [8, 128], strides = [1, 1]} : vector<8x512xf32> to vector<8x128xf32>
    %cst_71 = arith.constant 5.000000e-01 : f32
    %139 = vector.broadcast %cst_71 : f32 to vector<8x128xf32>
    %140 = arith.mulf %139, %138 : vector<8x128xf32>
    %141 = math.tanh %140 : vector<8x128xf32>
    %cst_72 = arith.constant 5.000000e-01 : f32
    %142 = vector.broadcast %cst_72 : f32 to vector<8x128xf32>
    %143 = arith.mulf %142, %141 : vector<8x128xf32>
    %cst_73 = arith.constant 5.000000e-01 : f32
    %144 = vector.broadcast %cst_73 : f32 to vector<8x128xf32>
    %145 = arith.addf %143, %144 : vector<8x128xf32>
    %146 = vector.extract_strided_slice %137 {offsets = [0, 128], sizes = [8, 128], strides = [1, 1]} : vector<8x512xf32> to vector<8x128xf32>
    %cst_74 = arith.constant 5.000000e-01 : f32
    %147 = vector.broadcast %cst_74 : f32 to vector<8x128xf32>
    %148 = arith.mulf %147, %146 : vector<8x128xf32>
    %149 = math.tanh %148 : vector<8x128xf32>
    %cst_75 = arith.constant 5.000000e-01 : f32
    %150 = vector.broadcast %cst_75 : f32 to vector<8x128xf32>
    %151 = arith.mulf %150, %149 : vector<8x128xf32>
    %cst_76 = arith.constant 5.000000e-01 : f32
    %152 = vector.broadcast %cst_76 : f32 to vector<8x128xf32>
    %153 = arith.addf %151, %152 : vector<8x128xf32>
    %154 = vector.extract_strided_slice %137 {offsets = [0, 256], sizes = [8, 128], strides = [1, 1]} : vector<8x512xf32> to vector<8x128xf32>
    %155 = math.tanh %154 : vector<8x128xf32>
    %156 = vector.extract_strided_slice %137 {offsets = [0, 384], sizes = [8, 128], strides = [1, 1]} : vector<8x512xf32> to vector<8x128xf32>
    %cst_77 = arith.constant 5.000000e-01 : f32
    %157 = vector.broadcast %cst_77 : f32 to vector<8x128xf32>
    %158 = arith.mulf %157, %156 : vector<8x128xf32>
    %159 = math.tanh %158 : vector<8x128xf32>
    %cst_78 = arith.constant 5.000000e-01 : f32
    %160 = vector.broadcast %cst_78 : f32 to vector<8x128xf32>
    %161 = arith.mulf %160, %159 : vector<8x128xf32>
    %cst_79 = arith.constant 5.000000e-01 : f32
    %162 = vector.broadcast %cst_79 : f32 to vector<8x128xf32>
    %163 = arith.addf %161, %162 : vector<8x128xf32>
    %164 = arith.mulf %153, %126 : vector<8x128xf32>
    %165 = arith.mulf %145, %155 : vector<8x128xf32>
    %166 = arith.addf %164, %165 : vector<8x128xf32>
    %167 = math.tanh %166 : vector<8x128xf32>
    %168 = arith.mulf %163, %167 : vector<8x128xf32>
    %c3_80 = arith.constant 3 : index
    %c0_81 = arith.constant 0 : index
    %c0_82 = arith.constant 0 : index
    %169 = vector.load %arg13[%c3_80, %c0_81, %c0_82] : memref<8x8x128xf32, #tpu.memory_space<vmem>>, vector<1x8x128xf32>
    %170 = vector.shape_cast %169 : vector<1x8x128xf32> to vector<8x128xf32>
    %171 = vector.shape_cast %168 : vector<8x128xf32> to vector<1x8x128xf32>
    tpu.vector_store %arg13[%c3_80, %c0_81, %c0_82], %171 {strides = array<i32>} : memref<8x8x128xf32, #tpu.memory_space<vmem>>, vector<1x8x128xf32>,
    %c4 = arith.constant 4 : index
    %c0_83 = arith.constant 0 : index
    %c0_84 = arith.constant 0 : index
    %172 = vector.load %arg12[%c4, %c0_83, %c0_84] : memref<8x8x512xf32, #tpu.memory_space<vmem>>, vector<1x8x512xf32>
    %173 = vector.shape_cast %172 : vector<1x8x512xf32> to vector<8x512xf32>
    %174 = arith.truncf %168 : vector<8x128xf32> to vector<8x128xbf16>
    %c0_85 = arith.constant 0 : index
    %c0_86 = arith.constant 0 : index
    %175 = vector.load %arg2[%c0_85, %c0_86] : memref<128x512xbf16, #tpu.memory_space<vmem>>, vector<128x512xbf16>
    %cst_87 = arith.constant dense<0.000000e+00> : vector<8x512xf32>
    %176 = tpu.matmul %174, %175, %cst_87 {dimension_numbers = #tpu.dot_dimension_numbers<[1], [0], [0], [1], [0, 0, 1, 1], [], []>} : vector<8x128xbf16>, vector<128x512xbf16>, vector<8x512xf32> -> vector<8x512xf32>
    %177 = arith.addf %173, %176 : vector<8x512xf32>
    %178 = vector.extract_strided_slice %177 {offsets = [0, 0], sizes = [8, 128], strides = [1, 1]} : vector<8x512xf32> to vector<8x128xf32>
    %cst_88 = arith.constant 5.000000e-01 : f32
    %179 = vector.broadcast %cst_88 : f32 to vector<8x128xf32>
    %180 = arith.mulf %179, %178 : vector<8x128xf32>
    %181 = math.tanh %180 : vector<8x128xf32>
    %cst_89 = arith.constant 5.000000e-01 : f32
    %182 = vector.broadcast %cst_89 : f32 to vector<8x128xf32>
    %183 = arith.mulf %182, %181 : vector<8x128xf32>
    %cst_90 = arith.constant 5.000000e-01 : f32
    %184 = vector.broadcast %cst_90 : f32 to vector<8x128xf32>
    %185 = arith.addf %183, %184 : vector<8x128xf32>
    %186 = vector.extract_strided_slice %177 {offsets = [0, 128], sizes = [8, 128], strides = [1, 1]} : vector<8x512xf32> to vector<8x128xf32>
    %cst_91 = arith.constant 5.000000e-01 : f32
    %187 = vector.broadcast %cst_91 : f32 to vector<8x128xf32>
    %188 = arith.mulf %187, %186 : vector<8x128xf32>
    %189 = math.tanh %188 : vector<8x128xf32>
    %cst_92 = arith.constant 5.000000e-01 : f32
    %190 = vector.broadcast %cst_92 : f32 to vector<8x128xf32>
    %191 = arith.mulf %190, %189 : vector<8x128xf32>
    %cst_93 = arith.constant 5.000000e-01 : f32
    %192 = vector.broadcast %cst_93 : f32 to vector<8x128xf32>
    %193 = arith.addf %191, %192 : vector<8x128xf32>
    %194 = vector.extract_strided_slice %177 {offsets = [0, 256], sizes = [8, 128], strides = [1, 1]} : vector<8x512xf32> to vector<8x128xf32>
    %195 = math.tanh %194 : vector<8x128xf32>
    %196 = vector.extract_strided_slice %177 {offsets = [0, 384], sizes = [8, 128], strides = [1, 1]} : vector<8x512xf32> to vector<8x128xf32>
    %cst_94 = arith.constant 5.000000e-01 : f32
    %197 = vector.broadcast %cst_94 : f32 to vector<8x128xf32>
    %198 = arith.mulf %197, %196 : vector<8x128xf32>
    %199 = math.tanh %198 : vector<8x128xf32>
    %cst_95 = arith.constant 5.000000e-01 : f32
    %200 = vector.broadcast %cst_95 : f32 to vector<8x128xf32>
    %201 = arith.mulf %200, %199 : vector<8x128xf32>
    %cst_96 = arith.constant 5.000000e-01 : f32
    %202 = vector.broadcast %cst_96 : f32 to vector<8x128xf32>
    %203 = arith.addf %201, %202 : vector<8x128xf32>
    %204 = arith.mulf %193, %166 : vector<8x128xf32>
    %205 = arith.mulf %185, %195 : vector<8x128xf32>
    %206 = arith.addf %204, %205 : vector<8x128xf32>
    %207 = math.tanh %206 : vector<8x128xf32>
    %208 = arith.mulf %203, %207 : vector<8x128xf32>
    %c4_97 = arith.constant 4 : index
    %c0_98 = arith.constant 0 : index
    %c0_99 = arith.constant 0 : index
    %209 = vector.load %arg13[%c4_97, %c0_98, %c0_99] : memref<8x8x128xf32, #tpu.memory_space<vmem>>, vector<1x8x128xf32>
    %210 = vector.shape_cast %209 : vector<1x8x128xf32> to vector<8x128xf32>
    %211 = vector.shape_cast %208 : vector<8x128xf32> to vector<1x8x128xf32>
    tpu.vector_store %arg13[%c4_97, %c0_98, %c0_99], %211 {strides = array<i32>} : memref<8x8x128xf32, #tpu.memory_space<vmem>>, vector<1x8x128xf32>,
    %c5 = arith.constant 5 : index
    %c0_100 = arith.constant 0 : index
    %c0_101 = arith.constant 0 : index
    %212 = vector.load %arg12[%c5, %c0_100, %c0_101] : memref<8x8x512xf32, #tpu.memory_space<vmem>>, vector<1x8x512xf32>
    %213 = vector.shape_cast %212 : vector<1x8x512xf32> to vector<8x512xf32>
    %214 = arith.truncf %208 : vector<8x128xf32> to vector<8x128xbf16>
    %c0_102 = arith.constant 0 : index
    %c0_103 = arith.constant 0 : index
    %215 = vector.load %arg2[%c0_102, %c0_103] : memref<128x512xbf16, #tpu.memory_space<vmem>>, vector<128x512xbf16>
    %cst_104 = arith.constant dense<0.000000e+00> : vector<8x512xf32>
    %216 = tpu.matmul %214, %215, %cst_104 {dimension_numbers = #tpu.dot_dimension_numbers<[1], [0], [0], [1], [0, 0, 1, 1], [], []>} : vector<8x128xbf16>, vector<128x512xbf16>, vector<8x512xf32> -> vector<8x512xf32>
    %217 = arith.addf %213, %216 : vector<8x512xf32>
    %218 = vector.extract_strided_slice %217 {offsets = [0, 0], sizes = [8, 128], strides = [1, 1]} : vector<8x512xf32> to vector<8x128xf32>
    %cst_105 = arith.constant 5.000000e-01 : f32
    %219 = vector.broadcast %cst_105 : f32 to vector<8x128xf32>
    %220 = arith.mulf %219, %218 : vector<8x128xf32>
    %221 = math.tanh %220 : vector<8x128xf32>
    %cst_106 = arith.constant 5.000000e-01 : f32
    %222 = vector.broadcast %cst_106 : f32 to vector<8x128xf32>
    %223 = arith.mulf %222, %221 : vector<8x128xf32>
    %cst_107 = arith.constant 5.000000e-01 : f32
    %224 = vector.broadcast %cst_107 : f32 to vector<8x128xf32>
    %225 = arith.addf %223, %224 : vector<8x128xf32>
    %226 = vector.extract_strided_slice %217 {offsets = [0, 128], sizes = [8, 128], strides = [1, 1]} : vector<8x512xf32> to vector<8x128xf32>
    %cst_108 = arith.constant 5.000000e-01 : f32
    %227 = vector.broadcast %cst_108 : f32 to vector<8x128xf32>
    %228 = arith.mulf %227, %226 : vector<8x128xf32>
    %229 = math.tanh %228 : vector<8x128xf32>
    %cst_109 = arith.constant 5.000000e-01 : f32
    %230 = vector.broadcast %cst_109 : f32 to vector<8x128xf32>
    %231 = arith.mulf %230, %229 : vector<8x128xf32>
    %cst_110 = arith.constant 5.000000e-01 : f32
    %232 = vector.broadcast %cst_110 : f32 to vector<8x128xf32>
    %233 = arith.addf %231, %232 : vector<8x128xf32>
    %234 = vector.extract_strided_slice %217 {offsets = [0, 256], sizes = [8, 128], strides = [1, 1]} : vector<8x512xf32> to vector<8x128xf32>
    %235 = math.tanh %234 : vector<8x128xf32>
    %236 = vector.extract_strided_slice %217 {offsets = [0, 384], sizes = [8, 128], strides = [1, 1]} : vector<8x512xf32> to vector<8x128xf32>
    %cst_111 = arith.constant 5.000000e-01 : f32
    %237 = vector.broadcast %cst_111 : f32 to vector<8x128xf32>
    %238 = arith.mulf %237, %236 : vector<8x128xf32>
    %239 = math.tanh %238 : vector<8x128xf32>
    %cst_112 = arith.constant 5.000000e-01 : f32
    %240 = vector.broadcast %cst_112 : f32 to vector<8x128xf32>
    %241 = arith.mulf %240, %239 : vector<8x128xf32>
    %cst_113 = arith.constant 5.000000e-01 : f32
    %242 = vector.broadcast %cst_113 : f32 to vector<8x128xf32>
    %243 = arith.addf %241, %242 : vector<8x128xf32>
    %244 = arith.mulf %233, %206 : vector<8x128xf32>
    %245 = arith.mulf %225, %235 : vector<8x128xf32>
    %246 = arith.addf %244, %245 : vector<8x128xf32>
    %247 = math.tanh %246 : vector<8x128xf32>
    %248 = arith.mulf %243, %247 : vector<8x128xf32>
    %c5_114 = arith.constant 5 : index
    %c0_115 = arith.constant 0 : index
    %c0_116 = arith.constant 0 : index
    %249 = vector.load %arg13[%c5_114, %c0_115, %c0_116] : memref<8x8x128xf32, #tpu.memory_space<vmem>>, vector<1x8x128xf32>
    %250 = vector.shape_cast %249 : vector<1x8x128xf32> to vector<8x128xf32>
    %251 = vector.shape_cast %248 : vector<8x128xf32> to vector<1x8x128xf32>
    tpu.vector_store %arg13[%c5_114, %c0_115, %c0_116], %251 {strides = array<i32>} : memref<8x8x128xf32, #tpu.memory_space<vmem>>, vector<1x8x128xf32>,
    %c6 = arith.constant 6 : index
    %c0_117 = arith.constant 0 : index
    %c0_118 = arith.constant 0 : index
    %252 = vector.load %arg12[%c6, %c0_117, %c0_118] : memref<8x8x512xf32, #tpu.memory_space<vmem>>, vector<1x8x512xf32>
    %253 = vector.shape_cast %252 : vector<1x8x512xf32> to vector<8x512xf32>
    %254 = arith.truncf %248 : vector<8x128xf32> to vector<8x128xbf16>
    %c0_119 = arith.constant 0 : index
    %c0_120 = arith.constant 0 : index
    %255 = vector.load %arg2[%c0_119, %c0_120] : memref<128x512xbf16, #tpu.memory_space<vmem>>, vector<128x512xbf16>
    %cst_121 = arith.constant dense<0.000000e+00> : vector<8x512xf32>
    %256 = tpu.matmul %254, %255, %cst_121 {dimension_numbers = #tpu.dot_dimension_numbers<[1], [0], [0], [1], [0, 0, 1, 1], [], []>} : vector<8x128xbf16>, vector<128x512xbf16>, vector<8x512xf32> -> vector<8x512xf32>
    %257 = arith.addf %253, %256 : vector<8x512xf32>
    %258 = vector.extract_strided_slice %257 {offsets = [0, 0], sizes = [8, 128], strides = [1, 1]} : vector<8x512xf32> to vector<8x128xf32>
    %cst_122 = arith.constant 5.000000e-01 : f32
    %259 = vector.broadcast %cst_122 : f32 to vector<8x128xf32>
    %260 = arith.mulf %259, %258 : vector<8x128xf32>
    %261 = math.tanh %260 : vector<8x128xf32>
    %cst_123 = arith.constant 5.000000e-01 : f32
    %262 = vector.broadcast %cst_123 : f32 to vector<8x128xf32>
    %263 = arith.mulf %262, %261 : vector<8x128xf32>
    %cst_124 = arith.constant 5.000000e-01 : f32
    %264 = vector.broadcast %cst_124 : f32 to vector<8x128xf32>
    %265 = arith.addf %263, %264 : vector<8x128xf32>
    %266 = vector.extract_strided_slice %257 {offsets = [0, 128], sizes = [8, 128], strides = [1, 1]} : vector<8x512xf32> to vector<8x128xf32>
    %cst_125 = arith.constant 5.000000e-01 : f32
    %267 = vector.broadcast %cst_125 : f32 to vector<8x128xf32>
    %268 = arith.mulf %267, %266 : vector<8x128xf32>
    %269 = math.tanh %268 : vector<8x128xf32>
    %cst_126 = arith.constant 5.000000e-01 : f32
    %270 = vector.broadcast %cst_126 : f32 to vector<8x128xf32>
    %271 = arith.mulf %270, %269 : vector<8x128xf32>
    %cst_127 = arith.constant 5.000000e-01 : f32
    %272 = vector.broadcast %cst_127 : f32 to vector<8x128xf32>
    %273 = arith.addf %271, %272 : vector<8x128xf32>
    %274 = vector.extract_strided_slice %257 {offsets = [0, 256], sizes = [8, 128], strides = [1, 1]} : vector<8x512xf32> to vector<8x128xf32>
    %275 = math.tanh %274 : vector<8x128xf32>
    %276 = vector.extract_strided_slice %257 {offsets = [0, 384], sizes = [8, 128], strides = [1, 1]} : vector<8x512xf32> to vector<8x128xf32>
    %cst_128 = arith.constant 5.000000e-01 : f32
    %277 = vector.broadcast %cst_128 : f32 to vector<8x128xf32>
    %278 = arith.mulf %277, %276 : vector<8x128xf32>
    %279 = math.tanh %278 : vector<8x128xf32>
    %cst_129 = arith.constant 5.000000e-01 : f32
    %280 = vector.broadcast %cst_129 : f32 to vector<8x128xf32>
    %281 = arith.mulf %280, %279 : vector<8x128xf32>
    %cst_130 = arith.constant 5.000000e-01 : f32
    %282 = vector.broadcast %cst_130 : f32 to vector<8x128xf32>
    %283 = arith.addf %281, %282 : vector<8x128xf32>
    %284 = arith.mulf %273, %246 : vector<8x128xf32>
    %285 = arith.mulf %265, %275 : vector<8x128xf32>
    %286 = arith.addf %284, %285 : vector<8x128xf32>
    %287 = math.tanh %286 : vector<8x128xf32>
    %288 = arith.mulf %283, %287 : vector<8x128xf32>
    %c6_131 = arith.constant 6 : index
    %c0_132 = arith.constant 0 : index
    %c0_133 = arith.constant 0 : index
    %289 = vector.load %arg13[%c6_131, %c0_132, %c0_133] : memref<8x8x128xf32, #tpu.memory_space<vmem>>, vector<1x8x128xf32>
    %290 = vector.shape_cast %289 : vector<1x8x128xf32> to vector<8x128xf32>
    %291 = vector.shape_cast %288 : vector<8x128xf32> to vector<1x8x128xf32>
    tpu.vector_store %arg13[%c6_131, %c0_132, %c0_133], %291 {strides = array<i32>} : memref<8x8x128xf32, #tpu.memory_space<vmem>>, vector<1x8x128xf32>,
    %c7 = arith.constant 7 : index
    %c0_134 = arith.constant 0 : index
    %c0_135 = arith.constant 0 : index
    %292 = vector.load %arg12[%c7, %c0_134, %c0_135] : memref<8x8x512xf32, #tpu.memory_space<vmem>>, vector<1x8x512xf32>
    %293 = vector.shape_cast %292 : vector<1x8x512xf32> to vector<8x512xf32>
    %294 = arith.truncf %288 : vector<8x128xf32> to vector<8x128xbf16>
    %c0_136 = arith.constant 0 : index
    %c0_137 = arith.constant 0 : index
    %295 = vector.load %arg2[%c0_136, %c0_137] : memref<128x512xbf16, #tpu.memory_space<vmem>>, vector<128x512xbf16>
    %cst_138 = arith.constant dense<0.000000e+00> : vector<8x512xf32>
    %296 = tpu.matmul %294, %295, %cst_138 {dimension_numbers = #tpu.dot_dimension_numbers<[1], [0], [0], [1], [0, 0, 1, 1], [], []>} : vector<8x128xbf16>, vector<128x512xbf16>, vector<8x512xf32> -> vector<8x512xf32>
    %297 = arith.addf %293, %296 : vector<8x512xf32>
    %298 = vector.extract_strided_slice %297 {offsets = [0, 0], sizes = [8, 128], strides = [1, 1]} : vector<8x512xf32> to vector<8x128xf32>
    %cst_139 = arith.constant 5.000000e-01 : f32
    %299 = vector.broadcast %cst_139 : f32 to vector<8x128xf32>
    %300 = arith.mulf %299, %298 : vector<8x128xf32>
    %301 = math.tanh %300 : vector<8x128xf32>
    %cst_140 = arith.constant 5.000000e-01 : f32
    %302 = vector.broadcast %cst_140 : f32 to vector<8x128xf32>
    %303 = arith.mulf %302, %301 : vector<8x128xf32>
    %cst_141 = arith.constant 5.000000e-01 : f32
    %304 = vector.broadcast %cst_141 : f32 to vector<8x128xf32>
    %305 = arith.addf %303, %304 : vector<8x128xf32>
    %306 = vector.extract_strided_slice %297 {offsets = [0, 128], sizes = [8, 128], strides = [1, 1]} : vector<8x512xf32> to vector<8x128xf32>
    %cst_142 = arith.constant 5.000000e-01 : f32
    %307 = vector.broadcast %cst_142 : f32 to vector<8x128xf32>
    %308 = arith.mulf %307, %306 : vector<8x128xf32>
    %309 = math.tanh %308 : vector<8x128xf32>
    %cst_143 = arith.constant 5.000000e-01 : f32
    %310 = vector.broadcast %cst_143 : f32 to vector<8x128xf32>
    %311 = arith.mulf %310, %309 : vector<8x128xf32>
    %cst_144 = arith.constant 5.000000e-01 : f32
    %312 = vector.broadcast %cst_144 : f32 to vector<8x128xf32>
    %313 = arith.addf %311, %312 : vector<8x128xf32>
    %314 = vector.extract_strided_slice %297 {offsets = [0, 256], sizes = [8, 128], strides = [1, 1]} : vector<8x512xf32> to vector<8x128xf32>
    %315 = math.tanh %314 : vector<8x128xf32>
    %316 = vector.extract_strided_slice %297 {offsets = [0, 384], sizes = [8, 128], strides = [1, 1]} : vector<8x512xf32> to vector<8x128xf32>
    %cst_145 = arith.constant 5.000000e-01 : f32
    %317 = vector.broadcast %cst_145 : f32 to vector<8x128xf32>
    %318 = arith.mulf %317, %316 : vector<8x128xf32>
    %319 = math.tanh %318 : vector<8x128xf32>
    %cst_146 = arith.constant 5.000000e-01 : f32
    %320 = vector.broadcast %cst_146 : f32 to vector<8x128xf32>
    %321 = arith.mulf %320, %319 : vector<8x128xf32>
    %cst_147 = arith.constant 5.000000e-01 : f32
    %322 = vector.broadcast %cst_147 : f32 to vector<8x128xf32>
    %323 = arith.addf %321, %322 : vector<8x128xf32>
    %324 = arith.mulf %313, %286 : vector<8x128xf32>
    %325 = arith.mulf %305, %315 : vector<8x128xf32>
    %326 = arith.addf %324, %325 : vector<8x128xf32>
    %327 = math.tanh %326 : vector<8x128xf32>
    %328 = arith.mulf %323, %327 : vector<8x128xf32>
    %c7_148 = arith.constant 7 : index
    %c0_149 = arith.constant 0 : index
    %c0_150 = arith.constant 0 : index
    %329 = vector.load %arg13[%c7_148, %c0_149, %c0_150] : memref<8x8x128xf32, #tpu.memory_space<vmem>>, vector<1x8x128xf32>
    %330 = vector.shape_cast %329 : vector<1x8x128xf32> to vector<8x128xf32>
    %331 = vector.shape_cast %328 : vector<8x128xf32> to vector<1x8x128xf32>
    tpu.vector_store %arg13[%c7_148, %c0_149, %c0_150], %331 {strides = array<i32>} : memref<8x8x128xf32, #tpu.memory_space<vmem>>, vector<1x8x128xf32>,
    %c0_151 = arith.constant 0 : index
    %c0_152 = arith.constant 0 : index
    %c0_153 = arith.constant 0 : index
    %332 = vector.load %arg13[%c0_151, %c0_152, %c0_153] : memref<8x8x128xf32, #tpu.memory_space<vmem>>, vector<8x8x128xf32>
    %333 = vector.shape_cast %332 : vector<8x8x128xf32> to vector<64x128xf32>
    %334 = arith.truncf %333 : vector<64x128xf32> to vector<64x128xbf16>
    %c0_154 = arith.constant 0 : index
    %c0_155 = arith.constant 0 : index
    %335 = vector.load %arg4[%c0_154, %c0_155] : memref<128x512xbf16, #tpu.memory_space<vmem>>, vector<128x512xbf16>
    %cst_156 = arith.constant dense<0.000000e+00> : vector<64x512xf32>
    %336 = tpu.matmul %334, %335, %cst_156 {dimension_numbers = #tpu.dot_dimension_numbers<[1], [0], [0], [1], [0, 0, 1, 1], [], []>} : vector<64x128xbf16>, vector<128x512xbf16>, vector<64x512xf32> -> vector<64x512xf32>
    %c0_157 = arith.constant 0 : index
    %c0_158 = arith.constant 0 : index
    %337 = vector.load %arg6[%c0_157, %c0_158] : memref<1x512xf32, #tpu.memory_space<vmem>>, vector<1x512xf32>
    %338 = vector.broadcast %337 : vector<1x512xf32> to vector<64x512xf32>
    %339 = arith.addf %336, %338 : vector<64x512xf32>
    %340 = vector.shape_cast %339 : vector<64x512xf32> to vector<8x8x512xf32>
    %c0_159 = arith.constant 0 : index
    %c0_160 = arith.constant 0 : index
    %c0_161 = arith.constant 0 : index
    %341 = vector.load %arg12[%c0_159, %c0_160, %c0_161] : memref<8x8x512xf32, #tpu.memory_space<vmem>>, vector<8x8x512xf32>
    tpu.vector_store %arg12[%c0_159, %c0_160, %c0_161], %340 {strides = array<i32>} : memref<8x8x512xf32, #tpu.memory_space<vmem>>, vector<8x8x512xf32>,
    %c1_162 = arith.constant 1 : index
    %c0_163 = arith.constant 0 : index
    %c0_164 = arith.constant 0 : index
    %342 = vector.load %arg9[%c1_162, %c0_163, %c0_164] : memref<2x8x128xf32, #tpu.memory_space<vmem>>, vector<1x8x128xf32>
    %343 = vector.shape_cast %342 : vector<1x8x128xf32> to vector<8x128xf32>
    %c1_165 = arith.constant 1 : index
    %c0_166 = arith.constant 0 : index
    %c0_167 = arith.constant 0 : index
    %344 = vector.load %arg10[%c1_165, %c0_166, %c0_167] : memref<2x8x128xf32, #tpu.memory_space<vmem>>, vector<1x8x128xf32>
    %345 = vector.shape_cast %344 : vector<1x8x128xf32> to vector<8x128xf32>
    %c0_168 = arith.constant 0 : index
    %c0_169 = arith.constant 0 : index
    %c0_170 = arith.constant 0 : index
    %346 = vector.load %arg12[%c0_168, %c0_169, %c0_170] : memref<8x8x512xf32, #tpu.memory_space<vmem>>, vector<1x8x512xf32>
    %347 = vector.shape_cast %346 : vector<1x8x512xf32> to vector<8x512xf32>
    %348 = arith.truncf %343 : vector<8x128xf32> to vector<8x128xbf16>
    %c0_171 = arith.constant 0 : index
    %c0_172 = arith.constant 0 : index
    %349 = vector.load %arg5[%c0_171, %c0_172] : memref<128x512xbf16, #tpu.memory_space<vmem>>, vector<128x512xbf16>
    %cst_173 = arith.constant dense<0.000000e+00> : vector<8x512xf32>
    %350 = tpu.matmul %348, %349, %cst_173 {dimension_numbers = #tpu.dot_dimension_numbers<[1], [0], [0], [1], [0, 0, 1, 1], [], []>} : vector<8x128xbf16>, vector<128x512xbf16>, vector<8x512xf32> -> vector<8x512xf32>
    %351 = arith.addf %347, %350 : vector<8x512xf32>
    %352 = vector.extract_strided_slice %351 {offsets = [0, 0], sizes = [8, 128], strides = [1, 1]} : vector<8x512xf32> to vector<8x128xf32>
    %cst_174 = arith.constant 5.000000e-01 : f32
    %353 = vector.broadcast %cst_174 : f32 to vector<8x128xf32>
    %354 = arith.mulf %353, %352 : vector<8x128xf32>
    %355 = math.tanh %354 : vector<8x128xf32>
    %cst_175 = arith.constant 5.000000e-01 : f32
    %356 = vector.broadcast %cst_175 : f32 to vector<8x128xf32>
    %357 = arith.mulf %356, %355 : vector<8x128xf32>
    %cst_176 = arith.constant 5.000000e-01 : f32
    %358 = vector.broadcast %cst_176 : f32 to vector<8x128xf32>
    %359 = arith.addf %357, %358 : vector<8x128xf32>
    %360 = vector.extract_strided_slice %351 {offsets = [0, 128], sizes = [8, 128], strides = [1, 1]} : vector<8x512xf32> to vector<8x128xf32>
    %cst_177 = arith.constant 5.000000e-01 : f32
    %361 = vector.broadcast %cst_177 : f32 to vector<8x128xf32>
    %362 = arith.mulf %361, %360 : vector<8x128xf32>
    %363 = math.tanh %362 : vector<8x128xf32>
    %cst_178 = arith.constant 5.000000e-01 : f32
    %364 = vector.broadcast %cst_178 : f32 to vector<8x128xf32>
    %365 = arith.mulf %364, %363 : vector<8x128xf32>
    %cst_179 = arith.constant 5.000000e-01 : f32
    %366 = vector.broadcast %cst_179 : f32 to vector<8x128xf32>
    %367 = arith.addf %365, %366 : vector<8x128xf32>
    %368 = vector.extract_strided_slice %351 {offsets = [0, 256], sizes = [8, 128], strides = [1, 1]} : vector<8x512xf32> to vector<8x128xf32>
    %369 = math.tanh %368 : vector<8x128xf32>
    %370 = vector.extract_strided_slice %351 {offsets = [0, 384], sizes = [8, 128], strides = [1, 1]} : vector<8x512xf32> to vector<8x128xf32>
    %cst_180 = arith.constant 5.000000e-01 : f32
    %371 = vector.broadcast %cst_180 : f32 to vector<8x128xf32>
    %372 = arith.mulf %371, %370 : vector<8x128xf32>
    %373 = math.tanh %372 : vector<8x128xf32>
    %cst_181 = arith.constant 5.000000e-01 : f32
    %374 = vector.broadcast %cst_181 : f32 to vector<8x128xf32>
    %375 = arith.mulf %374, %373 : vector<8x128xf32>
    %cst_182 = arith.constant 5.000000e-01 : f32
    %376 = vector.broadcast %cst_182 : f32 to vector<8x128xf32>
    %377 = arith.addf %375, %376 : vector<8x128xf32>
    %378 = arith.mulf %367, %345 : vector<8x128xf32>
    %379 = arith.mulf %359, %369 : vector<8x128xf32>
    %380 = arith.addf %378, %379 : vector<8x128xf32>
    %381 = math.tanh %380 : vector<8x128xf32>
    %382 = arith.mulf %377, %381 : vector<8x128xf32>
    %c1_183 = arith.constant 1 : index
    %c0_184 = arith.constant 0 : index
    %c0_185 = arith.constant 0 : index
    %383 = vector.load %arg12[%c1_183, %c0_184, %c0_185] : memref<8x8x512xf32, #tpu.memory_space<vmem>>, vector<1x8x512xf32>
    %384 = vector.shape_cast %383 : vector<1x8x512xf32> to vector<8x512xf32>
    %385 = arith.truncf %382 : vector<8x128xf32> to vector<8x128xbf16>
    %c0_186 = arith.constant 0 : index
    %c0_187 = arith.constant 0 : index
    %386 = vector.load %arg5[%c0_186, %c0_187] : memref<128x512xbf16, #tpu.memory_space<vmem>>, vector<128x512xbf16>
    %cst_188 = arith.constant dense<0.000000e+00> : vector<8x512xf32>
    %387 = tpu.matmul %385, %386, %cst_188 {dimension_numbers = #tpu.dot_dimension_numbers<[1], [0], [0], [1], [0, 0, 1, 1], [], []>} : vector<8x128xbf16>, vector<128x512xbf16>, vector<8x512xf32> -> vector<8x512xf32>
    %388 = arith.addf %384, %387 : vector<8x512xf32>
    %389 = vector.extract_strided_slice %388 {offsets = [0, 0], sizes = [8, 128], strides = [1, 1]} : vector<8x512xf32> to vector<8x128xf32>
    %cst_189 = arith.constant 5.000000e-01 : f32
    %390 = vector.broadcast %cst_189 : f32 to vector<8x128xf32>
    %391 = arith.mulf %390, %389 : vector<8x128xf32>
    %392 = math.tanh %391 : vector<8x128xf32>
    %cst_190 = arith.constant 5.000000e-01 : f32
    %393 = vector.broadcast %cst_190 : f32 to vector<8x128xf32>
    %394 = arith.mulf %393, %392 : vector<8x128xf32>
    %cst_191 = arith.constant 5.000000e-01 : f32
    %395 = vector.broadcast %cst_191 : f32 to vector<8x128xf32>
    %396 = arith.addf %394, %395 : vector<8x128xf32>
    %397 = vector.extract_strided_slice %388 {offsets = [0, 128], sizes = [8, 128], strides = [1, 1]} : vector<8x512xf32> to vector<8x128xf32>
    %cst_192 = arith.constant 5.000000e-01 : f32
    %398 = vector.broadcast %cst_192 : f32 to vector<8x128xf32>
    %399 = arith.mulf %398, %397 : vector<8x128xf32>
    %400 = math.tanh %399 : vector<8x128xf32>
    %cst_193 = arith.constant 5.000000e-01 : f32
    %401 = vector.broadcast %cst_193 : f32 to vector<8x128xf32>
    %402 = arith.mulf %401, %400 : vector<8x128xf32>
    %cst_194 = arith.constant 5.000000e-01 : f32
    %403 = vector.broadcast %cst_194 : f32 to vector<8x128xf32>
    %404 = arith.addf %402, %403 : vector<8x128xf32>
    %405 = vector.extract_strided_slice %388 {offsets = [0, 256], sizes = [8, 128], strides = [1, 1]} : vector<8x512xf32> to vector<8x128xf32>
    %406 = math.tanh %405 : vector<8x128xf32>
    %407 = vector.extract_strided_slice %388 {offsets = [0, 384], sizes = [8, 128], strides = [1, 1]} : vector<8x512xf32> to vector<8x128xf32>
    %cst_195 = arith.constant 5.000000e-01 : f32
    %408 = vector.broadcast %cst_195 : f32 to vector<8x128xf32>
    %409 = arith.mulf %408, %407 : vector<8x128xf32>
    %410 = math.tanh %409 : vector<8x128xf32>
    %cst_196 = arith.constant 5.000000e-01 : f32
    %411 = vector.broadcast %cst_196 : f32 to vector<8x128xf32>
    %412 = arith.mulf %411, %410 : vector<8x128xf32>
    %cst_197 = arith.constant 5.000000e-01 : f32
    %413 = vector.broadcast %cst_197 : f32 to vector<8x128xf32>
    %414 = arith.addf %412, %413 : vector<8x128xf32>
    %415 = arith.mulf %404, %380 : vector<8x128xf32>
    %416 = arith.mulf %396, %406 : vector<8x128xf32>
    %417 = arith.addf %415, %416 : vector<8x128xf32>
    %418 = math.tanh %417 : vector<8x128xf32>
    %419 = arith.mulf %414, %418 : vector<8x128xf32>
    %c2_198 = arith.constant 2 : index
    %c0_199 = arith.constant 0 : index
    %c0_200 = arith.constant 0 : index
    %420 = vector.load %arg12[%c2_198, %c0_199, %c0_200] : memref<8x8x512xf32, #tpu.memory_space<vmem>>, vector<1x8x512xf32>
    %421 = vector.shape_cast %420 : vector<1x8x512xf32> to vector<8x512xf32>
    %422 = arith.truncf %419 : vector<8x128xf32> to vector<8x128xbf16>
    %c0_201 = arith.constant 0 : index
    %c0_202 = arith.constant 0 : index
    %423 = vector.load %arg5[%c0_201, %c0_202] : memref<128x512xbf16, #tpu.memory_space<vmem>>, vector<128x512xbf16>
    %cst_203 = arith.constant dense<0.000000e+00> : vector<8x512xf32>
    %424 = tpu.matmul %422, %423, %cst_203 {dimension_numbers = #tpu.dot_dimension_numbers<[1], [0], [0], [1], [0, 0, 1, 1], [], []>} : vector<8x128xbf16>, vector<128x512xbf16>, vector<8x512xf32> -> vector<8x512xf32>
    %425 = arith.addf %421, %424 : vector<8x512xf32>
    %426 = vector.extract_strided_slice %425 {offsets = [0, 0], sizes = [8, 128], strides = [1, 1]} : vector<8x512xf32> to vector<8x128xf32>
    %cst_204 = arith.constant 5.000000e-01 : f32
    %427 = vector.broadcast %cst_204 : f32 to vector<8x128xf32>
    %428 = arith.mulf %427, %426 : vector<8x128xf32>
    %429 = math.tanh %428 : vector<8x128xf32>
    %cst_205 = arith.constant 5.000000e-01 : f32
    %430 = vector.broadcast %cst_205 : f32 to vector<8x128xf32>
    %431 = arith.mulf %430, %429 : vector<8x128xf32>
    %cst_206 = arith.constant 5.000000e-01 : f32
    %432 = vector.broadcast %cst_206 : f32 to vector<8x128xf32>
    %433 = arith.addf %431, %432 : vector<8x128xf32>
    %434 = vector.extract_strided_slice %425 {offsets = [0, 128], sizes = [8, 128], strides = [1, 1]} : vector<8x512xf32> to vector<8x128xf32>
    %cst_207 = arith.constant 5.000000e-01 : f32
    %435 = vector.broadcast %cst_207 : f32 to vector<8x128xf32>
    %436 = arith.mulf %435, %434 : vector<8x128xf32>
    %437 = math.tanh %436 : vector<8x128xf32>
    %cst_208 = arith.constant 5.000000e-01 : f32
    %438 = vector.broadcast %cst_208 : f32 to vector<8x128xf32>
    %439 = arith.mulf %438, %437 : vector<8x128xf32>
    %cst_209 = arith.constant 5.000000e-01 : f32
    %440 = vector.broadcast %cst_209 : f32 to vector<8x128xf32>
    %441 = arith.addf %439, %440 : vector<8x128xf32>
    %442 = vector.extract_strided_slice %425 {offsets = [0, 256], sizes = [8, 128], strides = [1, 1]} : vector<8x512xf32> to vector<8x128xf32>
    %443 = math.tanh %442 : vector<8x128xf32>
    %444 = vector.extract_strided_slice %425 {offsets = [0, 384], sizes = [8, 128], strides = [1, 1]} : vector<8x512xf32> to vector<8x128xf32>
    %cst_210 = arith.constant 5.000000e-01 : f32
    %445 = vector.broadcast %cst_210 : f32 to vector<8x128xf32>
    %446 = arith.mulf %445, %444 : vector<8x128xf32>
    %447 = math.tanh %446 : vector<8x128xf32>
    %cst_211 = arith.constant 5.000000e-01 : f32
    %448 = vector.broadcast %cst_211 : f32 to vector<8x128xf32>
    %449 = arith.mulf %448, %447 : vector<8x128xf32>
    %cst_212 = arith.constant 5.000000e-01 : f32
    %450 = vector.broadcast %cst_212 : f32 to vector<8x128xf32>
    %451 = arith.addf %449, %450 : vector<8x128xf32>
    %452 = arith.mulf %441, %417 : vector<8x128xf32>
    %453 = arith.mulf %433, %443 : vector<8x128xf32>
    %454 = arith.addf %452, %453 : vector<8x128xf32>
    %455 = math.tanh %454 : vector<8x128xf32>
    %456 = arith.mulf %451, %455 : vector<8x128xf32>
    %c3_213 = arith.constant 3 : index
    %c0_214 = arith.constant 0 : index
    %c0_215 = arith.constant 0 : index
    %457 = vector.load %arg12[%c3_213, %c0_214, %c0_215] : memref<8x8x512xf32, #tpu.memory_space<vmem>>, vector<1x8x512xf32>
    %458 = vector.shape_cast %457 : vector<1x8x512xf32> to vector<8x512xf32>
    %459 = arith.truncf %456 : vector<8x128xf32> to vector<8x128xbf16>
    %c0_216 = arith.constant 0 : index
    %c0_217 = arith.constant 0 : index
    %460 = vector.load %arg5[%c0_216, %c0_217] : memref<128x512xbf16, #tpu.memory_space<vmem>>, vector<128x512xbf16>
    %cst_218 = arith.constant dense<0.000000e+00> : vector<8x512xf32>
    %461 = tpu.matmul %459, %460, %cst_218 {dimension_numbers = #tpu.dot_dimension_numbers<[1], [0], [0], [1], [0, 0, 1, 1], [], []>} : vector<8x128xbf16>, vector<128x512xbf16>, vector<8x512xf32> -> vector<8x512xf32>
    %462 = arith.addf %458, %461 : vector<8x512xf32>
    %463 = vector.extract_strided_slice %462 {offsets = [0, 0], sizes = [8, 128], strides = [1, 1]} : vector<8x512xf32> to vector<8x128xf32>
    %cst_219 = arith.constant 5.000000e-01 : f32
    %464 = vector.broadcast %cst_219 : f32 to vector<8x128xf32>
    %465 = arith.mulf %464, %463 : vector<8x128xf32>
    %466 = math.tanh %465 : vector<8x128xf32>
    %cst_220 = arith.constant 5.000000e-01 : f32
    %467 = vector.broadcast %cst_220 : f32 to vector<8x128xf32>
    %468 = arith.mulf %467, %466 : vector<8x128xf32>
    %cst_221 = arith.constant 5.000000e-01 : f32
    %469 = vector.broadcast %cst_221 : f32 to vector<8x128xf32>
    %470 = arith.addf %468, %469 : vector<8x128xf32>
    %471 = vector.extract_strided_slice %462 {offsets = [0, 128], sizes = [8, 128], strides = [1, 1]} : vector<8x512xf32> to vector<8x128xf32>
    %cst_222 = arith.constant 5.000000e-01 : f32
    %472 = vector.broadcast %cst_222 : f32 to vector<8x128xf32>
    %473 = arith.mulf %472, %471 : vector<8x128xf32>
    %474 = math.tanh %473 : vector<8x128xf32>
    %cst_223 = arith.constant 5.000000e-01 : f32
    %475 = vector.broadcast %cst_223 : f32 to vector<8x128xf32>
    %476 = arith.mulf %475, %474 : vector<8x128xf32>
    %cst_224 = arith.constant 5.000000e-01 : f32
    %477 = vector.broadcast %cst_224 : f32 to vector<8x128xf32>
    %478 = arith.addf %476, %477 : vector<8x128xf32>
    %479 = vector.extract_strided_slice %462 {offsets = [0, 256], sizes = [8, 128], strides = [1, 1]} : vector<8x512xf32> to vector<8x128xf32>
    %480 = math.tanh %479 : vector<8x128xf32>
    %481 = vector.extract_strided_slice %462 {offsets = [0, 384], sizes = [8, 128], strides = [1, 1]} : vector<8x512xf32> to vector<8x128xf32>
    %cst_225 = arith.constant 5.000000e-01 : f32
    %482 = vector.broadcast %cst_225 : f32 to vector<8x128xf32>
    %483 = arith.mulf %482, %481 : vector<8x128xf32>
    %484 = math.tanh %483 : vector<8x128xf32>
    %cst_226 = arith.constant 5.000000e-01 : f32
    %485 = vector.broadcast %cst_226 : f32 to vector<8x128xf32>
    %486 = arith.mulf %485, %484 : vector<8x128xf32>
    %cst_227 = arith.constant 5.000000e-01 : f32
    %487 = vector.broadcast %cst_227 : f32 to vector<8x128xf32>
    %488 = arith.addf %486, %487 : vector<8x128xf32>
    %489 = arith.mulf %478, %454 : vector<8x128xf32>
    %490 = arith.mulf %470, %480 : vector<8x128xf32>
    %491 = arith.addf %489, %490 : vector<8x128xf32>
    %492 = math.tanh %491 : vector<8x128xf32>
    %493 = arith.mulf %488, %492 : vector<8x128xf32>
    %c4_228 = arith.constant 4 : index
    %c0_229 = arith.constant 0 : index
    %c0_230 = arith.constant 0 : index
    %494 = vector.load %arg12[%c4_228, %c0_229, %c0_230] : memref<8x8x512xf32, #tpu.memory_space<vmem>>, vector<1x8x512xf32>
    %495 = vector.shape_cast %494 : vector<1x8x512xf32> to vector<8x512xf32>
    %496 = arith.truncf %493 : vector<8x128xf32> to vector<8x128xbf16>
    %c0_231 = arith.constant 0 : index
    %c0_232 = arith.constant 0 : index
    %497 = vector.load %arg5[%c0_231, %c0_232] : memref<128x512xbf16, #tpu.memory_space<vmem>>, vector<128x512xbf16>
    %cst_233 = arith.constant dense<0.000000e+00> : vector<8x512xf32>
    %498 = tpu.matmul %496, %497, %cst_233 {dimension_numbers = #tpu.dot_dimension_numbers<[1], [0], [0], [1], [0, 0, 1, 1], [], []>} : vector<8x128xbf16>, vector<128x512xbf16>, vector<8x512xf32> -> vector<8x512xf32>
    %499 = arith.addf %495, %498 : vector<8x512xf32>
    %500 = vector.extract_strided_slice %499 {offsets = [0, 0], sizes = [8, 128], strides = [1, 1]} : vector<8x512xf32> to vector<8x128xf32>
    %cst_234 = arith.constant 5.000000e-01 : f32
    %501 = vector.broadcast %cst_234 : f32 to vector<8x128xf32>
    %502 = arith.mulf %501, %500 : vector<8x128xf32>
    %503 = math.tanh %502 : vector<8x128xf32>
    %cst_235 = arith.constant 5.000000e-01 : f32
    %504 = vector.broadcast %cst_235 : f32 to vector<8x128xf32>
    %505 = arith.mulf %504, %503 : vector<8x128xf32>
    %cst_236 = arith.constant 5.000000e-01 : f32
    %506 = vector.broadcast %cst_236 : f32 to vector<8x128xf32>
    %507 = arith.addf %505, %506 : vector<8x128xf32>
    %508 = vector.extract_strided_slice %499 {offsets = [0, 128], sizes = [8, 128], strides = [1, 1]} : vector<8x512xf32> to vector<8x128xf32>
    %cst_237 = arith.constant 5.000000e-01 : f32
    %509 = vector.broadcast %cst_237 : f32 to vector<8x128xf32>
    %510 = arith.mulf %509, %508 : vector<8x128xf32>
    %511 = math.tanh %510 : vector<8x128xf32>
    %cst_238 = arith.constant 5.000000e-01 : f32
    %512 = vector.broadcast %cst_238 : f32 to vector<8x128xf32>
    %513 = arith.mulf %512, %511 : vector<8x128xf32>
    %cst_239 = arith.constant 5.000000e-01 : f32
    %514 = vector.broadcast %cst_239 : f32 to vector<8x128xf32>
    %515 = arith.addf %513, %514 : vector<8x128xf32>
    %516 = vector.extract_strided_slice %499 {offsets = [0, 256], sizes = [8, 128], strides = [1, 1]} : vector<8x512xf32> to vector<8x128xf32>
    %517 = math.tanh %516 : vector<8x128xf32>
    %518 = vector.extract_strided_slice %499 {offsets = [0, 384], sizes = [8, 128], strides = [1, 1]} : vector<8x512xf32> to vector<8x128xf32>
    %cst_240 = arith.constant 5.000000e-01 : f32
    %519 = vector.broadcast %cst_240 : f32 to vector<8x128xf32>
    %520 = arith.mulf %519, %518 : vector<8x128xf32>
    %521 = math.tanh %520 : vector<8x128xf32>
    %cst_241 = arith.constant 5.000000e-01 : f32
    %522 = vector.broadcast %cst_241 : f32 to vector<8x128xf32>
    %523 = arith.mulf %522, %521 : vector<8x128xf32>
    %cst_242 = arith.constant 5.000000e-01 : f32
    %524 = vector.broadcast %cst_242 : f32 to vector<8x128xf32>
    %525 = arith.addf %523, %524 : vector<8x128xf32>
    %526 = arith.mulf %515, %491 : vector<8x128xf32>
    %527 = arith.mulf %507, %517 : vector<8x128xf32>
    %528 = arith.addf %526, %527 : vector<8x128xf32>
    %529 = math.tanh %528 : vector<8x128xf32>
    %530 = arith.mulf %525, %529 : vector<8x128xf32>
    %c5_243 = arith.constant 5 : index
    %c0_244 = arith.constant 0 : index
    %c0_245 = arith.constant 0 : index
    %531 = vector.load %arg12[%c5_243, %c0_244, %c0_245] : memref<8x8x512xf32, #tpu.memory_space<vmem>>, vector<1x8x512xf32>
    %532 = vector.shape_cast %531 : vector<1x8x512xf32> to vector<8x512xf32>
    %533 = arith.truncf %530 : vector<8x128xf32> to vector<8x128xbf16>
    %c0_246 = arith.constant 0 : index
    %c0_247 = arith.constant 0 : index
    %534 = vector.load %arg5[%c0_246, %c0_247] : memref<128x512xbf16, #tpu.memory_space<vmem>>, vector<128x512xbf16>
    %cst_248 = arith.constant dense<0.000000e+00> : vector<8x512xf32>
    %535 = tpu.matmul %533, %534, %cst_248 {dimension_numbers = #tpu.dot_dimension_numbers<[1], [0], [0], [1], [0, 0, 1, 1], [], []>} : vector<8x128xbf16>, vector<128x512xbf16>, vector<8x512xf32> -> vector<8x512xf32>
    %536 = arith.addf %532, %535 : vector<8x512xf32>
    %537 = vector.extract_strided_slice %536 {offsets = [0, 0], sizes = [8, 128], strides = [1, 1]} : vector<8x512xf32> to vector<8x128xf32>
    %cst_249 = arith.constant 5.000000e-01 : f32
    %538 = vector.broadcast %cst_249 : f32 to vector<8x128xf32>
    %539 = arith.mulf %538, %537 : vector<8x128xf32>
    %540 = math.tanh %539 : vector<8x128xf32>
    %cst_250 = arith.constant 5.000000e-01 : f32
    %541 = vector.broadcast %cst_250 : f32 to vector<8x128xf32>
    %542 = arith.mulf %541, %540 : vector<8x128xf32>
    %cst_251 = arith.constant 5.000000e-01 : f32
    %543 = vector.broadcast %cst_251 : f32 to vector<8x128xf32>
    %544 = arith.addf %542, %543 : vector<8x128xf32>
    %545 = vector.extract_strided_slice %536 {offsets = [0, 128], sizes = [8, 128], strides = [1, 1]} : vector<8x512xf32> to vector<8x128xf32>
    %cst_252 = arith.constant 5.000000e-01 : f32
    %546 = vector.broadcast %cst_252 : f32 to vector<8x128xf32>
    %547 = arith.mulf %546, %545 : vector<8x128xf32>
    %548 = math.tanh %547 : vector<8x128xf32>
    %cst_253 = arith.constant 5.000000e-01 : f32
    %549 = vector.broadcast %cst_253 : f32 to vector<8x128xf32>
    %550 = arith.mulf %549, %548 : vector<8x128xf32>
    %cst_254 = arith.constant 5.000000e-01 : f32
    %551 = vector.broadcast %cst_254 : f32 to vector<8x128xf32>
    %552 = arith.addf %550, %551 : vector<8x128xf32>
    %553 = vector.extract_strided_slice %536 {offsets = [0, 256], sizes = [8, 128], strides = [1, 1]} : vector<8x512xf32> to vector<8x128xf32>
    %554 = math.tanh %553 : vector<8x128xf32>
    %555 = vector.extract_strided_slice %536 {offsets = [0, 384], sizes = [8, 128], strides = [1, 1]} : vector<8x512xf32> to vector<8x128xf32>
    %cst_255 = arith.constant 5.000000e-01 : f32
    %556 = vector.broadcast %cst_255 : f32 to vector<8x128xf32>
    %557 = arith.mulf %556, %555 : vector<8x128xf32>
    %558 = math.tanh %557 : vector<8x128xf32>
    %cst_256 = arith.constant 5.000000e-01 : f32
    %559 = vector.broadcast %cst_256 : f32 to vector<8x128xf32>
    %560 = arith.mulf %559, %558 : vector<8x128xf32>
    %cst_257 = arith.constant 5.000000e-01 : f32
    %561 = vector.broadcast %cst_257 : f32 to vector<8x128xf32>
    %562 = arith.addf %560, %561 : vector<8x128xf32>
    %563 = arith.mulf %552, %528 : vector<8x128xf32>
    %564 = arith.mulf %544, %554 : vector<8x128xf32>
    %565 = arith.addf %563, %564 : vector<8x128xf32>
    %566 = math.tanh %565 : vector<8x128xf32>
    %567 = arith.mulf %562, %566 : vector<8x128xf32>
    %c6_258 = arith.constant 6 : index
    %c0_259 = arith.constant 0 : index
    %c0_260 = arith.constant 0 : index
    %568 = vector.load %arg12[%c6_258, %c0_259, %c0_260] : memref<8x8x512xf32, #tpu.memory_space<vmem>>, vector<1x8x512xf32>
    %569 = vector.shape_cast %568 : vector<1x8x512xf32> to vector<8x512xf32>
    %570 = arith.truncf %567 : vector<8x128xf32> to vector<8x128xbf16>
    %c0_261 = arith.constant 0 : index
    %c0_262 = arith.constant 0 : index
    %571 = vector.load %arg5[%c0_261, %c0_262] : memref<128x512xbf16, #tpu.memory_space<vmem>>, vector<128x512xbf16>
    %cst_263 = arith.constant dense<0.000000e+00> : vector<8x512xf32>
    %572 = tpu.matmul %570, %571, %cst_263 {dimension_numbers = #tpu.dot_dimension_numbers<[1], [0], [0], [1], [0, 0, 1, 1], [], []>} : vector<8x128xbf16>, vector<128x512xbf16>, vector<8x512xf32> -> vector<8x512xf32>
    %573 = arith.addf %569, %572 : vector<8x512xf32>
    %574 = vector.extract_strided_slice %573 {offsets = [0, 0], sizes = [8, 128], strides = [1, 1]} : vector<8x512xf32> to vector<8x128xf32>
    %cst_264 = arith.constant 5.000000e-01 : f32
    %575 = vector.broadcast %cst_264 : f32 to vector<8x128xf32>
    %576 = arith.mulf %575, %574 : vector<8x128xf32>
    %577 = math.tanh %576 : vector<8x128xf32>
    %cst_265 = arith.constant 5.000000e-01 : f32
    %578 = vector.broadcast %cst_265 : f32 to vector<8x128xf32>
    %579 = arith.mulf %578, %577 : vector<8x128xf32>
    %cst_266 = arith.constant 5.000000e-01 : f32
    %580 = vector.broadcast %cst_266 : f32 to vector<8x128xf32>
    %581 = arith.addf %579, %580 : vector<8x128xf32>
    %582 = vector.extract_strided_slice %573 {offsets = [0, 128], sizes = [8, 128], strides = [1, 1]} : vector<8x512xf32> to vector<8x128xf32>
    %cst_267 = arith.constant 5.000000e-01 : f32
    %583 = vector.broadcast %cst_267 : f32 to vector<8x128xf32>
    %584 = arith.mulf %583, %582 : vector<8x128xf32>
    %585 = math.tanh %584 : vector<8x128xf32>
    %cst_268 = arith.constant 5.000000e-01 : f32
    %586 = vector.broadcast %cst_268 : f32 to vector<8x128xf32>
    %587 = arith.mulf %586, %585 : vector<8x128xf32>
    %cst_269 = arith.constant 5.000000e-01 : f32
    %588 = vector.broadcast %cst_269 : f32 to vector<8x128xf32>
    %589 = arith.addf %587, %588 : vector<8x128xf32>
    %590 = vector.extract_strided_slice %573 {offsets = [0, 256], sizes = [8, 128], strides = [1, 1]} : vector<8x512xf32> to vector<8x128xf32>
    %591 = math.tanh %590 : vector<8x128xf32>
    %592 = vector.extract_strided_slice %573 {offsets = [0, 384], sizes = [8, 128], strides = [1, 1]} : vector<8x512xf32> to vector<8x128xf32>
    %cst_270 = arith.constant 5.000000e-01 : f32
    %593 = vector.broadcast %cst_270 : f32 to vector<8x128xf32>
    %594 = arith.mulf %593, %592 : vector<8x128xf32>
    %595 = math.tanh %594 : vector<8x128xf32>
    %cst_271 = arith.constant 5.000000e-01 : f32
    %596 = vector.broadcast %cst_271 : f32 to vector<8x128xf32>
    %597 = arith.mulf %596, %595 : vector<8x128xf32>
    %cst_272 = arith.constant 5.000000e-01 : f32
    %598 = vector.broadcast %cst_272 : f32 to vector<8x128xf32>
    %599 = arith.addf %597, %598 : vector<8x128xf32>
    %600 = arith.mulf %589, %565 : vector<8x128xf32>
    %601 = arith.mulf %581, %591 : vector<8x128xf32>
    %602 = arith.addf %600, %601 : vector<8x128xf32>
    %603 = math.tanh %602 : vector<8x128xf32>
    %604 = arith.mulf %599, %603 : vector<8x128xf32>
    %c7_273 = arith.constant 7 : index
    %c0_274 = arith.constant 0 : index
    %c0_275 = arith.constant 0 : index
    %605 = vector.load %arg12[%c7_273, %c0_274, %c0_275] : memref<8x8x512xf32, #tpu.memory_space<vmem>>, vector<1x8x512xf32>
    %606 = vector.shape_cast %605 : vector<1x8x512xf32> to vector<8x512xf32>
    %607 = arith.truncf %604 : vector<8x128xf32> to vector<8x128xbf16>
    %c0_276 = arith.constant 0 : index
    %c0_277 = arith.constant 0 : index
    %608 = vector.load %arg5[%c0_276, %c0_277] : memref<128x512xbf16, #tpu.memory_space<vmem>>, vector<128x512xbf16>
    %cst_278 = arith.constant dense<0.000000e+00> : vector<8x512xf32>
    %609 = tpu.matmul %607, %608, %cst_278 {dimension_numbers = #tpu.dot_dimension_numbers<[1], [0], [0], [1], [0, 0, 1, 1], [], []>} : vector<8x128xbf16>, vector<128x512xbf16>, vector<8x512xf32> -> vector<8x512xf32>
    %610 = arith.addf %606, %609 : vector<8x512xf32>
    %611 = vector.extract_strided_slice %610 {offsets = [0, 0], sizes = [8, 128], strides = [1, 1]} : vector<8x512xf32> to vector<8x128xf32>
    %cst_279 = arith.constant 5.000000e-01 : f32
    %612 = vector.broadcast %cst_279 : f32 to vector<8x128xf32>
    %613 = arith.mulf %612, %611 : vector<8x128xf32>
    %614 = math.tanh %613 : vector<8x128xf32>
    %cst_280 = arith.constant 5.000000e-01 : f32
    %615 = vector.broadcast %cst_280 : f32 to vector<8x128xf32>
    %616 = arith.mulf %615, %614 : vector<8x128xf32>
    %cst_281 = arith.constant 5.000000e-01 : f32
    %617 = vector.broadcast %cst_281 : f32 to vector<8x128xf32>
    %618 = arith.addf %616, %617 : vector<8x128xf32>
    %619 = vector.extract_strided_slice %610 {offsets = [0, 128], sizes = [8, 128], strides = [1, 1]} : vector<8x512xf32> to vector<8x128xf32>
    %cst_282 = arith.constant 5.000000e-01 : f32
    %620 = vector.broadcast %cst_282 : f32 to vector<8x128xf32>
    %621 = arith.mulf %620, %619 : vector<8x128xf32>
    %622 = math.tanh %621 : vector<8x128xf32>
    %cst_283 = arith.constant 5.000000e-01 : f32
    %623 = vector.broadcast %cst_283 : f32 to vector<8x128xf32>
    %624 = arith.mulf %623, %622 : vector<8x128xf32>
    %cst_284 = arith.constant 5.000000e-01 : f32
    %625 = vector.broadcast %cst_284 : f32 to vector<8x128xf32>
    %626 = arith.addf %624, %625 : vector<8x128xf32>
    %627 = vector.extract_strided_slice %610 {offsets = [0, 256], sizes = [8, 128], strides = [1, 1]} : vector<8x512xf32> to vector<8x128xf32>
    %628 = math.tanh %627 : vector<8x128xf32>
    %629 = vector.extract_strided_slice %610 {offsets = [0, 384], sizes = [8, 128], strides = [1, 1]} : vector<8x512xf32> to vector<8x128xf32>
    %cst_285 = arith.constant 5.000000e-01 : f32
    %630 = vector.broadcast %cst_285 : f32 to vector<8x128xf32>
    %631 = arith.mulf %630, %629 : vector<8x128xf32>
    %632 = math.tanh %631 : vector<8x128xf32>
    %cst_286 = arith.constant 5.000000e-01 : f32
    %633 = vector.broadcast %cst_286 : f32 to vector<8x128xf32>
    %634 = arith.mulf %633, %632 : vector<8x128xf32>
    %cst_287 = arith.constant 5.000000e-01 : f32
    %635 = vector.broadcast %cst_287 : f32 to vector<8x128xf32>
    %636 = arith.addf %634, %635 : vector<8x128xf32>
    %637 = arith.mulf %626, %602 : vector<8x128xf32>
    %638 = arith.mulf %618, %628 : vector<8x128xf32>
    %639 = arith.addf %637, %638 : vector<8x128xf32>
    %640 = math.tanh %639 : vector<8x128xf32>
    %641 = arith.mulf %636, %640 : vector<8x128xf32>
    %642 = arith.truncf %641 : vector<8x128xf32> to vector<8x128xbf16>
    %c0_288 = arith.constant 0 : index
    %c0_289 = arith.constant 0 : index
    %643 = vector.load %arg7[%c0_288, %c0_289] : memref<128x128xbf16, #tpu.memory_space<vmem>>, vector<128x128xbf16>
    %cst_290 = arith.constant dense<0.000000e+00> : vector<8x128xf32>
    %644 = tpu.matmul %642, %643, %cst_290 {dimension_numbers = #tpu.dot_dimension_numbers<[1], [0], [0], [1], [0, 0, 1, 1], [], []>} : vector<8x128xbf16>, vector<128x128xbf16>, vector<8x128xf32> -> vector<8x128xf32>
    %c0_291 = arith.constant 0 : index
    %c0_292 = arith.constant 0 : index
    %645 = vector.load %arg8[%c0_291, %c0_292] : memref<1x128xf32, #tpu.memory_space<vmem>>, vector<1x128xf32>
    %646 = vector.broadcast %645 : vector<1x128xf32> to vector<8x128xf32>
    %647 = arith.addf %644, %646 : vector<8x128xf32>
    %c0_293 = arith.constant 0 : index
    %c0_294 = arith.constant 0 : index
    %648 = vector.load %arg11[%c0_293, %c0_294] : memref<8x128xf32, #tpu.memory_space<vmem>>, vector<8x128xf32>
    tpu.vector_store %arg11[%c0_293, %c0_294], %647 {strides = array<i32>} : memref<8x128xf32, #tpu.memory_space<vmem>>, vector<8x128xf32>,
    return
  }
}

</mosaic_0001>

<llo_original>
// kernel: lstm_forward.1
$region0: #{lstm_forward.1}
  #allocation0 [shape = 'u32[]', space=smem, size = 0x4, offset = 0x4, fixed_abs, tag = 'smem constant byte address 0x4 - core index']
  #allocation1 [shape = 'u32[144,128]{1,0:T(1,128)}', space=vmem, size = 0x12000, scoped, tag = 'internal scratch']
  #allocation2 [shape = 'f32[8,8,512]{2,1,0:T(8,128)}', space=vmem, size = 0x20000, scoped, tag = 'scratch operand']
  #allocation3 [shape = 'f32[8,8,128]{2,1,0:T(8,128)}', space=vmem, size = 0x8000, scoped, tag = 'scratch operand']
  %s0 = inlined_call_operand.vmem [shape: bf16[64,128], index: 0, kind: input, shape index: {}]
  %s1 = inlined_call_operand.hbm [shape: bf16[128,512], index: 1, kind: input, shape index: {}]
  %s2 = inlined_call_operand.hbm [shape: bf16[128,512], index: 2, kind: input, shape index: {}]
  %s3 = inlined_call_operand.vmem [shape: f32[1,512], index: 3, kind: input, shape index: {}]
  %s4 = inlined_call_operand.hbm [shape: bf16[128,512], index: 4, kind: input, shape index: {}]
  %s5 = inlined_call_operand.hbm [shape: bf16[128,512], index: 5, kind: input, shape index: {}]
  %s6 = inlined_call_operand.vmem [shape: f32[1,512], index: 6, kind: input, shape index: {}]
  %s7 = inlined_call_operand.vmem [shape: bf16[128,128], index: 7, kind: input, shape index: {}]
  %s8 = inlined_call_operand.vmem [shape: f32[1,128], index: 8, kind: input, shape index: {}]
  %s9 = inlined_call_operand.vmem [shape: f32[2,8,128], index: 9, kind: input, shape index: {}]
  %s10 = inlined_call_operand.vmem [shape: f32[2,8,128], index: 10, kind: input, shape index: {}]
  %s11 = inlined_call_operand.vmem [shape: f32[8,128], index: 11, kind: output, shape index: {}]
  %s12 = sld [smem:[#allocation0]]
  $region70: #{lstm_forward.1} parent=0
    _
  %s14 = ssub.s32 1, %s12
  %s15 = scalar_select 0, %s14, %s12
  $region1: #{lstm_forward.1} parent=0
    #allocation4 [shape = 'u8[131072]{0}', space=vmem, size = 0x20000, scoped, tag = 'input window, operand 1, single buffered']
    #allocation5 [shape = 's32[1]{0}', space=sflag, size = 0x4, scoped, tag = 'scoped memory for lstm_forward.1']
    #allocation6 [shape = 'u8[131072]{0}', space=vmem, size = 0x20000, scoped, tag = 'input window, operand 2, single buffered']
    #allocation7 [shape = 's32[1]{0}', space=sflag, size = 0x4, scoped, tag = 'scoped memory for lstm_forward.1']
    #allocation8 [shape = 'u8[131072]{0}', space=vmem, size = 0x20000, scoped, tag = 'input window, operand 4, single buffered']
    #allocation9 [shape = 'u8[131072]{0}', space=vmem, size = 0x20000, scoped, tag = 'input window, operand 5, single buffered']
    #allocation10 [shape = 's32[1]{0}', space=sflag, size = 0x4, scoped, tag = 'scoped memory for lstm_forward.1']
    %16 = vsyncpa [#allocation5], 0
    %17 = vsyncpa [#allocation7], 0
    %18 = vsyncpa [#allocation10], 0
    // Predicated region
    $region2: #{lstm_forward.1} parent=1 // pred_check
      _
    $region3: #{lstm_forward.1} parent=1 // pred_check_branch
      %20 = sbr.rel (0) target = $region5
    $region4: #{lstm_forward.1} parent=1 // pred_region
      _
    $region5: #{lstm_forward.1} parent=1 // pred_fallthru
      _
    // Predicated region
    $region6: #{lstm_forward.1} parent=1 // pred_check
      _
    $region7: #{lstm_forward.1} parent=1 // pred_check_branch
      %22 = sbr.rel (0) target = $region9
    $region8: #{lstm_forward.1} parent=1 // pred_region
      %s24 = ssub.s32 4096, 4096
      %25 = vsyncadd [#allocation5], %s24
      %s26 = sshll.u32 [#allocation4], 4
      %s27 = int_to_ptr.vmem [resolvable:$true] %s26
      %32 = dma.hbm_to_vmem [thread:$0]  %s1, 4096, %s27, [#allocation5], 256, 256, 16
    $region9: #{lstm_forward.1} parent=1 // pred_fallthru
      _
    // Predicated region
    $region10: #{lstm_forward.1} parent=1 // pred_check
      _
    $region11: #{lstm_forward.1} parent=1 // pred_check_branch
      %34 = sbr.rel (0) target = $region13
    $region12: #{lstm_forward.1} parent=1 // pred_region
      %s36 = ssub.s32 4096, 4096
      %37 = vsyncadd [#allocation7], %s36
      %s38 = sshll.u32 [#allocation6], 4
      %s39 = int_to_ptr.vmem [resolvable:$true] %s38
      %44 = dma.hbm_to_vmem [thread:$0]  %s2, 4096, %s39, [#allocation7], 256, 256, 16
    $region13: #{lstm_forward.1} parent=1 // pred_fallthru
      _
    // Predicated region
    $region14: #{lstm_forward.1} parent=1 // pred_check
      _
    $region15: #{lstm_forward.1} parent=1 // pred_check_branch
      %46 = sbr.rel (0) target = $region17
    $region16: #{lstm_forward.1} parent=1 // pred_region
      _
    $region17: #{lstm_forward.1} parent=1 // pred_fallthru
      _
    // Predicated region
    $region18: #{lstm_forward.1} parent=1 // pred_check
      _
    $region19: #{lstm_forward.1} parent=1 // pred_check_branch
      %48 = sbr.rel (0) target = $region21
    $region20: #{lstm_forward.1} parent=1 // pred_region
      %s50 = ssub.s32 4096, 4096
      %51 = vsyncadd [#allocation7], %s50
      %s52 = sshll.u32 [#allocation8], 4
      %s53 = int_to_ptr.vmem [resolvable:$true] %s52
      %58 = dma.hbm_to_vmem [thread:$0]  %s4, 4096, %s53, [#allocation7], 256, 256, 16
    $region21: #{lstm_forward.1} parent=1 // pred_fallthru
      _
    // Predicated region
    $region22: #{lstm_forward.1} parent=1 // pred_check
      _
    $region23: #{lstm_forward.1} parent=1 // pred_check_branch
      %60 = sbr.rel (0) target = $region25
    $region24: #{lstm_forward.1} parent=1 // pred_region
      %s62 = ssub.s32 4096, 4096
      %63 = vsyncadd [#allocation10], %s62
      %s64 = sshll.u32 [#allocation9], 4
      %s65 = int_to_ptr.vmem [resolvable:$true] %s64
      %70 = dma.hbm_to_vmem [thread:$0]  %s5, 4096, %s65, [#allocation10], 256, 256, 16
    $region25: #{lstm_forward.1} parent=1 // pred_fallthru
      _
    // Predicated region
    $region26: #{lstm_forward.1} parent=1 // pred_check
      _
    $region27: #{lstm_forward.1} parent=1 // pred_check_branch
      %72 = sbr.rel (0) target = $region29
    $region28: #{lstm_forward.1} parent=1 // pred_region
      _
    $region29: #{lstm_forward.1} parent=1 // pred_fallthru
      _
    // Predicated region
    $region30: #{lstm_forward.1} parent=1 // pred_check
      _
    $region31: #{lstm_forward.1} parent=1 // pred_check_branch
      %74 = sbr.rel (0) target = $region33
    $region32: #{lstm_forward.1} parent=1 // pred_region
      _
    $region33: #{lstm_forward.1} parent=1 // pred_fallthru
      _
    // Predicated region
    $region34: #{lstm_forward.1} parent=1 // pred_check
      _
    $region35: #{lstm_forward.1} parent=1 // pred_check_branch
      %76 = sbr.rel (0) target = $region37
    $region36: #{lstm_forward.1} parent=1 // pred_region
      _
    $region37: #{lstm_forward.1} parent=1 // pred_fallthru
      _
    // Predicated region
    $region38: #{lstm_forward.1} parent=1 // pred_check
      _
    $region39: #{lstm_forward.1} parent=1 // pred_check_branch
      %78 = sbr.rel (0) target = $region41
    $region40: #{lstm_forward.1} parent=1 // pred_region
      _
    $region41: #{lstm_forward.1} parent=1 // pred_fallthru
      _
    // Predicated region
    $region42: #{lstm_forward.1} parent=1 // pred_check
      _
    $region43: #{lstm_forward.1} parent=1 // pred_check_branch
      %80 = sbr.rel (0) target = $region45
    $region44: #{lstm_forward.1} parent=1 // pred_region
      _
    $region45: #{lstm_forward.1} parent=1 // pred_fallthru
      _
    // Predicated region
    $region46: #{lstm_forward.1} parent=1 // pred_check
      _
    $region47: #{lstm_forward.1} parent=1 // pred_check_branch
      %82 = sbr.rel (0) target = $region49
    $region48: #{lstm_forward.1} parent=1 // pred_region
      %83 = dma.done [#allocation5], 4096
    $region49: #{lstm_forward.1} parent=1 // pred_fallthru
      _
    // Predicated region
    $region50: #{lstm_forward.1} parent=1 // pred_check
      _
    $region51: #{lstm_forward.1} parent=1 // pred_check_branch
      %85 = sbr.rel (0) target = $region53
    $region52: #{lstm_forward.1} parent=1 // pred_region
      %86 = dma.done [#allocation7], 4096
    $region53: #{lstm_forward.1} parent=1 // pred_fallthru
      _
    // Predicated region
    $region54: #{lstm_forward.1} parent=1 // pred_check
      _
    $region55: #{lstm_forward.1} parent=1 // pred_check_branch
      %88 = sbr.rel (0) target = $region57
    $region56: #{lstm_forward.1} parent=1 // pred_region
      %89 = dma.done [#allocation7], 4096
    $region57: #{lstm_forward.1} parent=1 // pred_fallthru
      _
    // Predicated region
    $region58: #{lstm_forward.1} parent=1 // pred_check
      _
    $region59: #{lstm_forward.1} parent=1 // pred_check_branch
      %91 = sbr.rel (0) target = $region61
    $region60: #{lstm_forward.1} parent=1 // pred_region
      %92 = dma.done [#allocation10], 4096
    $region61: #{lstm_forward.1} parent=1 // pred_fallthru
      _
    %v94 = vld [vmem:[%s0] sm:$0xf]
    %v95 = vld [vmem:[%s0 + $0x4] sm:$0xf]
    %v96 = vld [vmem:[%s0 + $0x8] sm:$0xf]
    %v97 = vld [vmem:[%s0 + $0xc] sm:$0xf]
    %v98 = vld [vmem:[%s0 + $0x10] sm:$0xf]
    %v99 = vld [vmem:[%s0 + $0x14] sm:$0xf]
    %v100 = vld [vmem:[%s0 + $0x18] sm:$0xf]
    %v101 = vld [vmem:[%s0 + $0x1c] sm:$0xf]
    %v102 = vld [vmem:[#allocation4] sm:$0xff]
    %v103 = vld [vmem:[#allocation4 + $0x8] sm:$0xff]
    %v104 = vld [vmem:[#allocation4 + $0x10] sm:$0xff]
    %v105 = vld [vmem:[#allocation4 + $0x18] sm:$0xff]
    %v106 = vld [vmem:[#allocation4 + $0x20] sm:$0xff]
    %v107 = vld [vmem:[#allocation4 + $0x28] sm:$0xff]
    %v108 = vld [vmem:[#allocation4 + $0x30] sm:$0xff]
    %v109 = vld [vmem:[#allocation4 + $0x38] sm:$0xff]
    %v110 = vld [vmem:[#allocation4 + $0x40] sm:$0xff]
    %v111 = vld [vmem:[#allocation4 + $0x48] sm:$0xff]
    %v112 = vld [vmem:[#allocation4 + $0x50] sm:$0xff]
    %v113 = vld [vmem:[#allocation4 + $0x58] sm:$0xff]
    %v114 = vld [vmem:[#allocation4 + $0x60] sm:$0xff]
    %v115 = vld [vmem:[#allocation4 + $0x68] sm:$0xff]
    %v116 = vld [vmem:[#allocation4 + $0x70] sm:$0xff]
    %v117 = vld [vmem:[#allocation4 + $0x78] sm:$0xff]
    %v118 = vld [vmem:[#allocation4 + $0x80] sm:$0xff]
    %v119 = vld [vmem:[#allocation4 + $0x88] sm:$0xff]
    %v120 = vld [vmem:[#allocation4 + $0x90] sm:$0xff]
    %v121 = vld [vmem:[#allocation4 + $0x98] sm:$0xff]
    %v122 = vld [vmem:[#allocation4 + $0xa0] sm:$0xff]
    %v123 = vld [vmem:[#allocation4 + $0xa8] sm:$0xff]
    %v124 = vld [vmem:[#allocation4 + $0xb0] sm:$0xff]
    %v125 = vld [vmem:[#allocation4 + $0xb8] sm:$0xff]
    %v126 = vld [vmem:[#allocation4 + $0xc0] sm:$0xff]
    %v127 = vld [vmem:[#allocation4 + $0xc8] sm:$0xff]
    %v128 = vld [vmem:[#allocation4 + $0xd0] sm:$0xff]
    %v129 = vld [vmem:[#allocation4 + $0xd8] sm:$0xff]
    %v130 = vld [vmem:[#allocation4 + $0xe0] sm:$0xff]
    %v131 = vld [vmem:[#allocation4 + $0xe8] sm:$0xff]
    %v132 = vld [vmem:[#allocation4 + $0xf0] sm:$0xff]
    %v133 = vld [vmem:[#allocation4 + $0xf8] sm:$0xff]
    %v134 = vld [vmem:[%s3] sm:$0xf]
    %v136 = vlaneseq
    %v137 = vshrl.u32 %v136, 7
    %v138 = vsub.s32 0, %v137
    %v139 = vrot.slane %v134, %v138
    %v140 = vlaneseq
    %v141 = vshrl.u32 %v140, 7
    %v142 = vsub.s32 1, %v141
    %v143 = vrot.slane %v134, %v142
    %v144 = vlaneseq
    %v145 = vshrl.u32 %v144, 7
    %v146 = vsub.s32 2, %v145
    %v147 = vrot.slane %v134, %v146
    %v148 = vlaneseq
    %v149 = vshrl.u32 %v148, 7
    %v150 = vsub.s32 3, %v149
    %v151 = vrot.slane %v134, %v150
    %v164 = vunpack.c.l.b16 %v94
    %v165 = vunpack.c.l.b16 %v95
    %v166 = vunpack.c.l.b16 %v96
    %v167 = vunpack.c.l.b16 %v97
    %v168 = vunpack.c.l.b16 %v98
    %v169 = vunpack.c.l.b16 %v99
    %v170 = vunpack.c.l.b16 %v100
    %v171 = vunpack.c.l.b16 %v101
    %v172 = vpack.c.b16 %v165, %v164
    %v173 = vpack.c.b16 %v167, %v166
    %v174 = vpack.c.b16 %v169, %v168
    %v175 = vpack.c.b16 %v171, %v170
    %v212 = vunpack.c.l.b16 %v102
    %v213 = vunpack.c.h.b16 %v102
    %v214 = vunpack.c.l.b16 %v103
    %v215 = vunpack.c.h.b16 %v103
    %v216 = vunpack.c.l.b16 %v104
    %v217 = vunpack.c.h.b16 %v104
    %v218 = vunpack.c.l.b16 %v105
    %v219 = vunpack.c.h.b16 %v105
    %v220 = vunpack.c.l.b16 %v106
    %v221 = vunpack.c.h.b16 %v106
    %v222 = vunpack.c.l.b16 %v107
    %v223 = vunpack.c.h.b16 %v107
    %v224 = vunpack.c.l.b16 %v108
    %v225 = vunpack.c.h.b16 %v108
    %v226 = vunpack.c.l.b16 %v109
    %v227 = vunpack.c.h.b16 %v109
    %v228 = vunpack.c.l.b16 %v110
    %v229 = vunpack.c.h.b16 %v110
    %v230 = vunpack.c.l.b16 %v111
    %v231 = vunpack.c.h.b16 %v111
    %v232 = vunpack.c.l.b16 %v112
    %v233 = vunpack.c.h.b16 %v112
    %v234 = vunpack.c.l.b16 %v113
    %v235 = vunpack.c.h.b16 %v113
    %v236 = vunpack.c.l.b16 %v114
    %v237 = vunpack.c.h.b16 %v114
    %v238 = vunpack.c.l.b16 %v115
    %v239 = vunpack.c.h.b16 %v115
    %v240 = vunpack.c.l.b16 %v116
    %v241 = vunpack.c.h.b16 %v116
    %v242 = vunpack.c.l.b16 %v117
    %v243 = vunpack.c.h.b16 %v117
    %v244 = vunpack.c.l.b16 %v118
    %v245 = vunpack.c.h.b16 %v118
    %v246 = vunpack.c.l.b16 %v119
    %v247 = vunpack.c.h.b16 %v119
    %v248 = vunpack.c.l.b16 %v120
    %v249 = vunpack.c.h.b16 %v120
    %v250 = vunpack.c.l.b16 %v121
    %v251 = vunpack.c.h.b16 %v121
    %v252 = vunpack.c.l.b16 %v122
    %v253 = vunpack.c.h.b16 %v122
    %v254 = vunpack.c.l.b16 %v123
    %v255 = vunpack.c.h.b16 %v123
    %v256 = vunpack.c.l.b16 %v124
    %v257 = vunpack.c.h.b16 %v124
    %v258 = vunpack.c.l.b16 %v125
    %v259 = vunpack.c.h.b16 %v125
    %v260 = vunpack.c.l.b16 %v126
    %v261 = vunpack.c.h.b16 %v126
    %v262 = vunpack.c.l.b16 %v127
    %v263 = vunpack.c.h.b16 %v127
    %v264 = vunpack.c.l.b16 %v128
    %v265 = vunpack.c.h.b16 %v128
    %v266 = vunpack.c.l.b16 %v129
    %v267 = vunpack.c.h.b16 %v129
    %v268 = vunpack.c.l.b16 %v130
    %v269 = vunpack.c.h.b16 %v130
    %v270 = vunpack.c.l.b16 %v131
    %v271 = vunpack.c.h.b16 %v131
    %v272 = vunpack.c.l.b16 %v132
    %v273 = vunpack.c.h.b16 %v132
    %v274 = vunpack.c.l.b16 %v133
    %v275 = vunpack.c.h.b16 %v133
    %v276 = vpack.c.b16 %v216, %v212
    %v277 = vpack.c.b16 %v217, %v213
    %v278 = vpack.c.b16 %v218, %v214
    %v279 = vpack.c.b16 %v219, %v215
    %v280 = vpack.c.b16 %v224, %v220
    %v281 = vpack.c.b16 %v225, %v221
    %v282 = vpack.c.b16 %v226, %v222
    %v283 = vpack.c.b16 %v227, %v223
    %v284 = vpack.c.b16 %v232, %v228
    %v285 = vpack.c.b16 %v233, %v229
    %v286 = vpack.c.b16 %v234, %v230
    %v287 = vpack.c.b16 %v235, %v231
    %v288 = vpack.c.b16 %v240, %v236
    %v289 = vpack.c.b16 %v241, %v237
    %v290 = vpack.c.b16 %v242, %v238
    %v291 = vpack.c.b16 %v243, %v239
    %v292 = vpack.c.b16 %v248, %v244
    %v293 = vpack.c.b16 %v249, %v245
    %v294 = vpack.c.b16 %v250, %v246
    %v295 = vpack.c.b16 %v251, %v247
    %v296 = vpack.c.b16 %v256, %v252
    %v297 = vpack.c.b16 %v257, %v253
    %v298 = vpack.c.b16 %v258, %v254
    %v299 = vpack.c.b16 %v259, %v255
    %v300 = vpack.c.b16 %v264, %v260
    %v301 = vpack.c.b16 %v265, %v261
    %v302 = vpack.c.b16 %v266, %v262
    %v303 = vpack.c.b16 %v267, %v263
    %v304 = vpack.c.b16 %v272, %v268
    %v305 = vpack.c.b16 %v273, %v269
    %v306 = vpack.c.b16 %v274, %v270
    %v307 = vpack.c.b16 %v275, %v271
    %340 = vmatprep.subr.bf16.mxu0 %v277
    %341 = vmatpush1.bf16.msra.mxu0 %v276
    %342 = vmatprep.subr.bf16.mxu0 %v281
    %343 = vmatpush1.bf16.msra.mxu0 %v280
    %344 = vmatprep.subr.bf16.mxu0 %v285
    %345 = vmatpush1.bf16.msra.mxu0 %v284
    %346 = vmatprep.subr.bf16.mxu0 %v289
    %347 = vmatpush1.bf16.msra.mxu0 %v288
    %348 = vmatprep.subr.bf16.mxu0 %v293
    %349 = vmatpush1.bf16.msra.mxu0 %v292
    %350 = vmatprep.subr.bf16.mxu0 %v297
    %351 = vmatpush1.bf16.msra.mxu0 %v296
    %352 = vmatprep.subr.bf16.mxu0 %v301
    %353 = vmatpush1.bf16.msra.mxu0 %v300
    %354 = vmatprep.subr.bf16.mxu0 %v305
    %355 = vmatpush1.bf16.msra.mxu0 %v304
    %356 = vmatprep.subr.bf16.mxu0 0
    %357 = vmatpush1.bf16.msra.mxu0 0
    %358 = vmatprep.subr.bf16.mxu0 0
    %359 = vmatpush1.bf16.msra.mxu0 0
    %360 = vmatprep.subr.bf16.mxu0 0
    %361 = vmatpush1.bf16.msra.mxu0 0
    %362 = vmatprep.subr.bf16.mxu0 0
    %363 = vmatpush1.bf16.msra.mxu0 0
    %364 = vmatprep.subr.bf16.mxu0 0
    %365 = vmatpush1.bf16.msra.mxu0 0
    %366 = vmatprep.subr.bf16.mxu0 0
    %367 = vmatpush1.bf16.msra.mxu0 0
    %368 = vmatprep.subr.bf16.mxu0 0
    %369 = vmatpush1.bf16.msra.mxu0 0
    %370 = vmatprep.subr.bf16.mxu0 0
    %371 = vmatpush1.bf16.msra.mxu0 0
    %372 = vmatprep.mubr.bf16.mxu0 0
    %373 = vmatmul.mubr.bf16.gmra.mrb[0].mxu0 %v172
    %v374 = vpop.f32.mrb[0].mxu0
    %v375 = vadd.f32 %v139, %v374
    %v376 = vpop.f32.mrb[0].mxu0
    %v377 = vadd.f32 %v143, %v376
    %v378 = vpop.f32.mrb[0].mxu0
    %v379 = vadd.f32 %v139, %v378
    %v380 = vpop.f32.mrb[0].mxu0
    %v381 = vadd.f32 %v143, %v380
    %382 = vmatprep.mubr.bf16.mxu0 0
    %383 = vmatmul.mubr.bf16.gmra.mrb[0].mxu0 %v173
    %v384 = vpop.f32.mrb[0].mxu0
    %v385 = vadd.f32 %v139, %v384
    %v386 = vpop.f32.mrb[0].mxu0
    %v387 = vadd.f32 %v143, %v386
    %v388 = vpop.f32.mrb[0].mxu0
    %v389 = vadd.f32 %v139, %v388
    %v390 = vpop.f32.mrb[0].mxu0
    %v391 = vadd.f32 %v143, %v390
    %392 = vmatprep.mubr.bf16.mxu0 0
    %393 = vmatmul.mubr.bf16.gmra.mrb[0].mxu0 %v174
    %v394 = vpop.f32.mrb[0].mxu0
    %v395 = vadd.f32 %v139, %v394
    %v396 = vpop.f32.mrb[0].mxu0
    %v397 = vadd.f32 %v143, %v396
    %v398 = vpop.f32.mrb[0].mxu0
    %v399 = vadd.f32 %v139, %v398
    %v400 = vpop.f32.mrb[0].mxu0
    %v401 = vadd.f32 %v143, %v400
    %402 = vmatprep.mubr.bf16.mxu0 0
    %403 = vmatmul.mubr.bf16.gmra.mrb[0].mxu0 %v175
    %v404 = vpop.f32.mrb[0].mxu0
    %v405 = vadd.f32 %v139, %v404
    %v406 = vpop.f32.mrb[0].mxu0
    %v407 = vadd.f32 %v143, %v406
    %v408 = vpop.f32.mrb[0].mxu0
    %v409 = vadd.f32 %v139, %v408
    %v410 = vpop.f32.mrb[0].mxu0
    %v411 = vadd.f32 %v143, %v410
    %412 = vdwg.mxu0
    %413 = vmatprep.subr.bf16.mxu0 %v279
    %414 = vmatpush1.bf16.msra.mxu0 %v278
    %415 = vmatprep.subr.bf16.mxu0 %v283
    %416 = vmatpush1.bf16.msra.mxu0 %v282
    %417 = vmatprep.subr.bf16.mxu0 %v287
    %418 = vmatpush1.bf16.msra.mxu0 %v286
    %419 = vmatprep.subr.bf16.mxu0 %v291
    %420 = vmatpush1.bf16.msra.mxu0 %v290
    %421 = vmatprep.subr.bf16.mxu0 %v295
    %422 = vmatpush1.bf16.msra.mxu0 %v294
    %423 = vmatprep.subr.bf16.mxu0 %v299
    %424 = vmatpush1.bf16.msra.mxu0 %v298
    %425 = vmatprep.subr.bf16.mxu0 %v303
    %426 = vmatpush1.bf16.msra.mxu0 %v302
    %427 = vmatprep.subr.bf16.mxu0 %v307
    %428 = vmatpush1.bf16.msra.mxu0 %v306
    %429 = vmatprep.subr.bf16.mxu0 0
    %430 = vmatpush1.bf16.msra.mxu0 0
    %431 = vmatprep.subr.bf16.mxu0 0
    %432 = vmatpush1.bf16.msra.mxu0 0
    %433 = vmatprep.subr.bf16.mxu0 0
    %434 = vmatpush1.bf16.msra.mxu0 0
    %435 = vmatprep.subr.bf16.mxu0 0
    %436 = vmatpush1.bf16.msra.mxu0 0
    %437 = vmatprep.subr.bf16.mxu0 0
    %438 = vmatpush1.bf16.msra.mxu0 0
    %439 = vmatprep.subr.bf16.mxu0 0
    %440 = vmatpush1.bf16.msra.mxu0 0
    %441 = vmatprep.subr.bf16.mxu0 0
    %442 = vmatpush1.bf16.msra.mxu0 0
    %443 = vmatprep.subr.bf16.mxu0 0
    %444 = vmatpush1.bf16.msra.mxu0 0
    %445 = vmatprep.mubr.bf16.mxu0 0
    %446 = vmatmul.mubr.bf16.gmra.mrb[0].mxu0 %v172
    %v447 = vpop.f32.mrb[0].mxu0
    %v448 = vadd.f32 %v147, %v447
    %v449 = vpop.f32.mrb[0].mxu0
    %v450 = vadd.f32 %v151, %v449
    %v451 = vpop.f32.mrb[0].mxu0
    %v452 = vadd.f32 %v147, %v451
    %v453 = vpop.f32.mrb[0].mxu0
    %v454 = vadd.f32 %v151, %v453
    %455 = vmatprep.mubr.bf16.mxu0 0
    %456 = vmatmul.mubr.bf16.gmra.mrb[0].mxu0 %v173
    %v457 = vpop.f32.mrb[0].mxu0
    %v458 = vadd.f32 %v147, %v457
    %v459 = vpop.f32.mrb[0].mxu0
    %v460 = vadd.f32 %v151, %v459
    %v461 = vpop.f32.mrb[0].mxu0
    %v462 = vadd.f32 %v147, %v461
    %v463 = vpop.f32.mrb[0].mxu0
    %v464 = vadd.f32 %v151, %v463
    %465 = vmatprep.mubr.bf16.mxu0 0
    %466 = vmatmul.mubr.bf16.gmra.mrb[0].mxu0 %v174
    %v467 = vpop.f32.mrb[0].mxu0
    %v468 = vadd.f32 %v147, %v467
    %v469 = vpop.f32.mrb[0].mxu0
    %v470 = vadd.f32 %v151, %v469
    %v471 = vpop.f32.mrb[0].mxu0
    %v472 = vadd.f32 %v147, %v471
    %v473 = vpop.f32.mrb[0].mxu0
    %v474 = vadd.f32 %v151, %v473
    %475 = vmatprep.mubr.bf16.mxu0 0
    %476 = vmatmul.mubr.bf16.gmra.mrb[0].mxu0 %v175
    %v477 = vpop.f32.mrb[0].mxu0
    %v478 = vadd.f32 %v147, %v477
    %v479 = vpop.f32.mrb[0].mxu0
    %v480 = vadd.f32 %v151, %v479
    %v481 = vpop.f32.mrb[0].mxu0
    %v482 = vadd.f32 %v147, %v481
    %v483 = vpop.f32.mrb[0].mxu0
    %v484 = vadd.f32 %v151, %v483
    %485 = vdwg.mxu0
    %486 = vst [vmem:[#allocation2] sm:$0xff] %v375
    %487 = vst [vmem:[#allocation2 + $0x8] sm:$0xff] %v377
    %488 = vst [vmem:[#allocation2 + $0x10] sm:$0xff] %v448
    %489 = vst [vmem:[#allocation2 + $0x18] sm:$0xff] %v450
    %490 = vst [vmem:[#allocation2 + $0x20] sm:$0xff] %v379
    %491 = vst [vmem:[#allocation2 + $0x28] sm:$0xff] %v381
    %492 = vst [vmem:[#allocation2 + $0x30] sm:$0xff] %v452
    %493 = vst [vmem:[#allocation2 + $0x38] sm:$0xff] %v454
    %494 = vst [vmem:[#allocation2 + $0x40] sm:$0xff] %v385
    %495 = vst [vmem:[#allocation2 + $0x48] sm:$0xff] %v387
    %496 = vst [vmem:[#allocation2 + $0x50] sm:$0xff] %v458
    %497 = vst [vmem:[#allocation2 + $0x58] sm:$0xff] %v460
    %498 = vst [vmem:[#allocation2 + $0x60] sm:$0xff] %v389
    %499 = vst [vmem:[#allocation2 + $0x68] sm:$0xff] %v391
    %500 = vst [vmem:[#allocation2 + $0x70] sm:$0xff] %v462
    %501 = vst [vmem:[#allocation2 + $0x78] sm:$0xff] %v464
    %502 = vst [vmem:[#allocation2 + $0x80] sm:$0xff] %v395
    %503 = vst [vmem:[#allocation2 + $0x88] sm:$0xff] %v397
    %504 = vst [vmem:[#allocation2 + $0x90] sm:$0xff] %v468
    %505 = vst [vmem:[#allocation2 + $0x98] sm:$0xff] %v470
    %506 = vst [vmem:[#allocation2 + $0xa0] sm:$0xff] %v399
    %507 = vst [vmem:[#allocation2 + $0xa8] sm:$0xff] %v401
    %508 = vst [vmem:[#allocation2 + $0xb0] sm:$0xff] %v472
    %509 = vst [vmem:[#allocation2 + $0xb8] sm:$0xff] %v474
    %510 = vst [vmem:[#allocation2 + $0xc0] sm:$0xff] %v405
    %511 = vst [vmem:[#allocation2 + $0xc8] sm:$0xff] %v407
    %512 = vst [vmem:[#allocation2 + $0xd0] sm:$0xff] %v478
    %513 = vst [vmem:[#allocation2 + $0xd8] sm:$0xff] %v480
    %514 = vst [vmem:[#allocation2 + $0xe0] sm:$0xff] %v409
    %515 = vst [vmem:[#allocation2 + $0xe8] sm:$0xff] %v411
    %516 = vst [vmem:[#allocation2 + $0xf0] sm:$0xff] %v482
    %517 = vst [vmem:[#allocation2 + $0xf8] sm:$0xff] %v484
    %v518 = vld [vmem:[%s9] sm:$0xff]
    %v519 = vld [vmem:[%s10] sm:$0xff]
    %v520 = vld [vmem:[#allocation2] sm:$0xff]
    %v521 = vld [vmem:[#allocation2 + $0x8] sm:$0xff]
    %v522 = vld [vmem:[#allocation2 + $0x10] sm:$0xff]
    %v523 = vld [vmem:[#allocation2 + $0x18] sm:$0xff]
    %v524 = vpack.c.bf16 %v518, %v518
    %v525 = vld [vmem:[#allocation6] sm:$0xff]
    %v526 = vld [vmem:[#allocation6 + $0x8] sm:$0xff]
    %v527 = vld [vmem:[#allocation6 + $0x10] sm:$0xff]
    %v528 = vld [vmem:[#allocation6 + $0x18] sm:$0xff]
    %v529 = vld [vmem:[#allocation6 + $0x20] sm:$0xff]
    %v530 = vld [vmem:[#allocation6 + $0x28] sm:$0xff]
    %v531 = vld [vmem:[#allocation6 + $0x30] sm:$0xff]
    %v532 = vld [vmem:[#allocation6 + $0x38] sm:$0xff]
    %v533 = vld [vmem:[#allocation6 + $0x40] sm:$0xff]
    %v534 = vld [vmem:[#allocation6 + $0x48] sm:$0xff]
    %v535 = vld [vmem:[#allocation6 + $0x50] sm:$0xff]
    %v536 = vld [vmem:[#allocation6 + $0x58] sm:$0xff]
    %v537 = vld [vmem:[#allocation6 + $0x60] sm:$0xff]
    %v538 = vld [vmem:[#allocation6 + $0x68] sm:$0xff]
    %v539 = vld [vmem:[#allocation6 + $0x70] sm:$0xff]
    %v540 = vld [vmem:[#allocation6 + $0x78] sm:$0xff]
    %v541 = vld [vmem:[#allocation6 + $0x80] sm:$0xff]
    %v542 = vld [vmem:[#allocation6 + $0x88] sm:$0xff]
    %v543 = vld [vmem:[#allocation6 + $0x90] sm:$0xff]
    %v544 = vld [vmem:[#allocation6 + $0x98] sm:$0xff]
    %v545 = vld [vmem:[#allocation6 + $0xa0] sm:$0xff]
    %v546 = vld [vmem:[#allocation6 + $0xa8] sm:$0xff]
    %v547 = vld [vmem:[#allocation6 + $0xb0] sm:$0xff]
    %v548 = vld [vmem:[#allocation6 + $0xb8] sm:$0xff]
    %v549 = vld [vmem:[#allocation6 + $0xc0] sm:$0xff]
    %v550 = vld [vmem:[#allocation6 + $0xc8] sm:$0xff]
    %v551 = vld [vmem:[#allocation6 + $0xd0] sm:$0xff]
    %v552 = vld [vmem:[#allocation6 + $0xd8] sm:$0xff]
    %v553 = vld [vmem:[#allocation6 + $0xe0] sm:$0xff]
    %v554 = vld [vmem:[#allocation6 + $0xe8] sm:$0xff]
    %v555 = vld [vmem:[#allocation6 + $0xf0] sm:$0xff]
    %v556 = vld [vmem:[#allocation6 + $0xf8] sm:$0xff]
    %v589 = vunpack.c.l.b16 %v525
    %v590 = vunpack.c.h.b16 %v525
    %v591 = vunpack.c.l.b16 %v526
    %v592 = vunpack.c.h.b16 %v526
    %v593 = vunpack.c.l.b16 %v527
    %v594 = vunpack.c.h.b16 %v527
    %v595 = vunpack.c.l.b16 %v528
    %v596 = vunpack.c.h.b16 %v528
    %v597 = vunpack.c.l.b16 %v529
    %v598 = vunpack.c.h.b16 %v529
    %v599 = vunpack.c.l.b16 %v530
    %v600 = vunpack.c.h.b16 %v530
    %v601 = vunpack.c.l.b16 %v531
    %v602 = vunpack.c.h.b16 %v531
    %v603 = vunpack.c.l.b16 %v532
    %v604 = vunpack.c.h.b16 %v532
    %v605 = vunpack.c.l.b16 %v533
    %v606 = vunpack.c.h.b16 %v533
    %v607 = vunpack.c.l.b16 %v534
    %v608 = vunpack.c.h.b16 %v534
    %v609 = vunpack.c.l.b16 %v535
    %v610 = vunpack.c.h.b16 %v535
    %v611 = vunpack.c.l.b16 %v536
    %v612 = vunpack.c.h.b16 %v536
    %v613 = vunpack.c.l.b16 %v537
    %v614 = vunpack.c.h.b16 %v537
    %v615 = vunpack.c.l.b16 %v538
    %v616 = vunpack.c.h.b16 %v538
    %v617 = vunpack.c.l.b16 %v539
    %v618 = vunpack.c.h.b16 %v539
    %v619 = vunpack.c.l.b16 %v540
    %v620 = vunpack.c.h.b16 %v540
    %v621 = vunpack.c.l.b16 %v541
    %v622 = vunpack.c.h.b16 %v541
    %v623 = vunpack.c.l.b16 %v542
    %v624 = vunpack.c.h.b16 %v542
    %v625 = vunpack.c.l.b16 %v543
    %v626 = vunpack.c.h.b16 %v543
    %v627 = vunpack.c.l.b16 %v544
    %v628 = vunpack.c.h.b16 %v544
    %v629 = vunpack.c.l.b16 %v545
    %v630 = vunpack.c.h.b16 %v545
    %v631 = vunpack.c.l.b16 %v546
    %v632 = vunpack.c.h.b16 %v546
    %v633 = vunpack.c.l.b16 %v547
    %v634 = vunpack.c.h.b16 %v547
    %v635 = vunpack.c.l.b16 %v548
    %v636 = vunpack.c.h.b16 %v548
    %v637 = vunpack.c.l.b16 %v549
    %v638 = vunpack.c.h.b16 %v549
    %v639 = vunpack.c.l.b16 %v550
    %v640 = vunpack.c.h.b16 %v550
    %v641 = vunpack.c.l.b16 %v551
    %v642 = vunpack.c.h.b16 %v551
    %v643 = vunpack.c.l.b16 %v552
    %v644 = vunpack.c.h.b16 %v552
    %v645 = vunpack.c.l.b16 %v553
    %v646 = vunpack.c.h.b16 %v553
    %v647 = vunpack.c.l.b16 %v554
    %v648 = vunpack.c.h.b16 %v554
    %v649 = vunpack.c.l.b16 %v555
    %v650 = vunpack.c.h.b16 %v555
    %v651 = vunpack.c.l.b16 %v556
    %v652 = vunpack.c.h.b16 %v556
    %v653 = vpack.c.b16 %v593, %v589
    %v654 = vpack.c.b16 %v594, %v590
    %v655 = vpack.c.b16 %v595, %v591
    %v656 = vpack.c.b16 %v596, %v592
    %v657 = vpack.c.b16 %v601, %v597
    %v658 = vpack.c.b16 %v602, %v598
    %v659 = vpack.c.b16 %v603, %v599
    %v660 = vpack.c.b16 %v604, %v600
    %v661 = vpack.c.b16 %v609, %v605
    %v662 = vpack.c.b16 %v610, %v606
    %v663 = vpack.c.b16 %v611, %v607
    %v664 = vpack.c.b16 %v612, %v608
    %v665 = vpack.c.b16 %v617, %v613
    %v666 = vpack.c.b16 %v618, %v614
    %v667 = vpack.c.b16 %v619, %v615
    %v668 = vpack.c.b16 %v620, %v616
    %v669 = vpack.c.b16 %v625, %v621
    %v670 = vpack.c.b16 %v626, %v622
    %v671 = vpack.c.b16 %v627, %v623
    %v672 = vpack.c.b16 %v628, %v624
    %v673 = vpack.c.b16 %v633, %v629
    %v674 = vpack.c.b16 %v634, %v630
    %v675 = vpack.c.b16 %v635, %v631
    %v676 = vpack.c.b16 %v636, %v632
    %v677 = vpack.c.b16 %v641, %v637
    %v678 = vpack.c.b16 %v642, %v638
    %v679 = vpack.c.b16 %v643, %v639
    %v680 = vpack.c.b16 %v644, %v640
    %v681 = vpack.c.b16 %v649, %v645
    %v682 = vpack.c.b16 %v650, %v646
    %v683 = vpack.c.b16 %v651, %v647
    %v684 = vpack.c.b16 %v652, %v648
    %717 = vmatprep.subr.bf16.mxu0 %v654
    %718 = vmatpush1.bf16.msra.mxu0 %v653
    %719 = vmatprep.subr.bf16.mxu0 %v658
    %720 = vmatpush1.bf16.msra.mxu0 %v657
    %721 = vmatprep.subr.bf16.mxu0 %v662
    %722 = vmatpush1.bf16.msra.mxu0 %v661
    %723 = vmatprep.subr.bf16.mxu0 %v666
    %724 = vmatpush1.bf16.msra.mxu0 %v665
    %725 = vmatprep.subr.bf16.mxu0 %v670
    %726 = vmatpush1.bf16.msra.mxu0 %v669
    %727 = vmatprep.subr.bf16.mxu0 %v674
    %728 = vmatpush1.bf16.msra.mxu0 %v673
    %729 = vmatprep.subr.bf16.mxu0 %v678
    %730 = vmatpush1.bf16.msra.mxu0 %v677
    %731 = vmatprep.subr.bf16.mxu0 %v682
    %732 = vmatpush1.bf16.msra.mxu0 %v681
    %733 = vmatprep.subr.bf16.mxu0 0
    %734 = vmatpush1.bf16.msra.mxu0 0
    %735 = vmatprep.subr.bf16.mxu0 0
    %736 = vmatpush1.bf16.msra.mxu0 0
    %737 = vmatprep.subr.bf16.mxu0 0
    %738 = vmatpush1.bf16.msra.mxu0 0
    %739 = vmatprep.subr.bf16.mxu0 0
    %740 = vmatpush1.bf16.msra.mxu0 0
    %741 = vmatprep.subr.bf16.mxu0 0
    %742 = vmatpush1.bf16.msra.mxu0 0
    %743 = vmatprep.subr.bf16.mxu0 0
    %744 = vmatpush1.bf16.msra.mxu0 0
    %745 = vmatprep.subr.bf16.mxu0 0
    %746 = vmatpush1.bf16.msra.mxu0 0
    %747 = vmatprep.subr.bf16.mxu0 0
    %748 = vmatpush1.bf16.msra.mxu0 0
    %749 = vmatprep.mubr.bf16.mxu0 0
    %750 = vmatmul.mubr.bf16.gmra.mrb[0].mxu0 %v524
    %v751 = vpop.f32.mrb[0].mxu0
    %v752 = vadd.f32 0.0, %v751
    %v753 = vpop.f32.mrb[0].mxu0
    %v754 = vadd.f32 0.0, %v753
    %v755 = vpop.f32.mrb[0].mxu0
    %v756 = vpop.f32.mrb[0].mxu0
    %757 = vdwg.mxu0
    %758 = vmatprep.subr.bf16.mxu0 %v656
    %759 = vmatpush1.bf16.msra.mxu0 %v655
    %760 = vmatprep.subr.bf16.mxu0 %v660
    %761 = vmatpush1.bf16.msra.mxu0 %v659
    %762 = vmatprep.subr.bf16.mxu0 %v664
    %763 = vmatpush1.bf16.msra.mxu0 %v663
    %764 = vmatprep.subr.bf16.mxu0 %v668
    %765 = vmatpush1.bf16.msra.mxu0 %v667
    %766 = vmatprep.subr.bf16.mxu0 %v672
    %767 = vmatpush1.bf16.msra.mxu0 %v671
    %768 = vmatprep.subr.bf16.mxu0 %v676
    %769 = vmatpush1.bf16.msra.mxu0 %v675
    %770 = vmatprep.subr.bf16.mxu0 %v680
    %771 = vmatpush1.bf16.msra.mxu0 %v679
    %772 = vmatprep.subr.bf16.mxu0 %v684
    %773 = vmatpush1.bf16.msra.mxu0 %v683
    %774 = vmatprep.subr.bf16.mxu0 0
    %775 = vmatpush1.bf16.msra.mxu0 0
    %776 = vmatprep.subr.bf16.mxu0 0
    %777 = vmatpush1.bf16.msra.mxu0 0
    %778 = vmatprep.subr.bf16.mxu0 0
    %779 = vmatpush1.bf16.msra.mxu0 0
    %780 = vmatprep.subr.bf16.mxu0 0
    %781 = vmatpush1.bf16.msra.mxu0 0
    %782 = vmatprep.subr.bf16.mxu0 0
    %783 = vmatpush1.bf16.msra.mxu0 0
    %784 = vmatprep.subr.bf16.mxu0 0
    %785 = vmatpush1.bf16.msra.mxu0 0
    %786 = vmatprep.subr.bf16.mxu0 0
    %787 = vmatpush1.bf16.msra.mxu0 0
    %788 = vmatprep.subr.bf16.mxu0 0
    %789 = vmatpush1.bf16.msra.mxu0 0
    %790 = vmatprep.mubr.bf16.mxu0 0
    %791 = vmatmul.mubr.bf16.gmra.mrb[0].mxu0 %v524
    %v792 = vpop.f32.mrb[0].mxu0
    %v793 = vadd.f32 0.0, %v792
    %v794 = vpop.f32.mrb[0].mxu0
    %v795 = vadd.f32 0.0, %v794
    %v796 = vpop.f32.mrb[0].mxu0
    %v797 = vpop.f32.mrb[0].mxu0
    %798 = vdwg.mxu0
    %v799 = vadd.f32 %v520, %v752
    %v800 = vadd.f32 %v521, %v754
    %v801 = vadd.f32 %v522, %v793
    %v802 = vadd.f32 %v523, %v795
    %v803 = vmul.f32 %v799, 0.5
    %v804 = vtanh.pop %v803
    %v805 = vmul.f32 %v804, 0.5
    %v806 = vadd.f32 %v805, 0.5
    %v807 = vmul.f32 %v800, 0.5
    %v808 = vtanh.pop %v807
    %v809 = vmul.f32 %v808, 0.5
    %v810 = vadd.f32 %v809, 0.5
    %v811 = vtanh.pop %v801
    %v812 = vmul.f32 %v802, 0.5
    %v813 = vtanh.pop %v812
    %v814 = vmul.f32 %v813, 0.5
    %v815 = vadd.f32 %v814, 0.5
    %v816 = vmul.f32 %v810, %v519
    %v817 = vmul.f32 %v806, %v811
    %v818 = vadd.f32 %v816, %v817
    %v819 = vtanh.pop %v818
    %v820 = vmul.f32 %v815, %v819
    %821 = vst [vmem:[#allocation3] sm:$0xff] %v820
    %s822 = scalar_lea.vmem [#allocation2], 32
    %v823 = vld [vmem:[%s822] sm:$0xff]
    %v824 = vld [vmem:[%s822 + $0x8] sm:$0xff]
    %v825 = vld [vmem:[%s822 + $0x10] sm:$0xff]
    %v826 = vld [vmem:[%s822 + $0x18] sm:$0xff]
    %v827 = vpack.c.bf16 %v820, %v820
    %v828 = vld [vmem:[#allocation6] sm:$0xff]
    %v829 = vld [vmem:[#allocation6 + $0x8] sm:$0xff]
    %v830 = vld [vmem:[#allocation6 + $0x10] sm:$0xff]
    %v831 = vld [vmem:[#allocation6 + $0x18] sm:$0xff]
    %v832 = vld [vmem:[#allocation6 + $0x20] sm:$0xff]
    %v833 = vld [vmem:[#allocation6 + $0x28] sm:$0xff]
    %v834 = vld [vmem:[#allocation6 + $0x30] sm:$0xff]
    %v835 = vld [vmem:[#allocation6 + $0x38] sm:$0xff]
    %v836 = vld [vmem:[#allocation6 + $0x40] sm:$0xff]
    %v837 = vld [vmem:[#allocation6 + $0x48] sm:$0xff]
    %v838 = vld [vmem:[#allocation6 + $0x50] sm:$0xff]
    %v839 = vld [vmem:[#allocation6 + $0x58] sm:$0xff]
    %v840 = vld [vmem:[#allocation6 + $0x60] sm:$0xff]
    %v841 = vld [vmem:[#allocation6 + $0x68] sm:$0xff]
    %v842 = vld [vmem:[#allocation6 + $0x70] sm:$0xff]
    %v843 = vld [vmem:[#allocation6 + $0x78] sm:$0xff]
    %v844 = vld [vmem:[#allocation6 + $0x80] sm:$0xff]
    %v845 = vld [vmem:[#allocation6 + $0x88] sm:$0xff]
    %v846 = vld [vmem:[#allocation6 + $0x90] sm:$0xff]
    %v847 = vld [vmem:[#allocation6 + $0x98] sm:$0xff]
    %v848 = vld [vmem:[#allocation6 + $0xa0] sm:$0xff]
    %v849 = vld [vmem:[#allocation6 + $0xa8] sm:$0xff]
    %v850 = vld [vmem:[#allocation6 + $0xb0] sm:$0xff]
    %v851 = vld [vmem:[#allocation6 + $0xb8] sm:$0xff]
    %v852 = vld [vmem:[#allocation6 + $0xc0] sm:$0xff]
    %v853 = vld [vmem:[#allocation6 + $0xc8] sm:$0xff]
    %v854 = vld [vmem:[#allocation6 + $0xd0] sm:$0xff]
    %v855 = vld [vmem:[#allocation6 + $0xd8] sm:$0xff]
    %v856 = vld [vmem:[#allocation6 + $0xe0] sm:$0xff]
    %v857 = vld [vmem:[#allocation6 + $0xe8] sm:$0xff]
    %v858 = vld [vmem:[#allocation6 + $0xf0] sm:$0xff]
    %v859 = vld [vmem:[#allocation6 + $0xf8] sm:$0xff]
    %v892 = vunpack.c.l.b16 %v828
    %v893 = vunpack.c.h.b16 %v828
    %v894 = vunpack.c.l.b16 %v829
    %v895 = vunpack.c.h.b16 %v829
    %v896 = vunpack.c.l.b16 %v830
    %v897 = vunpack.c.h.b16 %v830
    %v898 = vunpack.c.l.b16 %v831
    %v899 = vunpack.c.h.b16 %v831
    %v900 = vunpack.c.l.b16 %v832
    %v901 = vunpack.c.h.b16 %v832
    %v902 = vunpack.c.l.b16 %v833
    %v903 = vunpack.c.h.b16 %v833
    %v904 = vunpack.c.l.b16 %v834
    %v905 = vunpack.c.h.b16 %v834
    %v906 = vunpack.c.l.b16 %v835
    %v907 = vunpack.c.h.b16 %v835
    %v908 = vunpack.c.l.b16 %v836
    %v909 = vunpack.c.h.b16 %v836
    %v910 = vunpack.c.l.b16 %v837
    %v911 = vunpack.c.h.b16 %v837
    %v912 = vunpack.c.l.b16 %v838
    %v913 = vunpack.c.h.b16 %v838
    %v914 = vunpack.c.l.b16 %v839
    %v915 = vunpack.c.h.b16 %v839
    %v916 = vunpack.c.l.b16 %v840
    %v917 = vunpack.c.h.b16 %v840
    %v918 = vunpack.c.l.b16 %v841
    %v919 = vunpack.c.h.b16 %v841
    %v920 = vunpack.c.l.b16 %v842
    %v921 = vunpack.c.h.b16 %v842
    %v922 = vunpack.c.l.b16 %v843
    %v923 = vunpack.c.h.b16 %v843
    %v924 = vunpack.c.l.b16 %v844
    %v925 = vunpack.c.h.b16 %v844
    %v926 = vunpack.c.l.b16 %v845
    %v927 = vunpack.c.h.b16 %v845
    %v928 = vunpack.c.l.b16 %v846
    %v929 = vunpack.c.h.b16 %v846
    %v930 = vunpack.c.l.b16 %v847
    %v931 = vunpack.c.h.b16 %v847
    %v932 = vunpack.c.l.b16 %v848
    %v933 = vunpack.c.h.b16 %v848
    %v934 = vunpack.c.l.b16 %v849
    %v935 = vunpack.c.h.b16 %v849
    %v936 = vunpack.c.l.b16 %v850
    %v937 = vunpack.c.h.b16 %v850
    %v938 = vunpack.c.l.b16 %v851
    %v939 = vunpack.c.h.b16 %v851
    %v940 = vunpack.c.l.b16 %v852
    %v941 = vunpack.c.h.b16 %v852
    %v942 = vunpack.c.l.b16 %v853
    %v943 = vunpack.c.h.b16 %v853
    %v944 = vunpack.c.l.b16 %v854
    %v945 = vunpack.c.h.b16 %v854
    %v946 = vunpack.c.l.b16 %v855
    %v947 = vunpack.c.h.b16 %v855
    %v948 = vunpack.c.l.b16 %v856
    %v949 = vunpack.c.h.b16 %v856
    %v950 = vunpack.c.l.b16 %v857
    %v951 = vunpack.c.h.b16 %v857
    %v952 = vunpack.c.l.b16 %v858
    %v953 = vunpack.c.h.b16 %v858
    %v954 = vunpack.c.l.b16 %v859
    %v955 = vunpack.c.h.b16 %v859
    %v956 = vpack.c.b16 %v896, %v892
    %v957 = vpack.c.b16 %v897, %v893
    %v958 = vpack.c.b16 %v898, %v894
    %v959 = vpack.c.b16 %v899, %v895
    %v960 = vpack.c.b16 %v904, %v900
    %v961 = vpack.c.b16 %v905, %v901
    %v962 = vpack.c.b16 %v906, %v902
    %v963 = vpack.c.b16 %v907, %v903
    %v964 = vpack.c.b16 %v912, %v908
    %v965 = vpack.c.b16 %v913, %v909
    %v966 = vpack.c.b16 %v914, %v910
    %v967 = vpack.c.b16 %v915, %v911
    %v968 = vpack.c.b16 %v920, %v916
    %v969 = vpack.c.b16 %v921, %v917
    %v970 = vpack.c.b16 %v922, %v918
    %v971 = vpack.c.b16 %v923, %v919
    %v972 = vpack.c.b16 %v928, %v924
    %v973 = vpack.c.b16 %v929, %v925
    %v974 = vpack.c.b16 %v930, %v926
    %v975 = vpack.c.b16 %v931, %v927
    %v976 = vpack.c.b16 %v936, %v932
    %v977 = vpack.c.b16 %v937, %v933
    %v978 = vpack.c.b16 %v938, %v934
    %v979 = vpack.c.b16 %v939, %v935
    %v980 = vpack.c.b16 %v944, %v940
    %v981 = vpack.c.b16 %v945, %v941
    %v982 = vpack.c.b16 %v946, %v942
    %v983 = vpack.c.b16 %v947, %v943
    %v984 = vpack.c.b16 %v952, %v948
    %v985 = vpack.c.b16 %v953, %v949
    %v986 = vpack.c.b16 %v954, %v950
    %v987 = vpack.c.b16 %v955, %v951
    %1020 = vmatprep.subr.bf16.mxu0 %v957
    %1021 = vmatpush1.bf16.msra.mxu0 %v956
    %1022 = vmatprep.subr.bf16.mxu0 %v961
    %1023 = vmatpush1.bf16.msra.mxu0 %v960
    %1024 = vmatprep.subr.bf16.mxu0 %v965
    %1025 = vmatpush1.bf16.msra.mxu0 %v964
    %1026 = vmatprep.subr.bf16.mxu0 %v969
    %1027 = vmatpush1.bf16.msra.mxu0 %v968
    %1028 = vmatprep.subr.bf16.mxu0 %v973
    %1029 = vmatpush1.bf16.msra.mxu0 %v972
    %1030 = vmatprep.subr.bf16.mxu0 %v977
    %1031 = vmatpush1.bf16.msra.mxu0 %v976
    %1032 = vmatprep.subr.bf16.mxu0 %v981
    %1033 = vmatpush1.bf16.msra.mxu0 %v980
    %1034 = vmatprep.subr.bf16.mxu0 %v985
    %1035 = vmatpush1.bf16.msra.mxu0 %v984
    %1036 = vmatprep.subr.bf16.mxu0 0
    %1037 = vmatpush1.bf16.msra.mxu0 0
    %1038 = vmatprep.subr.bf16.mxu0 0
    %1039 = vmatpush1.bf16.msra.mxu0 0
    %1040 = vmatprep.subr.bf16.mxu0 0
    %1041 = vmatpush1.bf16.msra.mxu0 0
    %1042 = vmatprep.subr.bf16.mxu0 0
    %1043 = vmatpush1.bf16.msra.mxu0 0
    %1044 = vmatprep.subr.bf16.mxu0 0
    %1045 = vmatpush1.bf16.msra.mxu0 0
    %1046 = vmatprep.subr.bf16.mxu0 0
    %1047 = vmatpush1.bf16.msra.mxu0 0
    %1048 = vmatprep.subr.bf16.mxu0 0
    %1049 = vmatpush1.bf16.msra.mxu0 0
    %1050 = vmatprep.subr.bf16.mxu0 0
    %1051 = vmatpush1.bf16.msra.mxu0 0
    %1052 = vmatprep.mubr.bf16.mxu0 0
    %1053 = vmatmul.mubr.bf16.gmra.mrb[0].mxu0 %v827
    %v1054 = vpop.f32.mrb[0].mxu0
    %v1055 = vadd.f32 0.0, %v1054
    %v1056 = vpop.f32.mrb[0].mxu0
    %v1057 = vadd.f32 0.0, %v1056
    %v1058 = vpop.f32.mrb[0].mxu0
    %v1059 = vpop.f32.mrb[0].mxu0
    %1060 = vdwg.mxu0
    %1061 = vmatprep.subr.bf16.mxu0 %v959
    %1062 = vmatpush1.bf16.msra.mxu0 %v958
    %1063 = vmatprep.subr.bf16.mxu0 %v963
    %1064 = vmatpush1.bf16.msra.mxu0 %v962
    %1065 = vmatprep.subr.bf16.mxu0 %v967
    %1066 = vmatpush1.bf16.msra.mxu0 %v966
    %1067 = vmatprep.subr.bf16.mxu0 %v971
    %1068 = vmatpush1.bf16.msra.mxu0 %v970
    %1069 = vmatprep.subr.bf16.mxu0 %v975
    %1070 = vmatpush1.bf16.msra.mxu0 %v974
    %1071 = vmatprep.subr.bf16.mxu0 %v979
    %1072 = vmatpush1.bf16.msra.mxu0 %v978
    %1073 = vmatprep.subr.bf16.mxu0 %v983
    %1074 = vmatpush1.bf16.msra.mxu0 %v982
    %1075 = vmatprep.subr.bf16.mxu0 %v987
    %1076 = vmatpush1.bf16.msra.mxu0 %v986
    %1077 = vmatprep.subr.bf16.mxu0 0
    %1078 = vmatpush1.bf16.msra.mxu0 0
    %1079 = vmatprep.subr.bf16.mxu0 0
    %1080 = vmatpush1.bf16.msra.mxu0 0
    %1081 = vmatprep.subr.bf16.mxu0 0
    %1082 = vmatpush1.bf16.msra.mxu0 0
    %1083 = vmatprep.subr.bf16.mxu0 0
    %1084 = vmatpush1.bf16.msra.mxu0 0
    %1085 = vmatprep.subr.bf16.mxu0 0
    %1086 = vmatpush1.bf16.msra.mxu0 0
    %1087 = vmatprep.subr.bf16.mxu0 0
    %1088 = vmatpush1.bf16.msra.mxu0 0
    %1089 = vmatprep.subr.bf16.mxu0 0
    %1090 = vmatpush1.bf16.msra.mxu0 0
    %1091 = vmatprep.subr.bf16.mxu0 0
    %1092 = vmatpush1.bf16.msra.mxu0 0
    %1093 = vmatprep.mubr.bf16.mxu0 0
    %1094 = vmatmul.mubr.bf16.gmra.mrb[0].mxu0 %v827
    %v1095 = vpop.f32.mrb[0].mxu0
    %v1096 = vadd.f32 0.0, %v1095
    %v1097 = vpop.f32.mrb[0].mxu0
    %v1098 = vadd.f32 0.0, %v1097
    %v1099 = vpop.f32.mrb[0].mxu0
    %v1100 = vpop.f32.mrb[0].mxu0
    %1101 = vdwg.mxu0
    %v1102 = vadd.f32 %v823, %v1055
    %v1103 = vadd.f32 %v824, %v1057
    %v1104 = vadd.f32 %v825, %v1096
    %v1105 = vadd.f32 %v826, %v1098
    %v1106 = vmul.f32 %v1102, 0.5
    %v1107 = vtanh.pop %v1106
    %v1108 = vmul.f32 %v1107, 0.5
    %v1109 = vadd.f32 %v1108, 0.5
    %v1110 = vmul.f32 %v1103, 0.5
    %v1111 = vtanh.pop %v1110
    %v1112 = vmul.f32 %v1111, 0.5
    %v1113 = vadd.f32 %v1112, 0.5
    %v1114 = vtanh.pop %v1104
    %v1115 = vmul.f32 %v1105, 0.5
    %v1116 = vtanh.pop %v1115
    %v1117 = vmul.f32 %v1116, 0.5
    %v1118 = vadd.f32 %v1117, 0.5
    %v1119 = vmul.f32 %v1113, %v818
    %v1120 = vmul.f32 %v1109, %v1114
    %v1121 = vadd.f32 %v1119, %v1120
    %v1122 = vtanh.pop %v1121
    %v1123 = vmul.f32 %v1118, %v1122
    %s1124 = scalar_lea.vmem [#allocation3], 8
    %1125 = vst [vmem:[%s1124] sm:$0xff] %v1123
    %s1126 = scalar_lea.vmem [#allocation2], 64
    %v1127 = vld [vmem:[%s1126] sm:$0xff]
    %v1128 = vld [vmem:[%s1126 + $0x8] sm:$0xff]
    %v1129 = vld [vmem:[%s1126 + $0x10] sm:$0xff]
    %v1130 = vld [vmem:[%s1126 + $0x18] sm:$0xff]
    %v1131 = vpack.c.bf16 %v1123, %v1123
    %v1132 = vld [vmem:[#allocation6] sm:$0xff]
    %v1133 = vld [vmem:[#allocation6 + $0x8] sm:$0xff]
    %v1134 = vld [vmem:[#allocation6 + $0x10] sm:$0xff]
    %v1135 = vld [vmem:[#allocation6 + $0x18] sm:$0xff]
    %v1136 = vld [vmem:[#allocation6 + $0x20] sm:$0xff]
    %v1137 = vld [vmem:[#allocation6 + $0x28] sm:$0xff]
    %v1138 = vld [vmem:[#allocation6 + $0x30] sm:$0xff]
    %v1139 = vld [vmem:[#allocation6 + $0x38] sm:$0xff]
    %v1140 = vld [vmem:[#allocation6 + $0x40] sm:$0xff]
    %v1141 = vld [vmem:[#allocation6 + $0x48] sm:$0xff]
    %v1142 = vld [vmem:[#allocation6 + $0x50] sm:$0xff]
    %v1143 = vld [vmem:[#allocation6 + $0x58] sm:$0xff]
    %v1144 = vld [vmem:[#allocation6 + $0x60] sm:$0xff]
    %v1145 = vld [vmem:[#allocation6 + $0x68] sm:$0xff]
    %v1146 = vld [vmem:[#allocation6 + $0x70] sm:$0xff]
    %v1147 = vld [vmem:[#allocation6 + $0x78] sm:$0xff]
    %v1148 = vld [vmem:[#allocation6 + $0x80] sm:$0xff]
    %v1149 = vld [vmem:[#allocation6 + $0x88] sm:$0xff]
    %v1150 = vld [vmem:[#allocation6 + $0x90] sm:$0xff]
    %v1151 = vld [vmem:[#allocation6 + $0x98] sm:$0xff]
    %v1152 = vld [vmem:[#allocation6 + $0xa0] sm:$0xff]
    %v1153 = vld [vmem:[#allocation6 + $0xa8] sm:$0xff]
    %v1154 = vld [vmem:[#allocation6 + $0xb0] sm:$0xff]
    %v1155 = vld [vmem:[#allocation6 + $0xb8] sm:$0xff]
    %v1156 = vld [vmem:[#allocation6 + $0xc0] sm:$0xff]
    %v1157 = vld [vmem:[#allocation6 + $0xc8] sm:$0xff]
    %v1158 = vld [vmem:[#allocation6 + $0xd0] sm:$0xff]
    %v1159 = vld [vmem:[#allocation6 + $0xd8] sm:$0xff]
    %v1160 = vld [vmem:[#allocation6 + $0xe0] sm:$0xff]
    %v1161 = vld [vmem:[#allocation6 + $0xe8] sm:$0xff]
    %v1162 = vld [vmem:[#allocation6 + $0xf0] sm:$0xff]
    %v1163 = vld [vmem:[#allocation6 + $0xf8] sm:$0xff]
    %v1196 = vunpack.c.l.b16 %v1132
    %v1197 = vunpack.c.h.b16 %v1132
    %v1198 = vunpack.c.l.b16 %v1133
    %v1199 = vunpack.c.h.b16 %v1133
    %v1200 = vunpack.c.l.b16 %v1134
    %v1201 = vunpack.c.h.b16 %v1134
    %v1202 = vunpack.c.l.b16 %v1135
    %v1203 = vunpack.c.h.b16 %v1135
    %v1204 = vunpack.c.l.b16 %v1136
    %v1205 = vunpack.c.h.b16 %v1136
    %v1206 = vunpack.c.l.b16 %v1137
    %v1207 = vunpack.c.h.b16 %v1137
    %v1208 = vunpack.c.l.b16 %v1138
    %v1209 = vunpack.c.h.b16 %v1138
    %v1210 = vunpack.c.l.b16 %v1139
    %v1211 = vunpack.c.h.b16 %v1139
    %v1212 = vunpack.c.l.b16 %v1140
    %v1213 = vunpack.c.h.b16 %v1140
    %v1214 = vunpack.c.l.b16 %v1141
    %v1215 = vunpack.c.h.b16 %v1141
    %v1216 = vunpack.c.l.b16 %v1142
    %v1217 = vunpack.c.h.b16 %v1142
    %v1218 = vunpack.c.l.b16 %v1143
    %v1219 = vunpack.c.h.b16 %v1143
    %v1220 = vunpack.c.l.b16 %v1144
    %v1221 = vunpack.c.h.b16 %v1144
    %v1222 = vunpack.c.l.b16 %v1145
    %v1223 = vunpack.c.h.b16 %v1145
    %v1224 = vunpack.c.l.b16 %v1146
    %v1225 = vunpack.c.h.b16 %v1146
    %v1226 = vunpack.c.l.b16 %v1147
    %v1227 = vunpack.c.h.b16 %v1147
    %v1228 = vunpack.c.l.b16 %v1148
    %v1229 = vunpack.c.h.b16 %v1148
    %v1230 = vunpack.c.l.b16 %v1149
    %v1231 = vunpack.c.h.b16 %v1149
    %v1232 = vunpack.c.l.b16 %v1150
    %v1233 = vunpack.c.h.b16 %v1150
    %v1234 = vunpack.c.l.b16 %v1151
    %v1235 = vunpack.c.h.b16 %v1151
    %v1236 = vunpack.c.l.b16 %v1152
    %v1237 = vunpack.c.h.b16 %v1152
    %v1238 = vunpack.c.l.b16 %v1153
    %v1239 = vunpack.c.h.b16 %v1153
    %v1240 = vunpack.c.l.b16 %v1154
    %v1241 = vunpack.c.h.b16 %v1154
    %v1242 = vunpack.c.l.b16 %v1155
    %v1243 = vunpack.c.h.b16 %v1155
    %v1244 = vunpack.c.l.b16 %v1156
    %v1245 = vunpack.c.h.b16 %v1156
    %v1246 = vunpack.c.l.b16 %v1157
    %v1247 = vunpack.c.h.b16 %v1157
    %v1248 = vunpack.c.l.b16 %v1158
    %v1249 = vunpack.c.h.b16 %v1158
    %v1250 = vunpack.c.l.b16 %v1159
    %v1251 = vunpack.c.h.b16 %v1159
    %v1252 = vunpack.c.l.b16 %v1160
    %v1253 = vunpack.c.h.b16 %v1160
    %v1254 = vunpack.c.l.b16 %v1161
    %v1255 = vunpack.c.h.b16 %v1161
    %v1256 = vunpack.c.l.b16 %v1162
    %v1257 = vunpack.c.h.b16 %v1162
    %v1258 = vunpack.c.l.b16 %v1163
    %v1259 = vunpack.c.h.b16 %v1163
    %v1260 = vpack.c.b16 %v1200, %v1196
    %v1261 = vpack.c.b16 %v1201, %v1197
    %v1262 = vpack.c.b16 %v1202, %v1198
    %v1263 = vpack.c.b16 %v1203, %v1199
    %v1264 = vpack.c.b16 %v1208, %v1204
    %v1265 = vpack.c.b16 %v1209, %v1205
    %v1266 = vpack.c.b16 %v1210, %v1206
    %v1267 = vpack.c.b16 %v1211, %v1207
    %v1268 = vpack.c.b16 %v1216, %v1212
    %v1269 = vpack.c.b16 %v1217, %v1213
    %v1270 = vpack.c.b16 %v1218, %v1214
    %v1271 = vpack.c.b16 %v1219, %v1215
    %v1272 = vpack.c.b16 %v1224, %v1220
    %v1273 = vpack.c.b16 %v1225, %v1221
    %v1274 = vpack.c.b16 %v1226, %v1222
    %v1275 = vpack.c.b16 %v1227, %v1223
    %v1276 = vpack.c.b16 %v1232, %v1228
    %v1277 = vpack.c.b16 %v1233, %v1229
    %v1278 = vpack.c.b16 %v1234, %v1230
    %v1279 = vpack.c.b16 %v1235, %v1231
    %v1280 = vpack.c.b16 %v1240, %v1236
    %v1281 = vpack.c.b16 %v1241, %v1237
    %v1282 = vpack.c.b16 %v1242, %v1238
    %v1283 = vpack.c.b16 %v1243, %v1239
    %v1284 = vpack.c.b16 %v1248, %v1244
    %v1285 = vpack.c.b16 %v1249, %v1245
    %v1286 = vpack.c.b16 %v1250, %v1246
    %v1287 = vpack.c.b16 %v1251, %v1247
    %v1288 = vpack.c.b16 %v1256, %v1252
    %v1289 = vpack.c.b16 %v1257, %v1253
    %v1290 = vpack.c.b16 %v1258, %v1254
    %v1291 = vpack.c.b16 %v1259, %v1255
    %1324 = vmatprep.subr.bf16.mxu0 %v1261
    %1325 = vmatpush1.bf16.msra.mxu0 %v1260
    %1326 = vmatprep.subr.bf16.mxu0 %v1265
    %1327 = vmatpush1.bf16.msra.mxu0 %v1264
    %1328 = vmatprep.subr.bf16.mxu0 %v1269
    %1329 = vmatpush1.bf16.msra.mxu0 %v1268
    %1330 = vmatprep.subr.bf16.mxu0 %v1273
    %1331 = vmatpush1.bf16.msra.mxu0 %v1272
    %1332 = vmatprep.subr.bf16.mxu0 %v1277
    %1333 = vmatpush1.bf16.msra.mxu0 %v1276
    %1334 = vmatprep.subr.bf16.mxu0 %v1281
    %1335 = vmatpush1.bf16.msra.mxu0 %v1280
    %1336 = vmatprep.subr.bf16.mxu0 %v1285
    %1337 = vmatpush1.bf16.msra.mxu0 %v1284
    %1338 = vmatprep.subr.bf16.mxu0 %v1289
    %1339 = vmatpush1.bf16.msra.mxu0 %v1288
    %1340 = vmatprep.subr.bf16.mxu0 0
    %1341 = vmatpush1.bf16.msra.mxu0 0
    %1342 = vmatprep.subr.bf16.mxu0 0
    %1343 = vmatpush1.bf16.msra.mxu0 0
    %1344 = vmatprep.subr.bf16.mxu0 0
    %1345 = vmatpush1.bf16.msra.mxu0 0
    %1346 = vmatprep.subr.bf16.mxu0 0
    %1347 = vmatpush1.bf16.msra.mxu0 0
    %1348 = vmatprep.subr.bf16.mxu0 0
    %1349 = vmatpush1.bf16.msra.mxu0 0
    %1350 = vmatprep.subr.bf16.mxu0 0
    %1351 = vmatpush1.bf16.msra.mxu0 0
    %1352 = vmatprep.subr.bf16.mxu0 0
    %1353 = vmatpush1.bf16.msra.mxu0 0
    %1354 = vmatprep.subr.bf16.mxu0 0
    %1355 = vmatpush1.bf16.msra.mxu0 0
    %1356 = vmatprep.mubr.bf16.mxu0 0
    %1357 = vmatmul.mubr.bf16.gmra.mrb[0].mxu0 %v1131
    %v1358 = vpop.f32.mrb[0].mxu0
    %v1359 = vadd.f32 0.0, %v1358
    %v1360 = vpop.f32.mrb[0].mxu0
    %v1361 = vadd.f32 0.0, %v1360
    %v1362 = vpop.f32.mrb[0].mxu0
    %v1363 = vpop.f32.mrb[0].mxu0
    %1364 = vdwg.mxu0
    %1365 = vmatprep.subr.bf16.mxu0 %v1263
    %1366 = vmatpush1.bf16.msra.mxu0 %v1262
    %1367 = vmatprep.subr.bf16.mxu0 %v1267
    %1368 = vmatpush1.bf16.msra.mxu0 %v1266
    %1369 = vmatprep.subr.bf16.mxu0 %v1271
    %1370 = vmatpush1.bf16.msra.mxu0 %v1270
    %1371 = vmatprep.subr.bf16.mxu0 %v1275
    %1372 = vmatpush1.bf16.msra.mxu0 %v1274
    %1373 = vmatprep.subr.bf16.mxu0 %v1279
    %1374 = vmatpush1.bf16.msra.mxu0 %v1278
    %1375 = vmatprep.subr.bf16.mxu0 %v1283
    %1376 = vmatpush1.bf16.msra.mxu0 %v1282
    %1377 = vmatprep.subr.bf16.mxu0 %v1287
    %1378 = vmatpush1.bf16.msra.mxu0 %v1286
    %1379 = vmatprep.subr.bf16.mxu0 %v1291
    %1380 = vmatpush1.bf16.msra.mxu0 %v1290
    %1381 = vmatprep.subr.bf16.mxu0 0
    %1382 = vmatpush1.bf16.msra.mxu0 0
    %1383 = vmatprep.subr.bf16.mxu0 0
    %1384 = vmatpush1.bf16.msra.mxu0 0
    %1385 = vmatprep.subr.bf16.mxu0 0
    %1386 = vmatpush1.bf16.msra.mxu0 0
    %1387 = vmatprep.subr.bf16.mxu0 0
    %1388 = vmatpush1.bf16.msra.mxu0 0
    %1389 = vmatprep.subr.bf16.mxu0 0
    %1390 = vmatpush1.bf16.msra.mxu0 0
    %1391 = vmatprep.subr.bf16.mxu0 0
    %1392 = vmatpush1.bf16.msra.mxu0 0
    %1393 = vmatprep.subr.bf16.mxu0 0
    %1394 = vmatpush1.bf16.msra.mxu0 0
    %1395 = vmatprep.subr.bf16.mxu0 0
    %1396 = vmatpush1.bf16.msra.mxu0 0
    %1397 = vmatprep.mubr.bf16.mxu0 0
    %1398 = vmatmul.mubr.bf16.gmra.mrb[0].mxu0 %v1131
    %v1399 = vpop.f32.mrb[0].mxu0
    %v1400 = vadd.f32 0.0, %v1399
    %v1401 = vpop.f32.mrb[0].mxu0
    %v1402 = vadd.f32 0.0, %v1401
    %v1403 = vpop.f32.mrb[0].mxu0
    %v1404 = vpop.f32.mrb[0].mxu0
    %1405 = vdwg.mxu0
    %v1406 = vadd.f32 %v1127, %v1359
    %v1407 = vadd.f32 %v1128, %v1361
    %v1408 = vadd.f32 %v1129, %v1400
    %v1409 = vadd.f32 %v1130, %v1402
    %v1410 = vmul.f32 %v1406, 0.5
    %v1411 = vtanh.pop %v1410
    %v1412 = vmul.f32 %v1411, 0.5
    %v1413 = vadd.f32 %v1412, 0.5
    %v1414 = vmul.f32 %v1407, 0.5
    %v1415 = vtanh.pop %v1414
    %v1416 = vmul.f32 %v1415, 0.5
    %v1417 = vadd.f32 %v1416, 0.5
    %v1418 = vtanh.pop %v1408
    %v1419 = vmul.f32 %v1409, 0.5
    %v1420 = vtanh.pop %v1419
    %v1421 = vmul.f32 %v1420, 0.5
    %v1422 = vadd.f32 %v1421, 0.5
    %v1423 = vmul.f32 %v1417, %v1121
    %v1424 = vmul.f32 %v1413, %v1418
    %v1425 = vadd.f32 %v1423, %v1424
    %v1426 = vtanh.pop %v1425
    %v1427 = vmul.f32 %v1422, %v1426
    %s1428 = scalar_lea.vmem [#allocation3], 16
    %1429 = vst [vmem:[%s1428] sm:$0xff] %v1427
    %s1430 = scalar_lea.vmem [#allocation2], 96
    %v1431 = vld [vmem:[%s1430] sm:$0xff]
    %v1432 = vld [vmem:[%s1430 + $0x8] sm:$0xff]
    %v1433 = vld [vmem:[%s1430 + $0x10] sm:$0xff]
    %v1434 = vld [vmem:[%s1430 + $0x18] sm:$0xff]
    %v1435 = vpack.c.bf16 %v1427, %v1427
    %v1436 = vld [vmem:[#allocation6] sm:$0xff]
    %v1437 = vld [vmem:[#allocation6 + $0x8] sm:$0xff]
    %v1438 = vld [vmem:[#allocation6 + $0x10] sm:$0xff]
    %v1439 = vld [vmem:[#allocation6 + $0x18] sm:$0xff]
    %v1440 = vld [vmem:[#allocation6 + $0x20] sm:$0xff]
    %v1441 = vld [vmem:[#allocation6 + $0x28] sm:$0xff]
    %v1442 = vld [vmem:[#allocation6 + $0x30] sm:$0xff]
    %v1443 = vld [vmem:[#allocation6 + $0x38] sm:$0xff]
    %v1444 = vld [vmem:[#allocation6 + $0x40] sm:$0xff]
    %v1445 = vld [vmem:[#allocation6 + $0x48] sm:$0xff]
    %v1446 = vld [vmem:[#allocation6 + $0x50] sm:$0xff]
    %v1447 = vld [vmem:[#allocation6 + $0x58] sm:$0xff]
    %v1448 = vld [vmem:[#allocation6 + $0x60] sm:$0xff]
    %v1449 = vld [vmem:[#allocation6 + $0x68] sm:$0xff]
    %v1450 = vld [vmem:[#allocation6 + $0x70] sm:$0xff]
    %v1451 = vld [vmem:[#allocation6 + $0x78] sm:$0xff]
    %v1452 = vld [vmem:[#allocation6 + $0x80] sm:$0xff]
    %v1453 = vld [vmem:[#allocation6 + $0x88] sm:$0xff]
    %v1454 = vld [vmem:[#allocation6 + $0x90] sm:$0xff]
    %v1455 = vld [vmem:[#allocation6 + $0x98] sm:$0xff]
    %v1456 = vld [vmem:[#allocation6 + $0xa0] sm:$0xff]
    %v1457 = vld [vmem:[#allocation6 + $0xa8] sm:$0xff]
    %v1458 = vld [vmem:[#allocation6 + $0xb0] sm:$0xff]
    %v1459 = vld [vmem:[#allocation6 + $0xb8] sm:$0xff]
    %v1460 = vld [vmem:[#allocation6 + $0xc0] sm:$0xff]
    %v1461 = vld [vmem:[#allocation6 + $0xc8] sm:$0xff]
    %v1462 = vld [vmem:[#allocation6 + $0xd0] sm:$0xff]
    %v1463 = vld [vmem:[#allocation6 + $0xd8] sm:$0xff]
    %v1464 = vld [vmem:[#allocation6 + $0xe0] sm:$0xff]
    %v1465 = vld [vmem:[#allocation6 + $0xe8] sm:$0xff]
    %v1466 = vld [vmem:[#allocation6 + $0xf0] sm:$0xff]
    %v1467 = vld [vmem:[#allocation6 + $0xf8] sm:$0xff]
    %v1500 = vunpack.c.l.b16 %v1436
    %v1501 = vunpack.c.h.b16 %v1436
    %v1502 = vunpack.c.l.b16 %v1437
    %v1503 = vunpack.c.h.b16 %v1437
    %v1504 = vunpack.c.l.b16 %v1438
    %v1505 = vunpack.c.h.b16 %v1438
    %v1506 = vunpack.c.l.b16 %v1439
    %v1507 = vunpack.c.h.b16 %v1439
    %v1508 = vunpack.c.l.b16 %v1440
    %v1509 = vunpack.c.h.b16 %v1440
    %v1510 = vunpack.c.l.b16 %v1441
    %v1511 = vunpack.c.h.b16 %v1441
    %v1512 = vunpack.c.l.b16 %v1442
    %v1513 = vunpack.c.h.b16 %v1442
    %v1514 = vunpack.c.l.b16 %v1443
    %v1515 = vunpack.c.h.b16 %v1443
    %v1516 = vunpack.c.l.b16 %v1444
    %v1517 = vunpack.c.h.b16 %v1444
    %v1518 = vunpack.c.l.b16 %v1445
    %v1519 = vunpack.c.h.b16 %v1445
    %v1520 = vunpack.c.l.b16 %v1446
    %v1521 = vunpack.c.h.b16 %v1446
    %v1522 = vunpack.c.l.b16 %v1447
    %v1523 = vunpack.c.h.b16 %v1447
    %v1524 = vunpack.c.l.b16 %v1448
    %v1525 = vunpack.c.h.b16 %v1448
    %v1526 = vunpack.c.l.b16 %v1449
    %v1527 = vunpack.c.h.b16 %v1449
    %v1528 = vunpack.c.l.b16 %v1450
    %v1529 = vunpack.c.h.b16 %v1450
    %v1530 = vunpack.c.l.b16 %v1451
    %v1531 = vunpack.c.h.b16 %v1451
    %v1532 = vunpack.c.l.b16 %v1452
    %v1533 = vunpack.c.h.b16 %v1452
    %v1534 = vunpack.c.l.b16 %v1453
    %v1535 = vunpack.c.h.b16 %v1453
    %v1536 = vunpack.c.l.b16 %v1454
    %v1537 = vunpack.c.h.b16 %v1454
    %v1538 = vunpack.c.l.b16 %v1455
    %v1539 = vunpack.c.h.b16 %v1455
    %v1540 = vunpack.c.l.b16 %v1456
    %v1541 = vunpack.c.h.b16 %v1456
    %v1542 = vunpack.c.l.b16 %v1457
    %v1543 = vunpack.c.h.b16 %v1457
    %v1544 = vunpack.c.l.b16 %v1458
    %v1545 = vunpack.c.h.b16 %v1458
    %v1546 = vunpack.c.l.b16 %v1459
    %v1547 = vunpack.c.h.b16 %v1459
    %v1548 = vunpack.c.l.b16 %v1460
    %v1549 = vunpack.c.h.b16 %v1460
    %v1550 = vunpack.c.l.b16 %v1461
    %v1551 = vunpack.c.h.b16 %v1461
    %v1552 = vunpack.c.l.b16 %v1462
    %v1553 = vunpack.c.h.b16 %v1462
    %v1554 = vunpack.c.l.b16 %v1463
    %v1555 = vunpack.c.h.b16 %v1463
    %v1556 = vunpack.c.l.b16 %v1464
    %v1557 = vunpack.c.h.b16 %v1464
    %v1558 = vunpack.c.l.b16 %v1465
    %v1559 = vunpack.c.h.b16 %v1465
    %v1560 = vunpack.c.l.b16 %v1466
    %v1561 = vunpack.c.h.b16 %v1466
    %v1562 = vunpack.c.l.b16 %v1467
    %v1563 = vunpack.c.h.b16 %v1467
    %v1564 = vpack.c.b16 %v1504, %v1500
    %v1565 = vpack.c.b16 %v1505, %v1501
    %v1566 = vpack.c.b16 %v1506, %v1502
    %v1567 = vpack.c.b16 %v1507, %v1503
    %v1568 = vpack.c.b16 %v1512, %v1508
    %v1569 = vpack.c.b16 %v1513, %v1509
    %v1570 = vpack.c.b16 %v1514, %v1510
    %v1571 = vpack.c.b16 %v1515, %v1511
    %v1572 = vpack.c.b16 %v1520, %v1516
    %v1573 = vpack.c.b16 %v1521, %v1517
    %v1574 = vpack.c.b16 %v1522, %v1518
    %v1575 = vpack.c.b16 %v1523, %v1519
    %v1576 = vpack.c.b16 %v1528, %v1524
    %v1577 = vpack.c.b16 %v1529, %v1525
    %v1578 = vpack.c.b16 %v1530, %v1526
    %v1579 = vpack.c.b16 %v1531, %v1527
    %v1580 = vpack.c.b16 %v1536, %v1532
    %v1581 = vpack.c.b16 %v1537, %v1533
    %v1582 = vpack.c.b16 %v1538, %v1534
    %v1583 = vpack.c.b16 %v1539, %v1535
    %v1584 = vpack.c.b16 %v1544, %v1540
    %v1585 = vpack.c.b16 %v1545, %v1541
    %v1586 = vpack.c.b16 %v1546, %v1542
    %v1587 = vpack.c.b16 %v1547, %v1543
    %v1588 = vpack.c.b16 %v1552, %v1548
    %v1589 = vpack.c.b16 %v1553, %v1549
    %v1590 = vpack.c.b16 %v1554, %v1550
    %v1591 = vpack.c.b16 %v1555, %v1551
    %v1592 = vpack.c.b16 %v1560, %v1556
    %v1593 = vpack.c.b16 %v1561, %v1557
    %v1594 = vpack.c.b16 %v1562, %v1558
    %v1595 = vpack.c.b16 %v1563, %v1559
    %1628 = vmatprep.subr.bf16.mxu0 %v1565
    %1629 = vmatpush1.bf16.msra.mxu0 %v1564
    %1630 = vmatprep.subr.bf16.mxu0 %v1569
    %1631 = vmatpush1.bf16.msra.mxu0 %v1568
    %1632 = vmatprep.subr.bf16.mxu0 %v1573
    %1633 = vmatpush1.bf16.msra.mxu0 %v1572
    %1634 = vmatprep.subr.bf16.mxu0 %v1577
    %1635 = vmatpush1.bf16.msra.mxu0 %v1576
    %1636 = vmatprep.subr.bf16.mxu0 %v1581
    %1637 = vmatpush1.bf16.msra.mxu0 %v1580
    %1638 = vmatprep.subr.bf16.mxu0 %v1585
    %1639 = vmatpush1.bf16.msra.mxu0 %v1584
    %1640 = vmatprep.subr.bf16.mxu0 %v1589
    %1641 = vmatpush1.bf16.msra.mxu0 %v1588
    %1642 = vmatprep.subr.bf16.mxu0 %v1593
    %1643 = vmatpush1.bf16.msra.mxu0 %v1592
    %1644 = vmatprep.subr.bf16.mxu0 0
    %1645 = vmatpush1.bf16.msra.mxu0 0
    %1646 = vmatprep.subr.bf16.mxu0 0
    %1647 = vmatpush1.bf16.msra.mxu0 0
    %1648 = vmatprep.subr.bf16.mxu0 0
    %1649 = vmatpush1.bf16.msra.mxu0 0
    %1650 = vmatprep.subr.bf16.mxu0 0
    %1651 = vmatpush1.bf16.msra.mxu0 0
    %1652 = vmatprep.subr.bf16.mxu0 0
    %1653 = vmatpush1.bf16.msra.mxu0 0
    %1654 = vmatprep.subr.bf16.mxu0 0
    %1655 = vmatpush1.bf16.msra.mxu0 0
    %1656 = vmatprep.subr.bf16.mxu0 0
    %1657 = vmatpush1.bf16.msra.mxu0 0
    %1658 = vmatprep.subr.bf16.mxu0 0
    %1659 = vmatpush1.bf16.msra.mxu0 0
    %1660 = vmatprep.mubr.bf16.mxu0 0
    %1661 = vmatmul.mubr.bf16.gmra.mrb[0].mxu0 %v1435
    %v1662 = vpop.f32.mrb[0].mxu0
    %v1663 = vadd.f32 0.0, %v1662
    %v1664 = vpop.f32.mrb[0].mxu0
    %v1665 = vadd.f32 0.0, %v1664
    %v1666 = vpop.f32.mrb[0].mxu0
    %v1667 = vpop.f32.mrb[0].mxu0
    %1668 = vdwg.mxu0
    %1669 = vmatprep.subr.bf16.mxu0 %v1567
    %1670 = vmatpush1.bf16.msra.mxu0 %v1566
    %1671 = vmatprep.subr.bf16.mxu0 %v1571
    %1672 = vmatpush1.bf16.msra.mxu0 %v1570
    %1673 = vmatprep.subr.bf16.mxu0 %v1575
    %1674 = vmatpush1.bf16.msra.mxu0 %v1574
    %1675 = vmatprep.subr.bf16.mxu0 %v1579
    %1676 = vmatpush1.bf16.msra.mxu0 %v1578
    %1677 = vmatprep.subr.bf16.mxu0 %v1583
    %1678 = vmatpush1.bf16.msra.mxu0 %v1582
    %1679 = vmatprep.subr.bf16.mxu0 %v1587
    %1680 = vmatpush1.bf16.msra.mxu0 %v1586
    %1681 = vmatprep.subr.bf16.mxu0 %v1591
    %1682 = vmatpush1.bf16.msra.mxu0 %v1590
    %1683 = vmatprep.subr.bf16.mxu0 %v1595
    %1684 = vmatpush1.bf16.msra.mxu0 %v1594
    %1685 = vmatprep.subr.bf16.mxu0 0
    %1686 = vmatpush1.bf16.msra.mxu0 0
    %1687 = vmatprep.subr.bf16.mxu0 0
    %1688 = vmatpush1.bf16.msra.mxu0 0
    %1689 = vmatprep.subr.bf16.mxu0 0
    %1690 = vmatpush1.bf16.msra.mxu0 0
    %1691 = vmatprep.subr.bf16.mxu0 0
    %1692 = vmatpush1.bf16.msra.mxu0 0
    %1693 = vmatprep.subr.bf16.mxu0 0
    %1694 = vmatpush1.bf16.msra.mxu0 0
    %1695 = vmatprep.subr.bf16.mxu0 0
    %1696 = vmatpush1.bf16.msra.mxu0 0
    %1697 = vmatprep.subr.bf16.mxu0 0
    %1698 = vmatpush1.bf16.msra.mxu0 0
    %1699 = vmatprep.subr.bf16.mxu0 0
    %1700 = vmatpush1.bf16.msra.mxu0 0
    %1701 = vmatprep.mubr.bf16.mxu0 0
    %1702 = vmatmul.mubr.bf16.gmra.mrb[0].mxu0 %v1435
    %v1703 = vpop.f32.mrb[0].mxu0
    %v1704 = vadd.f32 0.0, %v1703
    %v1705 = vpop.f32.mrb[0].mxu0
    %v1706 = vadd.f32 0.0, %v1705
    %v1707 = vpop.f32.mrb[0].mxu0
    %v1708 = vpop.f32.mrb[0].mxu0
    %1709 = vdwg.mxu0
    %v1710 = vadd.f32 %v1431, %v1663
    %v1711 = vadd.f32 %v1432, %v1665
    %v1712 = vadd.f32 %v1433, %v1704
    %v1713 = vadd.f32 %v1434, %v1706
    %v1714 = vmul.f32 %v1710, 0.5
    %v1715 = vtanh.pop %v1714
    %v1716 = vmul.f32 %v1715, 0.5
    %v1717 = vadd.f32 %v1716, 0.5
    %v1718 = vmul.f32 %v1711, 0.5
    %v1719 = vtanh.pop %v1718
    %v1720 = vmul.f32 %v1719, 0.5
    %v1721 = vadd.f32 %v1720, 0.5
    %v1722 = vtanh.pop %v1712
    %v1723 = vmul.f32 %v1713, 0.5
    %v1724 = vtanh.pop %v1723
    %v1725 = vmul.f32 %v1724, 0.5
    %v1726 = vadd.f32 %v1725, 0.5
    %v1727 = vmul.f32 %v1721, %v1425
    %v1728 = vmul.f32 %v1717, %v1722
    %v1729 = vadd.f32 %v1727, %v1728
    %v1730 = vtanh.pop %v1729
    %v1731 = vmul.f32 %v1726, %v1730
    %s1732 = scalar_lea.vmem [#allocation3], 24
    %1733 = vst [vmem:[%s1732] sm:$0xff] %v1731
    %s1734 = scalar_lea.vmem [#allocation2], 128
    %v1735 = vld [vmem:[%s1734] sm:$0xff]
    %v1736 = vld [vmem:[%s1734 + $0x8] sm:$0xff]
    %v1737 = vld [vmem:[%s1734 + $0x10] sm:$0xff]
    %v1738 = vld [vmem:[%s1734 + $0x18] sm:$0xff]
    %v1739 = vpack.c.bf16 %v1731, %v1731
    %v1740 = vld [vmem:[#allocation6] sm:$0xff]
    %v1741 = vld [vmem:[#allocation6 + $0x8] sm:$0xff]
    %v1742 = vld [vmem:[#allocation6 + $0x10] sm:$0xff]
    %v1743 = vld [vmem:[#allocation6 + $0x18] sm:$0xff]
    %v1744 = vld [vmem:[#allocation6 + $0x20] sm:$0xff]
    %v1745 = vld [vmem:[#allocation6 + $0x28] sm:$0xff]
    %v1746 = vld [vmem:[#allocation6 + $0x30] sm:$0xff]
    %v1747 = vld [vmem:[#allocation6 + $0x38] sm:$0xff]
    %v1748 = vld [vmem:[#allocation6 + $0x40] sm:$0xff]
    %v1749 = vld [vmem:[#allocation6 + $0x48] sm:$0xff]
    %v1750 = vld [vmem:[#allocation6 + $0x50] sm:$0xff]
    %v1751 = vld [vmem:[#allocation6 + $0x58] sm:$0xff]
    %v1752 = vld [vmem:[#allocation6 + $0x60] sm:$0xff]
    %v1753 = vld [vmem:[#allocation6 + $0x68] sm:$0xff]
    %v1754 = vld [vmem:[#allocation6 + $0x70] sm:$0xff]
    %v1755 = vld [vmem:[#allocation6 + $0x78] sm:$0xff]
    %v1756 = vld [vmem:[#allocation6 + $0x80] sm:$0xff]
    %v1757 = vld [vmem:[#allocation6 + $0x88] sm:$0xff]
    %v1758 = vld [vmem:[#allocation6 + $0x90] sm:$0xff]
    %v1759 = vld [vmem:[#allocation6 + $0x98] sm:$0xff]
    %v1760 = vld [vmem:[#allocation6 + $0xa0] sm:$0xff]
    %v1761 = vld [vmem:[#allocation6 + $0xa8] sm:$0xff]
    %v1762 = vld [vmem:[#allocation6 + $0xb0] sm:$0xff]
    %v1763 = vld [vmem:[#allocation6 + $0xb8] sm:$0xff]
    %v1764 = vld [vmem:[#allocation6 + $0xc0] sm:$0xff]
    %v1765 = vld [vmem:[#allocation6 + $0xc8] sm:$0xff]
    %v1766 = vld [vmem:[#allocation6 + $0xd0] sm:$0xff]
    %v1767 = vld [vmem:[#allocation6 + $0xd8] sm:$0xff]
    %v1768 = vld [vmem:[#allocation6 + $0xe0] sm:$0xff]
    %v1769 = vld [vmem:[#allocation6 + $0xe8] sm:$0xff]
    %v1770 = vld [vmem:[#allocation6 + $0xf0] sm:$0xff]
    %v1771 = vld [vmem:[#allocation6 + $0xf8] sm:$0xff]
    %v1804 = vunpack.c.l.b16 %v1740
    %v1805 = vunpack.c.h.b16 %v1740
    %v1806 = vunpack.c.l.b16 %v1741
    %v1807 = vunpack.c.h.b16 %v1741
    %v1808 = vunpack.c.l.b16 %v1742
    %v1809 = vunpack.c.h.b16 %v1742
    %v1810 = vunpack.c.l.b16 %v1743
    %v1811 = vunpack.c.h.b16 %v1743
    %v1812 = vunpack.c.l.b16 %v1744
    %v1813 = vunpack.c.h.b16 %v1744
    %v1814 = vunpack.c.l.b16 %v1745
    %v1815 = vunpack.c.h.b16 %v1745
    %v1816 = vunpack.c.l.b16 %v1746
    %v1817 = vunpack.c.h.b16 %v1746
    %v1818 = vunpack.c.l.b16 %v1747
    %v1819 = vunpack.c.h.b16 %v1747
    %v1820 = vunpack.c.l.b16 %v1748
    %v1821 = vunpack.c.h.b16 %v1748
    %v1822 = vunpack.c.l.b16 %v1749
    %v1823 = vunpack.c.h.b16 %v1749
    %v1824 = vunpack.c.l.b16 %v1750
    %v1825 = vunpack.c.h.b16 %v1750
    %v1826 = vunpack.c.l.b16 %v1751
    %v1827 = vunpack.c.h.b16 %v1751
    %v1828 = vunpack.c.l.b16 %v1752
    %v1829 = vunpack.c.h.b16 %v1752
    %v1830 = vunpack.c.l.b16 %v1753
    %v1831 = vunpack.c.h.b16 %v1753
    %v1832 = vunpack.c.l.b16 %v1754
    %v1833 = vunpack.c.h.b16 %v1754
    %v1834 = vunpack.c.l.b16 %v1755
    %v1835 = vunpack.c.h.b16 %v1755
    %v1836 = vunpack.c.l.b16 %v1756
    %v1837 = vunpack.c.h.b16 %v1756
    %v1838 = vunpack.c.l.b16 %v1757
    %v1839 = vunpack.c.h.b16 %v1757
    %v1840 = vunpack.c.l.b16 %v1758
    %v1841 = vunpack.c.h.b16 %v1758
    %v1842 = vunpack.c.l.b16 %v1759
    %v1843 = vunpack.c.h.b16 %v1759
    %v1844 = vunpack.c.l.b16 %v1760
    %v1845 = vunpack.c.h.b16 %v1760
    %v1846 = vunpack.c.l.b16 %v1761
    %v1847 = vunpack.c.h.b16 %v1761
    %v1848 = vunpack.c.l.b16 %v1762
    %v1849 = vunpack.c.h.b16 %v1762
    %v1850 = vunpack.c.l.b16 %v1763
    %v1851 = vunpack.c.h.b16 %v1763
    %v1852 = vunpack.c.l.b16 %v1764
    %v1853 = vunpack.c.h.b16 %v1764
    %v1854 = vunpack.c.l.b16 %v1765
    %v1855 = vunpack.c.h.b16 %v1765
    %v1856 = vunpack.c.l.b16 %v1766
    %v1857 = vunpack.c.h.b16 %v1766
    %v1858 = vunpack.c.l.b16 %v1767
    %v1859 = vunpack.c.h.b16 %v1767
    %v1860 = vunpack.c.l.b16 %v1768
    %v1861 = vunpack.c.h.b16 %v1768
    %v1862 = vunpack.c.l.b16 %v1769
    %v1863 = vunpack.c.h.b16 %v1769
    %v1864 = vunpack.c.l.b16 %v1770
    %v1865 = vunpack.c.h.b16 %v1770
    %v1866 = vunpack.c.l.b16 %v1771
    %v1867 = vunpack.c.h.b16 %v1771
    %v1868 = vpack.c.b16 %v1808, %v1804
    %v1869 = vpack.c.b16 %v1809, %v1805
    %v1870 = vpack.c.b16 %v1810, %v1806
    %v1871 = vpack.c.b16 %v1811, %v1807
    %v1872 = vpack.c.b16 %v1816, %v1812
    %v1873 = vpack.c.b16 %v1817, %v1813
    %v1874 = vpack.c.b16 %v1818, %v1814
    %v1875 = vpack.c.b16 %v1819, %v1815
    %v1876 = vpack.c.b16 %v1824, %v1820
    %v1877 = vpack.c.b16 %v1825, %v1821
    %v1878 = vpack.c.b16 %v1826, %v1822
    %v1879 = vpack.c.b16 %v1827, %v1823
    %v1880 = vpack.c.b16 %v1832, %v1828
    %v1881 = vpack.c.b16 %v1833, %v1829
    %v1882 = vpack.c.b16 %v1834, %v1830
    %v1883 = vpack.c.b16 %v1835, %v1831
    %v1884 = vpack.c.b16 %v1840, %v1836
    %v1885 = vpack.c.b16 %v1841, %v1837
    %v1886 = vpack.c.b16 %v1842, %v1838
    %v1887 = vpack.c.b16 %v1843, %v1839
    %v1888 = vpack.c.b16 %v1848, %v1844
    %v1889 = vpack.c.b16 %v1849, %v1845
    %v1890 = vpack.c.b16 %v1850, %v1846
    %v1891 = vpack.c.b16 %v1851, %v1847
    %v1892 = vpack.c.b16 %v1856, %v1852
    %v1893 = vpack.c.b16 %v1857, %v1853
    %v1894 = vpack.c.b16 %v1858, %v1854
    %v1895 = vpack.c.b16 %v1859, %v1855
    %v1896 = vpack.c.b16 %v1864, %v1860
    %v1897 = vpack.c.b16 %v1865, %v1861
    %v1898 = vpack.c.b16 %v1866, %v1862
    %v1899 = vpack.c.b16 %v1867, %v1863
    %1932 = vmatprep.subr.bf16.mxu0 %v1869
    %1933 = vmatpush1.bf16.msra.mxu0 %v1868
    %1934 = vmatprep.subr.bf16.mxu0 %v1873
    %1935 = vmatpush1.bf16.msra.mxu0 %v1872
    %1936 = vmatprep.subr.bf16.mxu0 %v1877
    %1937 = vmatpush1.bf16.msra.mxu0 %v1876
    %1938 = vmatprep.subr.bf16.mxu0 %v1881
    %1939 = vmatpush1.bf16.msra.mxu0 %v1880
    %1940 = vmatprep.subr.bf16.mxu0 %v1885
    %1941 = vmatpush1.bf16.msra.mxu0 %v1884
    %1942 = vmatprep.subr.bf16.mxu0 %v1889
    %1943 = vmatpush1.bf16.msra.mxu0 %v1888
    %1944 = vmatprep.subr.bf16.mxu0 %v1893
    %1945 = vmatpush1.bf16.msra.mxu0 %v1892
    %1946 = vmatprep.subr.bf16.mxu0 %v1897
    %1947 = vmatpush1.bf16.msra.mxu0 %v1896
    %1948 = vmatprep.subr.bf16.mxu0 0
    %1949 = vmatpush1.bf16.msra.mxu0 0
    %1950 = vmatprep.subr.bf16.mxu0 0
    %1951 = vmatpush1.bf16.msra.mxu0 0
    %1952 = vmatprep.subr.bf16.mxu0 0
    %1953 = vmatpush1.bf16.msra.mxu0 0
    %1954 = vmatprep.subr.bf16.mxu0 0
    %1955 = vmatpush1.bf16.msra.mxu0 0
    %1956 = vmatprep.subr.bf16.mxu0 0
    %1957 = vmatpush1.bf16.msra.mxu0 0
    %1958 = vmatprep.subr.bf16.mxu0 0
    %1959 = vmatpush1.bf16.msra.mxu0 0
    %1960 = vmatprep.subr.bf16.mxu0 0
    %1961 = vmatpush1.bf16.msra.mxu0 0
    %1962 = vmatprep.subr.bf16.mxu0 0
    %1963 = vmatpush1.bf16.msra.mxu0 0
    %1964 = vmatprep.mubr.bf16.mxu0 0
    %1965 = vmatmul.mubr.bf16.gmra.mrb[0].mxu0 %v1739
    %v1966 = vpop.f32.mrb[0].mxu0
    %v1967 = vadd.f32 0.0, %v1966
    %v1968 = vpop.f32.mrb[0].mxu0
    %v1969 = vadd.f32 0.0, %v1968
    %v1970 = vpop.f32.mrb[0].mxu0
    %v1971 = vpop.f32.mrb[0].mxu0
    %1972 = vdwg.mxu0
    %1973 = vmatprep.subr.bf16.mxu0 %v1871
    %1974 = vmatpush1.bf16.msra.mxu0 %v1870
    %1975 = vmatprep.subr.bf16.mxu0 %v1875
    %1976 = vmatpush1.bf16.msra.mxu0 %v1874
    %1977 = vmatprep.subr.bf16.mxu0 %v1879
    %1978 = vmatpush1.bf16.msra.mxu0 %v1878
    %1979 = vmatprep.subr.bf16.mxu0 %v1883
    %1980 = vmatpush1.bf16.msra.mxu0 %v1882
    %1981 = vmatprep.subr.bf16.mxu0 %v1887
    %1982 = vmatpush1.bf16.msra.mxu0 %v1886
    %1983 = vmatprep.subr.bf16.mxu0 %v1891
    %1984 = vmatpush1.bf16.msra.mxu0 %v1890
    %1985 = vmatprep.subr.bf16.mxu0 %v1895
    %1986 = vmatpush1.bf16.msra.mxu0 %v1894
    %1987 = vmatprep.subr.bf16.mxu0 %v1899
    %1988 = vmatpush1.bf16.msra.mxu0 %v1898
    %1989 = vmatprep.subr.bf16.mxu0 0
    %1990 = vmatpush1.bf16.msra.mxu0 0
    %1991 = vmatprep.subr.bf16.mxu0 0
    %1992 = vmatpush1.bf16.msra.mxu0 0
    %1993 = vmatprep.subr.bf16.mxu0 0
    %1994 = vmatpush1.bf16.msra.mxu0 0
    %1995 = vmatprep.subr.bf16.mxu0 0
    %1996 = vmatpush1.bf16.msra.mxu0 0
    %1997 = vmatprep.subr.bf16.mxu0 0
    %1998 = vmatpush1.bf16.msra.mxu0 0
    %1999 = vmatprep.subr.bf16.mxu0 0
    %2000 = vmatpush1.bf16.msra.mxu0 0
    %2001 = vmatprep.subr.bf16.mxu0 0
    %2002 = vmatpush1.bf16.msra.mxu0 0
    %2003 = vmatprep.subr.bf16.mxu0 0
    %2004 = vmatpush1.bf16.msra.mxu0 0
    %2005 = vmatprep.mubr.bf16.mxu0 0
    %2006 = vmatmul.mubr.bf16.gmra.mrb[0].mxu0 %v1739
    %v2007 = vpop.f32.mrb[0].mxu0
    %v2008 = vadd.f32 0.0, %v2007
    %v2009 = vpop.f32.mrb[0].mxu0
    %v2010 = vadd.f32 0.0, %v2009
    %v2011 = vpop.f32.mrb[0].mxu0
    %v2012 = vpop.f32.mrb[0].mxu0
    %2013 = vdwg.mxu0
    %v2014 = vadd.f32 %v1735, %v1967
    %v2015 = vadd.f32 %v1736, %v1969
    %v2016 = vadd.f32 %v1737, %v2008
    %v2017 = vadd.f32 %v1738, %v2010
    %v2018 = vmul.f32 %v2014, 0.5
    %v2019 = vtanh.pop %v2018
    %v2020 = vmul.f32 %v2019, 0.5
    %v2021 = vadd.f32 %v2020, 0.5
    %v2022 = vmul.f32 %v2015, 0.5
    %v2023 = vtanh.pop %v2022
    %v2024 = vmul.f32 %v2023, 0.5
    %v2025 = vadd.f32 %v2024, 0.5
    %v2026 = vtanh.pop %v2016
    %v2027 = vmul.f32 %v2017, 0.5
    %v2028 = vtanh.pop %v2027
    %v2029 = vmul.f32 %v2028, 0.5
    %v2030 = vadd.f32 %v2029, 0.5
    %v2031 = vmul.f32 %v2025, %v1729
    %v2032 = vmul.f32 %v2021, %v2026
    %v2033 = vadd.f32 %v2031, %v2032
    %v2034 = vtanh.pop %v2033
    %v2035 = vmul.f32 %v2030, %v2034
    %s2036 = scalar_lea.vmem [#allocation3], 32
    %2037 = vst [vmem:[%s2036] sm:$0xff] %v2035
    %s2038 = scalar_lea.vmem [#allocation2], 160
    %v2039 = vld [vmem:[%s2038] sm:$0xff]
    %v2040 = vld [vmem:[%s2038 + $0x8] sm:$0xff]
    %v2041 = vld [vmem:[%s2038 + $0x10] sm:$0xff]
    %v2042 = vld [vmem:[%s2038 + $0x18] sm:$0xff]
    %v2043 = vpack.c.bf16 %v2035, %v2035
    %v2044 = vld [vmem:[#allocation6] sm:$0xff]
    %v2045 = vld [vmem:[#allocation6 + $0x8] sm:$0xff]
    %v2046 = vld [vmem:[#allocation6 + $0x10] sm:$0xff]
    %v2047 = vld [vmem:[#allocation6 + $0x18] sm:$0xff]
    %v2048 = vld [vmem:[#allocation6 + $0x20] sm:$0xff]
    %v2049 = vld [vmem:[#allocation6 + $0x28] sm:$0xff]
    %v2050 = vld [vmem:[#allocation6 + $0x30] sm:$0xff]
    %v2051 = vld [vmem:[#allocation6 + $0x38] sm:$0xff]
    %v2052 = vld [vmem:[#allocation6 + $0x40] sm:$0xff]
    %v2053 = vld [vmem:[#allocation6 + $0x48] sm:$0xff]
    %v2054 = vld [vmem:[#allocation6 + $0x50] sm:$0xff]
    %v2055 = vld [vmem:[#allocation6 + $0x58] sm:$0xff]
    %v2056 = vld [vmem:[#allocation6 + $0x60] sm:$0xff]
    %v2057 = vld [vmem:[#allocation6 + $0x68] sm:$0xff]
    %v2058 = vld [vmem:[#allocation6 + $0x70] sm:$0xff]
    %v2059 = vld [vmem:[#allocation6 + $0x78] sm:$0xff]
    %v2060 = vld [vmem:[#allocation6 + $0x80] sm:$0xff]
    %v2061 = vld [vmem:[#allocation6 + $0x88] sm:$0xff]
    %v2062 = vld [vmem:[#allocation6 + $0x90] sm:$0xff]
    %v2063 = vld [vmem:[#allocation6 + $0x98] sm:$0xff]
    %v2064 = vld [vmem:[#allocation6 + $0xa0] sm:$0xff]
    %v2065 = vld [vmem:[#allocation6 + $0xa8] sm:$0xff]
    %v2066 = vld [vmem:[#allocation6 + $0xb0] sm:$0xff]
    %v2067 = vld [vmem:[#allocation6 + $0xb8] sm:$0xff]
    %v2068 = vld [vmem:[#allocation6 + $0xc0] sm:$0xff]
    %v2069 = vld [vmem:[#allocation6 + $0xc8] sm:$0xff]
    %v2070 = vld [vmem:[#allocation6 + $0xd0] sm:$0xff]
    %v2071 = vld [vmem:[#allocation6 + $0xd8] sm:$0xff]
    %v2072 = vld [vmem:[#allocation6 + $0xe0] sm:$0xff]
    %v2073 = vld [vmem:[#allocation6 + $0xe8] sm:$0xff]
    %v2074 = vld [vmem:[#allocation6 + $0xf0] sm:$0xff]
    %v2075 = vld [vmem:[#allocation6 + $0xf8] sm:$0xff]
    %v2108 = vunpack.c.l.b16 %v2044
    %v2109 = vunpack.c.h.b16 %v2044
    %v2110 = vunpack.c.l.b16 %v2045
    %v2111 = vunpack.c.h.b16 %v2045
    %v2112 = vunpack.c.l.b16 %v2046
    %v2113 = vunpack.c.h.b16 %v2046
    %v2114 = vunpack.c.l.b16 %v2047
    %v2115 = vunpack.c.h.b16 %v2047
    %v2116 = vunpack.c.l.b16 %v2048
    %v2117 = vunpack.c.h.b16 %v2048
    %v2118 = vunpack.c.l.b16 %v2049
    %v2119 = vunpack.c.h.b16 %v2049
    %v2120 = vunpack.c.l.b16 %v2050
    %v2121 = vunpack.c.h.b16 %v2050
    %v2122 = vunpack.c.l.b16 %v2051
    %v2123 = vunpack.c.h.b16 %v2051
    %v2124 = vunpack.c.l.b16 %v2052
    %v2125 = vunpack.c.h.b16 %v2052
    %v2126 = vunpack.c.l.b16 %v2053
    %v2127 = vunpack.c.h.b16 %v2053
    %v2128 = vunpack.c.l.b16 %v2054
    %v2129 = vunpack.c.h.b16 %v2054
    %v2130 = vunpack.c.l.b16 %v2055
    %v2131 = vunpack.c.h.b16 %v2055
    %v2132 = vunpack.c.l.b16 %v2056
    %v2133 = vunpack.c.h.b16 %v2056
    %v2134 = vunpack.c.l.b16 %v2057
    %v2135 = vunpack.c.h.b16 %v2057
    %v2136 = vunpack.c.l.b16 %v2058
    %v2137 = vunpack.c.h.b16 %v2058
    %v2138 = vunpack.c.l.b16 %v2059
    %v2139 = vunpack.c.h.b16 %v2059
    %v2140 = vunpack.c.l.b16 %v2060
    %v2141 = vunpack.c.h.b16 %v2060
    %v2142 = vunpack.c.l.b16 %v2061
    %v2143 = vunpack.c.h.b16 %v2061
    %v2144 = vunpack.c.l.b16 %v2062
    %v2145 = vunpack.c.h.b16 %v2062
    %v2146 = vunpack.c.l.b16 %v2063
    %v2147 = vunpack.c.h.b16 %v2063
    %v2148 = vunpack.c.l.b16 %v2064
    %v2149 = vunpack.c.h.b16 %v2064
    %v2150 = vunpack.c.l.b16 %v2065
    %v2151 = vunpack.c.h.b16 %v2065
    %v2152 = vunpack.c.l.b16 %v2066
    %v2153 = vunpack.c.h.b16 %v2066
    %v2154 = vunpack.c.l.b16 %v2067
    %v2155 = vunpack.c.h.b16 %v2067
    %v2156 = vunpack.c.l.b16 %v2068
    %v2157 = vunpack.c.h.b16 %v2068
    %v2158 = vunpack.c.l.b16 %v2069
    %v2159 = vunpack.c.h.b16 %v2069
    %v2160 = vunpack.c.l.b16 %v2070
    %v2161 = vunpack.c.h.b16 %v2070
    %v2162 = vunpack.c.l.b16 %v2071
    %v2163 = vunpack.c.h.b16 %v2071
    %v2164 = vunpack.c.l.b16 %v2072
    %v2165 = vunpack.c.h.b16 %v2072
    %v2166 = vunpack.c.l.b16 %v2073
    %v2167 = vunpack.c.h.b16 %v2073
    %v2168 = vunpack.c.l.b16 %v2074
    %v2169 = vunpack.c.h.b16 %v2074
    %v2170 = vunpack.c.l.b16 %v2075
    %v2171 = vunpack.c.h.b16 %v2075
    %v2172 = vpack.c.b16 %v2112, %v2108
    %v2173 = vpack.c.b16 %v2113, %v2109
    %v2174 = vpack.c.b16 %v2114, %v2110
    %v2175 = vpack.c.b16 %v2115, %v2111
    %v2176 = vpack.c.b16 %v2120, %v2116
    %v2177 = vpack.c.b16 %v2121, %v2117
    %v2178 = vpack.c.b16 %v2122, %v2118
    %v2179 = vpack.c.b16 %v2123, %v2119
    %v2180 = vpack.c.b16 %v2128, %v2124
    %v2181 = vpack.c.b16 %v2129, %v2125
    %v2182 = vpack.c.b16 %v2130, %v2126
    %v2183 = vpack.c.b16 %v2131, %v2127
    %v2184 = vpack.c.b16 %v2136, %v2132
    %v2185 = vpack.c.b16 %v2137, %v2133
    %v2186 = vpack.c.b16 %v2138, %v2134
    %v2187 = vpack.c.b16 %v2139, %v2135
    %v2188 = vpack.c.b16 %v2144, %v2140
    %v2189 = vpack.c.b16 %v2145, %v2141
    %v2190 = vpack.c.b16 %v2146, %v2142
    %v2191 = vpack.c.b16 %v2147, %v2143
    %v2192 = vpack.c.b16 %v2152, %v2148
    %v2193 = vpack.c.b16 %v2153, %v2149
    %v2194 = vpack.c.b16 %v2154, %v2150
    %v2195 = vpack.c.b16 %v2155, %v2151
    %v2196 = vpack.c.b16 %v2160, %v2156
    %v2197 = vpack.c.b16 %v2161, %v2157
    %v2198 = vpack.c.b16 %v2162, %v2158
    %v2199 = vpack.c.b16 %v2163, %v2159
    %v2200 = vpack.c.b16 %v2168, %v2164
    %v2201 = vpack.c.b16 %v2169, %v2165
    %v2202 = vpack.c.b16 %v2170, %v2166
    %v2203 = vpack.c.b16 %v2171, %v2167
    %2236 = vmatprep.subr.bf16.mxu0 %v2173
    %2237 = vmatpush1.bf16.msra.mxu0 %v2172
    %2238 = vmatprep.subr.bf16.mxu0 %v2177
    %2239 = vmatpush1.bf16.msra.mxu0 %v2176
    %2240 = vmatprep.subr.bf16.mxu0 %v2181
    %2241 = vmatpush1.bf16.msra.mxu0 %v2180
    %2242 = vmatprep.subr.bf16.mxu0 %v2185
    %2243 = vmatpush1.bf16.msra.mxu0 %v2184
    %2244 = vmatprep.subr.bf16.mxu0 %v2189
    %2245 = vmatpush1.bf16.msra.mxu0 %v2188
    %2246 = vmatprep.subr.bf16.mxu0 %v2193
    %2247 = vmatpush1.bf16.msra.mxu0 %v2192
    %2248 = vmatprep.subr.bf16.mxu0 %v2197
    %2249 = vmatpush1.bf16.msra.mxu0 %v2196
    %2250 = vmatprep.subr.bf16.mxu0 %v2201
    %2251 = vmatpush1.bf16.msra.mxu0 %v2200
    %2252 = vmatprep.subr.bf16.mxu0 0
    %2253 = vmatpush1.bf16.msra.mxu0 0
    %2254 = vmatprep.subr.bf16.mxu0 0
    %2255 = vmatpush1.bf16.msra.mxu0 0
    %2256 = vmatprep.subr.bf16.mxu0 0
    %2257 = vmatpush1.bf16.msra.mxu0 0
    %2258 = vmatprep.subr.bf16.mxu0 0
    %2259 = vmatpush1.bf16.msra.mxu0 0
    %2260 = vmatprep.subr.bf16.mxu0 0
    %2261 = vmatpush1.bf16.msra.mxu0 0
    %2262 = vmatprep.subr.bf16.mxu0 0
    %2263 = vmatpush1.bf16.msra.mxu0 0
    %2264 = vmatprep.subr.bf16.mxu0 0
    %2265 = vmatpush1.bf16.msra.mxu0 0
    %2266 = vmatprep.subr.bf16.mxu0 0
    %2267 = vmatpush1.bf16.msra.mxu0 0
    %2268 = vmatprep.mubr.bf16.mxu0 0
    %2269 = vmatmul.mubr.bf16.gmra.mrb[0].mxu0 %v2043
    %v2270 = vpop.f32.mrb[0].mxu0
    %v2271 = vadd.f32 0.0, %v2270
    %v2272 = vpop.f32.mrb[0].mxu0
    %v2273 = vadd.f32 0.0, %v2272
    %v2274 = vpop.f32.mrb[0].mxu0
    %v2275 = vpop.f32.mrb[0].mxu0
    %2276 = vdwg.mxu0
    %2277 = vmatprep.subr.bf16.mxu0 %v2175
    %2278 = vmatpush1.bf16.msra.mxu0 %v2174
    %2279 = vmatprep.subr.bf16.mxu0 %v2179
    %2280 = vmatpush1.bf16.msra.mxu0 %v2178
    %2281 = vmatprep.subr.bf16.mxu0 %v2183
    %2282 = vmatpush1.bf16.msra.mxu0 %v2182
    %2283 = vmatprep.subr.bf16.mxu0 %v2187
    %2284 = vmatpush1.bf16.msra.mxu0 %v2186
    %2285 = vmatprep.subr.bf16.mxu0 %v2191
    %2286 = vmatpush1.bf16.msra.mxu0 %v2190
    %2287 = vmatprep.subr.bf16.mxu0 %v2195
    %2288 = vmatpush1.bf16.msra.mxu0 %v2194
    %2289 = vmatprep.subr.bf16.mxu0 %v2199
    %2290 = vmatpush1.bf16.msra.mxu0 %v2198
    %2291 = vmatprep.subr.bf16.mxu0 %v2203
    %2292 = vmatpush1.bf16.msra.mxu0 %v2202
    %2293 = vmatprep.subr.bf16.mxu0 0
    %2294 = vmatpush1.bf16.msra.mxu0 0
    %2295 = vmatprep.subr.bf16.mxu0 0
    %2296 = vmatpush1.bf16.msra.mxu0 0
    %2297 = vmatprep.subr.bf16.mxu0 0
    %2298 = vmatpush1.bf16.msra.mxu0 0
    %2299 = vmatprep.subr.bf16.mxu0 0
    %2300 = vmatpush1.bf16.msra.mxu0 0
    %2301 = vmatprep.subr.bf16.mxu0 0
    %2302 = vmatpush1.bf16.msra.mxu0 0
    %2303 = vmatprep.subr.bf16.mxu0 0
    %2304 = vmatpush1.bf16.msra.mxu0 0
    %2305 = vmatprep.subr.bf16.mxu0 0
    %2306 = vmatpush1.bf16.msra.mxu0 0
    %2307 = vmatprep.subr.bf16.mxu0 0
    %2308 = vmatpush1.bf16.msra.mxu0 0
    %2309 = vmatprep.mubr.bf16.mxu0 0
    %2310 = vmatmul.mubr.bf16.gmra.mrb[0].mxu0 %v2043
    %v2311 = vpop.f32.mrb[0].mxu0
    %v2312 = vadd.f32 0.0, %v2311
    %v2313 = vpop.f32.mrb[0].mxu0
    %v2314 = vadd.f32 0.0, %v2313
    %v2315 = vpop.f32.mrb[0].mxu0
    %v2316 = vpop.f32.mrb[0].mxu0
    %2317 = vdwg.mxu0
    %v2318 = vadd.f32 %v2039, %v2271
    %v2319 = vadd.f32 %v2040, %v2273
    %v2320 = vadd.f32 %v2041, %v2312
    %v2321 = vadd.f32 %v2042, %v2314
    %v2322 = vmul.f32 %v2318, 0.5
    %v2323 = vtanh.pop %v2322
    %v2324 = vmul.f32 %v2323, 0.5
    %v2325 = vadd.f32 %v2324, 0.5
    %v2326 = vmul.f32 %v2319, 0.5
    %v2327 = vtanh.pop %v2326
    %v2328 = vmul.f32 %v2327, 0.5
    %v2329 = vadd.f32 %v2328, 0.5
    %v2330 = vtanh.pop %v2320
    %v2331 = vmul.f32 %v2321, 0.5
    %v2332 = vtanh.pop %v2331
    %v2333 = vmul.f32 %v2332, 0.5
    %v2334 = vadd.f32 %v2333, 0.5
    %v2335 = vmul.f32 %v2329, %v2033
    %v2336 = vmul.f32 %v2325, %v2330
    %v2337 = vadd.f32 %v2335, %v2336
    %v2338 = vtanh.pop %v2337
    %v2339 = vmul.f32 %v2334, %v2338
    %s2340 = scalar_lea.vmem [#allocation3], 40
    %2341 = vst [vmem:[%s2340] sm:$0xff] %v2339
    %s2342 = scalar_lea.vmem [#allocation2], 192
    %v2343 = vld [vmem:[%s2342] sm:$0xff]
    %v2344 = vld [vmem:[%s2342 + $0x8] sm:$0xff]
    %v2345 = vld [vmem:[%s2342 + $0x10] sm:$0xff]
    %v2346 = vld [vmem:[%s2342 + $0x18] sm:$0xff]
    %v2347 = vpack.c.bf16 %v2339, %v2339
    %v2348 = vld [vmem:[#allocation6] sm:$0xff]
    %v2349 = vld [vmem:[#allocation6 + $0x8] sm:$0xff]
    %v2350 = vld [vmem:[#allocation6 + $0x10] sm:$0xff]
    %v2351 = vld [vmem:[#allocation6 + $0x18] sm:$0xff]
    %v2352 = vld [vmem:[#allocation6 + $0x20] sm:$0xff]
    %v2353 = vld [vmem:[#allocation6 + $0x28] sm:$0xff]
    %v2354 = vld [vmem:[#allocation6 + $0x30] sm:$0xff]
    %v2355 = vld [vmem:[#allocation6 + $0x38] sm:$0xff]
    %v2356 = vld [vmem:[#allocation6 + $0x40] sm:$0xff]
    %v2357 = vld [vmem:[#allocation6 + $0x48] sm:$0xff]
    %v2358 = vld [vmem:[#allocation6 + $0x50] sm:$0xff]
    %v2359 = vld [vmem:[#allocation6 + $0x58] sm:$0xff]
    %v2360 = vld [vmem:[#allocation6 + $0x60] sm:$0xff]
    %v2361 = vld [vmem:[#allocation6 + $0x68] sm:$0xff]
    %v2362 = vld [vmem:[#allocation6 + $0x70] sm:$0xff]
    %v2363 = vld [vmem:[#allocation6 + $0x78] sm:$0xff]
    %v2364 = vld [vmem:[#allocation6 + $0x80] sm:$0xff]
    %v2365 = vld [vmem:[#allocation6 + $0x88] sm:$0xff]
    %v2366 = vld [vmem:[#allocation6 + $0x90] sm:$0xff]
    %v2367 = vld [vmem:[#allocation6 + $0x98] sm:$0xff]
    %v2368 = vld [vmem:[#allocation6 + $0xa0] sm:$0xff]
    %v2369 = vld [vmem:[#allocation6 + $0xa8] sm:$0xff]
    %v2370 = vld [vmem:[#allocation6 + $0xb0] sm:$0xff]
    %v2371 = vld [vmem:[#allocation6 + $0xb8] sm:$0xff]
    %v2372 = vld [vmem:[#allocation6 + $0xc0] sm:$0xff]
    %v2373 = vld [vmem:[#allocation6 + $0xc8] sm:$0xff]
    %v2374 = vld [vmem:[#allocation6 + $0xd0] sm:$0xff]
    %v2375 = vld [vmem:[#allocation6 + $0xd8] sm:$0xff]
    %v2376 = vld [vmem:[#allocation6 + $0xe0] sm:$0xff]
    %v2377 = vld [vmem:[#allocation6 + $0xe8] sm:$0xff]
    %v2378 = vld [vmem:[#allocation6 + $0xf0] sm:$0xff]
    %v2379 = vld [vmem:[#allocation6 + $0xf8] sm:$0xff]
    %v2412 = vunpack.c.l.b16 %v2348
    %v2413 = vunpack.c.h.b16 %v2348
    %v2414 = vunpack.c.l.b16 %v2349
    %v2415 = vunpack.c.h.b16 %v2349
    %v2416 = vunpack.c.l.b16 %v2350
    %v2417 = vunpack.c.h.b16 %v2350
    %v2418 = vunpack.c.l.b16 %v2351
    %v2419 = vunpack.c.h.b16 %v2351
    %v2420 = vunpack.c.l.b16 %v2352
    %v2421 = vunpack.c.h.b16 %v2352
    %v2422 = vunpack.c.l.b16 %v2353
    %v2423 = vunpack.c.h.b16 %v2353
    %v2424 = vunpack.c.l.b16 %v2354
    %v2425 = vunpack.c.h.b16 %v2354
    %v2426 = vunpack.c.l.b16 %v2355
    %v2427 = vunpack.c.h.b16 %v2355
    %v2428 = vunpack.c.l.b16 %v2356
    %v2429 = vunpack.c.h.b16 %v2356
    %v2430 = vunpack.c.l.b16 %v2357
    %v2431 = vunpack.c.h.b16 %v2357
    %v2432 = vunpack.c.l.b16 %v2358
    %v2433 = vunpack.c.h.b16 %v2358
    %v2434 = vunpack.c.l.b16 %v2359
    %v2435 = vunpack.c.h.b16 %v2359
    %v2436 = vunpack.c.l.b16 %v2360
    %v2437 = vunpack.c.h.b16 %v2360
    %v2438 = vunpack.c.l.b16 %v2361
    %v2439 = vunpack.c.h.b16 %v2361
    %v2440 = vunpack.c.l.b16 %v2362
    %v2441 = vunpack.c.h.b16 %v2362
    %v2442 = vunpack.c.l.b16 %v2363
    %v2443 = vunpack.c.h.b16 %v2363
    %v2444 = vunpack.c.l.b16 %v2364
    %v2445 = vunpack.c.h.b16 %v2364
    %v2446 = vunpack.c.l.b16 %v2365
    %v2447 = vunpack.c.h.b16 %v2365
    %v2448 = vunpack.c.l.b16 %v2366
    %v2449 = vunpack.c.h.b16 %v2366
    %v2450 = vunpack.c.l.b16 %v2367
    %v2451 = vunpack.c.h.b16 %v2367
    %v2452 = vunpack.c.l.b16 %v2368
    %v2453 = vunpack.c.h.b16 %v2368
    %v2454 = vunpack.c.l.b16 %v2369
    %v2455 = vunpack.c.h.b16 %v2369
    %v2456 = vunpack.c.l.b16 %v2370
    %v2457 = vunpack.c.h.b16 %v2370
    %v2458 = vunpack.c.l.b16 %v2371
    %v2459 = vunpack.c.h.b16 %v2371
    %v2460 = vunpack.c.l.b16 %v2372
    %v2461 = vunpack.c.h.b16 %v2372
    %v2462 = vunpack.c.l.b16 %v2373
    %v2463 = vunpack.c.h.b16 %v2373
    %v2464 = vunpack.c.l.b16 %v2374
    %v2465 = vunpack.c.h.b16 %v2374
    %v2466 = vunpack.c.l.b16 %v2375
    %v2467 = vunpack.c.h.b16 %v2375
    %v2468 = vunpack.c.l.b16 %v2376
    %v2469 = vunpack.c.h.b16 %v2376
    %v2470 = vunpack.c.l.b16 %v2377
    %v2471 = vunpack.c.h.b16 %v2377
    %v2472 = vunpack.c.l.b16 %v2378
    %v2473 = vunpack.c.h.b16 %v2378
    %v2474 = vunpack.c.l.b16 %v2379
    %v2475 = vunpack.c.h.b16 %v2379
    %v2476 = vpack.c.b16 %v2416, %v2412
    %v2477 = vpack.c.b16 %v2417, %v2413
    %v2478 = vpack.c.b16 %v2418, %v2414
    %v2479 = vpack.c.b16 %v2419, %v2415
    %v2480 = vpack.c.b16 %v2424, %v2420
    %v2481 = vpack.c.b16 %v2425, %v2421
    %v2482 = vpack.c.b16 %v2426, %v2422
    %v2483 = vpack.c.b16 %v2427, %v2423
    %v2484 = vpack.c.b16 %v2432, %v2428
    %v2485 = vpack.c.b16 %v2433, %v2429
    %v2486 = vpack.c.b16 %v2434, %v2430
    %v2487 = vpack.c.b16 %v2435, %v2431
    %v2488 = vpack.c.b16 %v2440, %v2436
    %v2489 = vpack.c.b16 %v2441, %v2437
    %v2490 = vpack.c.b16 %v2442, %v2438
    %v2491 = vpack.c.b16 %v2443, %v2439
    %v2492 = vpack.c.b16 %v2448, %v2444
    %v2493 = vpack.c.b16 %v2449, %v2445
    %v2494 = vpack.c.b16 %v2450, %v2446
    %v2495 = vpack.c.b16 %v2451, %v2447
    %v2496 = vpack.c.b16 %v2456, %v2452
    %v2497 = vpack.c.b16 %v2457, %v2453
    %v2498 = vpack.c.b16 %v2458, %v2454
    %v2499 = vpack.c.b16 %v2459, %v2455
    %v2500 = vpack.c.b16 %v2464, %v2460
    %v2501 = vpack.c.b16 %v2465, %v2461
    %v2502 = vpack.c.b16 %v2466, %v2462
    %v2503 = vpack.c.b16 %v2467, %v2463
    %v2504 = vpack.c.b16 %v2472, %v2468
    %v2505 = vpack.c.b16 %v2473, %v2469
    %v2506 = vpack.c.b16 %v2474, %v2470
    %v2507 = vpack.c.b16 %v2475, %v2471
    %2540 = vmatprep.subr.bf16.mxu0 %v2477
    %2541 = vmatpush1.bf16.msra.mxu0 %v2476
    %2542 = vmatprep.subr.bf16.mxu0 %v2481
    %2543 = vmatpush1.bf16.msra.mxu0 %v2480
    %2544 = vmatprep.subr.bf16.mxu0 %v2485
    %2545 = vmatpush1.bf16.msra.mxu0 %v2484
    %2546 = vmatprep.subr.bf16.mxu0 %v2489
    %2547 = vmatpush1.bf16.msra.mxu0 %v2488
    %2548 = vmatprep.subr.bf16.mxu0 %v2493
    %2549 = vmatpush1.bf16.msra.mxu0 %v2492
    %2550 = vmatprep.subr.bf16.mxu0 %v2497
    %2551 = vmatpush1.bf16.msra.mxu0 %v2496
    %2552 = vmatprep.subr.bf16.mxu0 %v2501
    %2553 = vmatpush1.bf16.msra.mxu0 %v2500
    %2554 = vmatprep.subr.bf16.mxu0 %v2505
    %2555 = vmatpush1.bf16.msra.mxu0 %v2504
    %2556 = vmatprep.subr.bf16.mxu0 0
    %2557 = vmatpush1.bf16.msra.mxu0 0
    %2558 = vmatprep.subr.bf16.mxu0 0
    %2559 = vmatpush1.bf16.msra.mxu0 0
    %2560 = vmatprep.subr.bf16.mxu0 0
    %2561 = vmatpush1.bf16.msra.mxu0 0
    %2562 = vmatprep.subr.bf16.mxu0 0
    %2563 = vmatpush1.bf16.msra.mxu0 0
    %2564 = vmatprep.subr.bf16.mxu0 0
    %2565 = vmatpush1.bf16.msra.mxu0 0
    %2566 = vmatprep.subr.bf16.mxu0 0
    %2567 = vmatpush1.bf16.msra.mxu0 0
    %2568 = vmatprep.subr.bf16.mxu0 0
    %2569 = vmatpush1.bf16.msra.mxu0 0
    %2570 = vmatprep.subr.bf16.mxu0 0
    %2571 = vmatpush1.bf16.msra.mxu0 0
    %2572 = vmatprep.mubr.bf16.mxu0 0
    %2573 = vmatmul.mubr.bf16.gmra.mrb[0].mxu0 %v2347
    %v2574 = vpop.f32.mrb[0].mxu0
    %v2575 = vadd.f32 0.0, %v2574
    %v2576 = vpop.f32.mrb[0].mxu0
    %v2577 = vadd.f32 0.0, %v2576
    %v2578 = vpop.f32.mrb[0].mxu0
    %v2579 = vpop.f32.mrb[0].mxu0
    %2580 = vdwg.mxu0
    %2581 = vmatprep.subr.bf16.mxu0 %v2479
    %2582 = vmatpush1.bf16.msra.mxu0 %v2478
    %2583 = vmatprep.subr.bf16.mxu0 %v2483
    %2584 = vmatpush1.bf16.msra.mxu0 %v2482
    %2585 = vmatprep.subr.bf16.mxu0 %v2487
    %2586 = vmatpush1.bf16.msra.mxu0 %v2486
    %2587 = vmatprep.subr.bf16.mxu0 %v2491
    %2588 = vmatpush1.bf16.msra.mxu0 %v2490
    %2589 = vmatprep.subr.bf16.mxu0 %v2495
    %2590 = vmatpush1.bf16.msra.mxu0 %v2494
    %2591 = vmatprep.subr.bf16.mxu0 %v2499
    %2592 = vmatpush1.bf16.msra.mxu0 %v2498
    %2593 = vmatprep.subr.bf16.mxu0 %v2503
    %2594 = vmatpush1.bf16.msra.mxu0 %v2502
    %2595 = vmatprep.subr.bf16.mxu0 %v2507
    %2596 = vmatpush1.bf16.msra.mxu0 %v2506
    %2597 = vmatprep.subr.bf16.mxu0 0
    %2598 = vmatpush1.bf16.msra.mxu0 0
    %2599 = vmatprep.subr.bf16.mxu0 0
    %2600 = vmatpush1.bf16.msra.mxu0 0
    %2601 = vmatprep.subr.bf16.mxu0 0
    %2602 = vmatpush1.bf16.msra.mxu0 0
    %2603 = vmatprep.subr.bf16.mxu0 0
    %2604 = vmatpush1.bf16.msra.mxu0 0
    %2605 = vmatprep.subr.bf16.mxu0 0
    %2606 = vmatpush1.bf16.msra.mxu0 0
    %2607 = vmatprep.subr.bf16.mxu0 0
    %2608 = vmatpush1.bf16.msra.mxu0 0
    %2609 = vmatprep.subr.bf16.mxu0 0
    %2610 = vmatpush1.bf16.msra.mxu0 0
    %2611 = vmatprep.subr.bf16.mxu0 0
    %2612 = vmatpush1.bf16.msra.mxu0 0
    %2613 = vmatprep.mubr.bf16.mxu0 0
    %2614 = vmatmul.mubr.bf16.gmra.mrb[0].mxu0 %v2347
    %v2615 = vpop.f32.mrb[0].mxu0
    %v2616 = vadd.f32 0.0, %v2615
    %v2617 = vpop.f32.mrb[0].mxu0
    %v2618 = vadd.f32 0.0, %v2617
    %v2619 = vpop.f32.mrb[0].mxu0
    %v2620 = vpop.f32.mrb[0].mxu0
    %2621 = vdwg.mxu0
    %v2622 = vadd.f32 %v2343, %v2575
    %v2623 = vadd.f32 %v2344, %v2577
    %v2624 = vadd.f32 %v2345, %v2616
    %v2625 = vadd.f32 %v2346, %v2618
    %v2626 = vmul.f32 %v2622, 0.5
    %v2627 = vtanh.pop %v2626
    %v2628 = vmul.f32 %v2627, 0.5
    %v2629 = vadd.f32 %v2628, 0.5
    %v2630 = vmul.f32 %v2623, 0.5
    %v2631 = vtanh.pop %v2630
    %v2632 = vmul.f32 %v2631, 0.5
    %v2633 = vadd.f32 %v2632, 0.5
    %v2634 = vtanh.pop %v2624
    %v2635 = vmul.f32 %v2625, 0.5
    %v2636 = vtanh.pop %v2635
    %v2637 = vmul.f32 %v2636, 0.5
    %v2638 = vadd.f32 %v2637, 0.5
    %v2639 = vmul.f32 %v2633, %v2337
    %v2640 = vmul.f32 %v2629, %v2634
    %v2641 = vadd.f32 %v2639, %v2640
    %v2642 = vtanh.pop %v2641
    %v2643 = vmul.f32 %v2638, %v2642
    %s2644 = scalar_lea.vmem [#allocation3], 48
    %2645 = vst [vmem:[%s2644] sm:$0xff] %v2643
    %s2646 = scalar_lea.vmem [#allocation2], 224
    %v2647 = vld [vmem:[%s2646] sm:$0xff]
    %v2648 = vld [vmem:[%s2646 + $0x8] sm:$0xff]
    %v2649 = vld [vmem:[%s2646 + $0x10] sm:$0xff]
    %v2650 = vld [vmem:[%s2646 + $0x18] sm:$0xff]
    %v2651 = vpack.c.bf16 %v2643, %v2643
    %v2652 = vld [vmem:[#allocation6] sm:$0xff]
    %v2653 = vld [vmem:[#allocation6 + $0x8] sm:$0xff]
    %v2654 = vld [vmem:[#allocation6 + $0x10] sm:$0xff]
    %v2655 = vld [vmem:[#allocation6 + $0x18] sm:$0xff]
    %v2656 = vld [vmem:[#allocation6 + $0x20] sm:$0xff]
    %v2657 = vld [vmem:[#allocation6 + $0x28] sm:$0xff]
    %v2658 = vld [vmem:[#allocation6 + $0x30] sm:$0xff]
    %v2659 = vld [vmem:[#allocation6 + $0x38] sm:$0xff]
    %v2660 = vld [vmem:[#allocation6 + $0x40] sm:$0xff]
    %v2661 = vld [vmem:[#allocation6 + $0x48] sm:$0xff]
    %v2662 = vld [vmem:[#allocation6 + $0x50] sm:$0xff]
    %v2663 = vld [vmem:[#allocation6 + $0x58] sm:$0xff]
    %v2664 = vld [vmem:[#allocation6 + $0x60] sm:$0xff]
    %v2665 = vld [vmem:[#allocation6 + $0x68] sm:$0xff]
    %v2666 = vld [vmem:[#allocation6 + $0x70] sm:$0xff]
    %v2667 = vld [vmem:[#allocation6 + $0x78] sm:$0xff]
    %v2668 = vld [vmem:[#allocation6 + $0x80] sm:$0xff]
    %v2669 = vld [vmem:[#allocation6 + $0x88] sm:$0xff]
    %v2670 = vld [vmem:[#allocation6 + $0x90] sm:$0xff]
    %v2671 = vld [vmem:[#allocation6 + $0x98] sm:$0xff]
    %v2672 = vld [vmem:[#allocation6 + $0xa0] sm:$0xff]
    %v2673 = vld [vmem:[#allocation6 + $0xa8] sm:$0xff]
    %v2674 = vld [vmem:[#allocation6 + $0xb0] sm:$0xff]
    %v2675 = vld [vmem:[#allocation6 + $0xb8] sm:$0xff]
    %v2676 = vld [vmem:[#allocation6 + $0xc0] sm:$0xff]
    %v2677 = vld [vmem:[#allocation6 + $0xc8] sm:$0xff]
    %v2678 = vld [vmem:[#allocation6 + $0xd0] sm:$0xff]
    %v2679 = vld [vmem:[#allocation6 + $0xd8] sm:$0xff]
    %v2680 = vld [vmem:[#allocation6 + $0xe0] sm:$0xff]
    %v2681 = vld [vmem:[#allocation6 + $0xe8] sm:$0xff]
    %v2682 = vld [vmem:[#allocation6 + $0xf0] sm:$0xff]
    %v2683 = vld [vmem:[#allocation6 + $0xf8] sm:$0xff]
    %v2716 = vunpack.c.l.b16 %v2652
    %v2717 = vunpack.c.h.b16 %v2652
    %v2718 = vunpack.c.l.b16 %v2653
    %v2719 = vunpack.c.h.b16 %v2653
    %v2720 = vunpack.c.l.b16 %v2654
    %v2721 = vunpack.c.h.b16 %v2654
    %v2722 = vunpack.c.l.b16 %v2655
    %v2723 = vunpack.c.h.b16 %v2655
    %v2724 = vunpack.c.l.b16 %v2656
    %v2725 = vunpack.c.h.b16 %v2656
    %v2726 = vunpack.c.l.b16 %v2657
    %v2727 = vunpack.c.h.b16 %v2657
    %v2728 = vunpack.c.l.b16 %v2658
    %v2729 = vunpack.c.h.b16 %v2658
    %v2730 = vunpack.c.l.b16 %v2659
    %v2731 = vunpack.c.h.b16 %v2659
    %v2732 = vunpack.c.l.b16 %v2660
    %v2733 = vunpack.c.h.b16 %v2660
    %v2734 = vunpack.c.l.b16 %v2661
    %v2735 = vunpack.c.h.b16 %v2661
    %v2736 = vunpack.c.l.b16 %v2662
    %v2737 = vunpack.c.h.b16 %v2662
    %v2738 = vunpack.c.l.b16 %v2663
    %v2739 = vunpack.c.h.b16 %v2663
    %v2740 = vunpack.c.l.b16 %v2664
    %v2741 = vunpack.c.h.b16 %v2664
    %v2742 = vunpack.c.l.b16 %v2665
    %v2743 = vunpack.c.h.b16 %v2665
    %v2744 = vunpack.c.l.b16 %v2666
    %v2745 = vunpack.c.h.b16 %v2666
    %v2746 = vunpack.c.l.b16 %v2667
    %v2747 = vunpack.c.h.b16 %v2667
    %v2748 = vunpack.c.l.b16 %v2668
    %v2749 = vunpack.c.h.b16 %v2668
    %v2750 = vunpack.c.l.b16 %v2669
    %v2751 = vunpack.c.h.b16 %v2669
    %v2752 = vunpack.c.l.b16 %v2670
    %v2753 = vunpack.c.h.b16 %v2670
    %v2754 = vunpack.c.l.b16 %v2671
    %v2755 = vunpack.c.h.b16 %v2671
    %v2756 = vunpack.c.l.b16 %v2672
    %v2757 = vunpack.c.h.b16 %v2672
    %v2758 = vunpack.c.l.b16 %v2673
    %v2759 = vunpack.c.h.b16 %v2673
    %v2760 = vunpack.c.l.b16 %v2674
    %v2761 = vunpack.c.h.b16 %v2674
    %v2762 = vunpack.c.l.b16 %v2675
    %v2763 = vunpack.c.h.b16 %v2675
    %v2764 = vunpack.c.l.b16 %v2676
    %v2765 = vunpack.c.h.b16 %v2676
    %v2766 = vunpack.c.l.b16 %v2677
    %v2767 = vunpack.c.h.b16 %v2677
    %v2768 = vunpack.c.l.b16 %v2678
    %v2769 = vunpack.c.h.b16 %v2678
    %v2770 = vunpack.c.l.b16 %v2679
    %v2771 = vunpack.c.h.b16 %v2679
    %v2772 = vunpack.c.l.b16 %v2680
    %v2773 = vunpack.c.h.b16 %v2680
    %v2774 = vunpack.c.l.b16 %v2681
    %v2775 = vunpack.c.h.b16 %v2681
    %v2776 = vunpack.c.l.b16 %v2682
    %v2777 = vunpack.c.h.b16 %v2682
    %v2778 = vunpack.c.l.b16 %v2683
    %v2779 = vunpack.c.h.b16 %v2683
    %v2780 = vpack.c.b16 %v2720, %v2716
    %v2781 = vpack.c.b16 %v2721, %v2717
    %v2782 = vpack.c.b16 %v2722, %v2718
    %v2783 = vpack.c.b16 %v2723, %v2719
    %v2784 = vpack.c.b16 %v2728, %v2724
    %v2785 = vpack.c.b16 %v2729, %v2725
    %v2786 = vpack.c.b16 %v2730, %v2726
    %v2787 = vpack.c.b16 %v2731, %v2727
    %v2788 = vpack.c.b16 %v2736, %v2732
    %v2789 = vpack.c.b16 %v2737, %v2733
    %v2790 = vpack.c.b16 %v2738, %v2734
    %v2791 = vpack.c.b16 %v2739, %v2735
    %v2792 = vpack.c.b16 %v2744, %v2740
    %v2793 = vpack.c.b16 %v2745, %v2741
    %v2794 = vpack.c.b16 %v2746, %v2742
    %v2795 = vpack.c.b16 %v2747, %v2743
    %v2796 = vpack.c.b16 %v2752, %v2748
    %v2797 = vpack.c.b16 %v2753, %v2749
    %v2798 = vpack.c.b16 %v2754, %v2750
    %v2799 = vpack.c.b16 %v2755, %v2751
    %v2800 = vpack.c.b16 %v2760, %v2756
    %v2801 = vpack.c.b16 %v2761, %v2757
    %v2802 = vpack.c.b16 %v2762, %v2758
    %v2803 = vpack.c.b16 %v2763, %v2759
    %v2804 = vpack.c.b16 %v2768, %v2764
    %v2805 = vpack.c.b16 %v2769, %v2765
    %v2806 = vpack.c.b16 %v2770, %v2766
    %v2807 = vpack.c.b16 %v2771, %v2767
    %v2808 = vpack.c.b16 %v2776, %v2772
    %v2809 = vpack.c.b16 %v2777, %v2773
    %v2810 = vpack.c.b16 %v2778, %v2774
    %v2811 = vpack.c.b16 %v2779, %v2775
    %2844 = vmatprep.subr.bf16.mxu0 %v2781
    %2845 = vmatpush1.bf16.msra.mxu0 %v2780
    %2846 = vmatprep.subr.bf16.mxu0 %v2785
    %2847 = vmatpush1.bf16.msra.mxu0 %v2784
    %2848 = vmatprep.subr.bf16.mxu0 %v2789
    %2849 = vmatpush1.bf16.msra.mxu0 %v2788
    %2850 = vmatprep.subr.bf16.mxu0 %v2793
    %2851 = vmatpush1.bf16.msra.mxu0 %v2792
    %2852 = vmatprep.subr.bf16.mxu0 %v2797
    %2853 = vmatpush1.bf16.msra.mxu0 %v2796
    %2854 = vmatprep.subr.bf16.mxu0 %v2801
    %2855 = vmatpush1.bf16.msra.mxu0 %v2800
    %2856 = vmatprep.subr.bf16.mxu0 %v2805
    %2857 = vmatpush1.bf16.msra.mxu0 %v2804
    %2858 = vmatprep.subr.bf16.mxu0 %v2809
    %2859 = vmatpush1.bf16.msra.mxu0 %v2808
    %2860 = vmatprep.subr.bf16.mxu0 0
    %2861 = vmatpush1.bf16.msra.mxu0 0
    %2862 = vmatprep.subr.bf16.mxu0 0
    %2863 = vmatpush1.bf16.msra.mxu0 0
    %2864 = vmatprep.subr.bf16.mxu0 0
    %2865 = vmatpush1.bf16.msra.mxu0 0
    %2866 = vmatprep.subr.bf16.mxu0 0
    %2867 = vmatpush1.bf16.msra.mxu0 0
    %2868 = vmatprep.subr.bf16.mxu0 0
    %2869 = vmatpush1.bf16.msra.mxu0 0
    %2870 = vmatprep.subr.bf16.mxu0 0
    %2871 = vmatpush1.bf16.msra.mxu0 0
    %2872 = vmatprep.subr.bf16.mxu0 0
    %2873 = vmatpush1.bf16.msra.mxu0 0
    %2874 = vmatprep.subr.bf16.mxu0 0
    %2875 = vmatpush1.bf16.msra.mxu0 0
    %2876 = vmatprep.mubr.bf16.mxu0 0
    %2877 = vmatmul.mubr.bf16.gmra.mrb[0].mxu0 %v2651
    %v2878 = vpop.f32.mrb[0].mxu0
    %v2879 = vadd.f32 0.0, %v2878
    %v2880 = vpop.f32.mrb[0].mxu0
    %v2881 = vadd.f32 0.0, %v2880
    %v2882 = vpop.f32.mrb[0].mxu0
    %v2883 = vpop.f32.mrb[0].mxu0
    %2884 = vdwg.mxu0
    %2885 = vmatprep.subr.bf16.mxu0 %v2783
    %2886 = vmatpush1.bf16.msra.mxu0 %v2782
    %2887 = vmatprep.subr.bf16.mxu0 %v2787
    %2888 = vmatpush1.bf16.msra.mxu0 %v2786
    %2889 = vmatprep.subr.bf16.mxu0 %v2791
    %2890 = vmatpush1.bf16.msra.mxu0 %v2790
    %2891 = vmatprep.subr.bf16.mxu0 %v2795
    %2892 = vmatpush1.bf16.msra.mxu0 %v2794
    %2893 = vmatprep.subr.bf16.mxu0 %v2799
    %2894 = vmatpush1.bf16.msra.mxu0 %v2798
    %2895 = vmatprep.subr.bf16.mxu0 %v2803
    %2896 = vmatpush1.bf16.msra.mxu0 %v2802
    %2897 = vmatprep.subr.bf16.mxu0 %v2807
    %2898 = vmatpush1.bf16.msra.mxu0 %v2806
    %2899 = vmatprep.subr.bf16.mxu0 %v2811
    %2900 = vmatpush1.bf16.msra.mxu0 %v2810
    %2901 = vmatprep.subr.bf16.mxu0 0
    %2902 = vmatpush1.bf16.msra.mxu0 0
    %2903 = vmatprep.subr.bf16.mxu0 0
    %2904 = vmatpush1.bf16.msra.mxu0 0
    %2905 = vmatprep.subr.bf16.mxu0 0
    %2906 = vmatpush1.bf16.msra.mxu0 0
    %2907 = vmatprep.subr.bf16.mxu0 0
    %2908 = vmatpush1.bf16.msra.mxu0 0
    %2909 = vmatprep.subr.bf16.mxu0 0
    %2910 = vmatpush1.bf16.msra.mxu0 0
    %2911 = vmatprep.subr.bf16.mxu0 0
    %2912 = vmatpush1.bf16.msra.mxu0 0
    %2913 = vmatprep.subr.bf16.mxu0 0
    %2914 = vmatpush1.bf16.msra.mxu0 0
    %2915 = vmatprep.subr.bf16.mxu0 0
    %2916 = vmatpush1.bf16.msra.mxu0 0
    %2917 = vmatprep.mubr.bf16.mxu0 0
    %2918 = vmatmul.mubr.bf16.gmra.mrb[0].mxu0 %v2651
    %v2919 = vpop.f32.mrb[0].mxu0
    %v2920 = vadd.f32 0.0, %v2919
    %v2921 = vpop.f32.mrb[0].mxu0
    %v2922 = vadd.f32 0.0, %v2921
    %v2923 = vpop.f32.mrb[0].mxu0
    %v2924 = vpop.f32.mrb[0].mxu0
    %2925 = vdwg.mxu0
    %v2926 = vadd.f32 %v2647, %v2879
    %v2927 = vadd.f32 %v2648, %v2881
    %v2928 = vadd.f32 %v2649, %v2920
    %v2929 = vadd.f32 %v2650, %v2922
    %v2930 = vmul.f32 %v2926, 0.5
    %v2931 = vtanh.pop %v2930
    %v2932 = vmul.f32 %v2931, 0.5
    %v2933 = vadd.f32 %v2932, 0.5
    %v2934 = vmul.f32 %v2927, 0.5
    %v2935 = vtanh.pop %v2934
    %v2936 = vmul.f32 %v2935, 0.5
    %v2937 = vadd.f32 %v2936, 0.5
    %v2938 = vtanh.pop %v2928
    %v2939 = vmul.f32 %v2929, 0.5
    %v2940 = vtanh.pop %v2939
    %v2941 = vmul.f32 %v2940, 0.5
    %v2942 = vadd.f32 %v2941, 0.5
    %v2943 = vmul.f32 %v2937, %v2641
    %v2944 = vmul.f32 %v2933, %v2938
    %v2945 = vadd.f32 %v2943, %v2944
    %v2946 = vtanh.pop %v2945
    %v2947 = vmul.f32 %v2942, %v2946
    %s2948 = scalar_lea.vmem [#allocation3], 56
    %2949 = vst [vmem:[%s2948] sm:$0xff] %v2947
    %v2950 = vld [vmem:[#allocation3] sm:$0xff]
    %v2951 = vld [vmem:[#allocation3 + $0x8] sm:$0xff]
    %v2952 = vld [vmem:[#allocation3 + $0x10] sm:$0xff]
    %v2953 = vld [vmem:[#allocation3 + $0x18] sm:$0xff]
    %v2954 = vld [vmem:[#allocation3 + $0x20] sm:$0xff]
    %v2955 = vld [vmem:[#allocation3 + $0x28] sm:$0xff]
    %v2956 = vld [vmem:[#allocation3 + $0x30] sm:$0xff]
    %v2957 = vld [vmem:[#allocation3 + $0x38] sm:$0xff]
    %v2958 = vpack.c.bf16 %v2951, %v2950
    %v2959 = vpack.c.bf16 %v2953, %v2952
    %v2960 = vpack.c.bf16 %v2955, %v2954
    %v2961 = vpack.c.bf16 %v2957, %v2956
    %v2962 = vld [vmem:[#allocation8] sm:$0xff]
    %v2963 = vld [vmem:[#allocation8 + $0x8] sm:$0xff]
    %v2964 = vld [vmem:[#allocation8 + $0x10] sm:$0xff]
    %v2965 = vld [vmem:[#allocation8 + $0x18] sm:$0xff]
    %v2966 = vld [vmem:[#allocation8 + $0x20] sm:$0xff]
    %v2967 = vld [vmem:[#allocation8 + $0x28] sm:$0xff]
    %v2968 = vld [vmem:[#allocation8 + $0x30] sm:$0xff]
    %v2969 = vld [vmem:[#allocation8 + $0x38] sm:$0xff]
    %v2970 = vld [vmem:[#allocation8 + $0x40] sm:$0xff]
    %v2971 = vld [vmem:[#allocation8 + $0x48] sm:$0xff]
    %v2972 = vld [vmem:[#allocation8 + $0x50] sm:$0xff]
    %v2973 = vld [vmem:[#allocation8 + $0x58] sm:$0xff]
    %v2974 = vld [vmem:[#allocation8 + $0x60] sm:$0xff]
    %v2975 = vld [vmem:[#allocation8 + $0x68] sm:$0xff]
    %v2976 = vld [vmem:[#allocation8 + $0x70] sm:$0xff]
    %v2977 = vld [vmem:[#allocation8 + $0x78] sm:$0xff]
    %v2978 = vld [vmem:[#allocation8 + $0x80] sm:$0xff]
    %v2979 = vld [vmem:[#allocation8 + $0x88] sm:$0xff]
    %v2980 = vld [vmem:[#allocation8 + $0x90] sm:$0xff]
    %v2981 = vld [vmem:[#allocation8 + $0x98] sm:$0xff]
    %v2982 = vld [vmem:[#allocation8 + $0xa0] sm:$0xff]
    %v2983 = vld [vmem:[#allocation8 + $0xa8] sm:$0xff]
    %v2984 = vld [vmem:[#allocation8 + $0xb0] sm:$0xff]
    %v2985 = vld [vmem:[#allocation8 + $0xb8] sm:$0xff]
    %v2986 = vld [vmem:[#allocation8 + $0xc0] sm:$0xff]
    %v2987 = vld [vmem:[#allocation8 + $0xc8] sm:$0xff]
    %v2988 = vld [vmem:[#allocation8 + $0xd0] sm:$0xff]
    %v2989 = vld [vmem:[#allocation8 + $0xd8] sm:$0xff]
    %v2990 = vld [vmem:[#allocation8 + $0xe0] sm:$0xff]
    %v2991 = vld [vmem:[#allocation8 + $0xe8] sm:$0xff]
    %v2992 = vld [vmem:[#allocation8 + $0xf0] sm:$0xff]
    %v2993 = vld [vmem:[#allocation8 + $0xf8] sm:$0xff]
    %v2994 = vld [vmem:[%s6] sm:$0xf]
    %v2996 = vlaneseq
    %v2997 = vshrl.u32 %v2996, 7
    %v2998 = vsub.s32 0, %v2997
    %v2999 = vrot.slane %v2994, %v2998
    %v3000 = vlaneseq
    %v3001 = vshrl.u32 %v3000, 7
    %v3002 = vsub.s32 1, %v3001
    %v3003 = vrot.slane %v2994, %v3002
    %v3004 = vlaneseq
    %v3005 = vshrl.u32 %v3004, 7
    %v3006 = vsub.s32 2, %v3005
    %v3007 = vrot.slane %v2994, %v3006
    %v3008 = vlaneseq
    %v3009 = vshrl.u32 %v3008, 7
    %v3010 = vsub.s32 3, %v3009
    %v3011 = vrot.slane %v2994, %v3010
    %v3048 = vunpack.c.l.b16 %v2962
    %v3049 = vunpack.c.h.b16 %v2962
    %v3050 = vunpack.c.l.b16 %v2963
    %v3051 = vunpack.c.h.b16 %v2963
    %v3052 = vunpack.c.l.b16 %v2964
    %v3053 = vunpack.c.h.b16 %v2964
    %v3054 = vunpack.c.l.b16 %v2965
    %v3055 = vunpack.c.h.b16 %v2965
    %v3056 = vunpack.c.l.b16 %v2966
    %v3057 = vunpack.c.h.b16 %v2966
    %v3058 = vunpack.c.l.b16 %v2967
    %v3059 = vunpack.c.h.b16 %v2967
    %v3060 = vunpack.c.l.b16 %v2968
    %v3061 = vunpack.c.h.b16 %v2968
    %v3062 = vunpack.c.l.b16 %v2969
    %v3063 = vunpack.c.h.b16 %v2969
    %v3064 = vunpack.c.l.b16 %v2970
    %v3065 = vunpack.c.h.b16 %v2970
    %v3066 = vunpack.c.l.b16 %v2971
    %v3067 = vunpack.c.h.b16 %v2971
    %v3068 = vunpack.c.l.b16 %v2972
    %v3069 = vunpack.c.h.b16 %v2972
    %v3070 = vunpack.c.l.b16 %v2973
    %v3071 = vunpack.c.h.b16 %v2973
    %v3072 = vunpack.c.l.b16 %v2974
    %v3073 = vunpack.c.h.b16 %v2974
    %v3074 = vunpack.c.l.b16 %v2975
    %v3075 = vunpack.c.h.b16 %v2975
    %v3076 = vunpack.c.l.b16 %v2976
    %v3077 = vunpack.c.h.b16 %v2976
    %v3078 = vunpack.c.l.b16 %v2977
    %v3079 = vunpack.c.h.b16 %v2977
    %v3080 = vunpack.c.l.b16 %v2978
    %v3081 = vunpack.c.h.b16 %v2978
    %v3082 = vunpack.c.l.b16 %v2979
    %v3083 = vunpack.c.h.b16 %v2979
    %v3084 = vunpack.c.l.b16 %v2980
    %v3085 = vunpack.c.h.b16 %v2980
    %v3086 = vunpack.c.l.b16 %v2981
    %v3087 = vunpack.c.h.b16 %v2981
    %v3088 = vunpack.c.l.b16 %v2982
    %v3089 = vunpack.c.h.b16 %v2982
    %v3090 = vunpack.c.l.b16 %v2983
    %v3091 = vunpack.c.h.b16 %v2983
    %v3092 = vunpack.c.l.b16 %v2984
    %v3093 = vunpack.c.h.b16 %v2984
    %v3094 = vunpack.c.l.b16 %v2985
    %v3095 = vunpack.c.h.b16 %v2985
    %v3096 = vunpack.c.l.b16 %v2986
    %v3097 = vunpack.c.h.b16 %v2986
    %v3098 = vunpack.c.l.b16 %v2987
    %v3099 = vunpack.c.h.b16 %v2987
    %v3100 = vunpack.c.l.b16 %v2988
    %v3101 = vunpack.c.h.b16 %v2988
    %v3102 = vunpack.c.l.b16 %v2989
    %v3103 = vunpack.c.h.b16 %v2989
    %v3104 = vunpack.c.l.b16 %v2990
    %v3105 = vunpack.c.h.b16 %v2990
    %v3106 = vunpack.c.l.b16 %v2991
    %v3107 = vunpack.c.h.b16 %v2991
    %v3108 = vunpack.c.l.b16 %v2992
    %v3109 = vunpack.c.h.b16 %v2992
    %v3110 = vunpack.c.l.b16 %v2993
    %v3111 = vunpack.c.h.b16 %v2993
    %v3112 = vpack.c.b16 %v3052, %v3048
    %v3113 = vpack.c.b16 %v3053, %v3049
    %v3114 = vpack.c.b16 %v3054, %v3050
    %v3115 = vpack.c.b16 %v3055, %v3051
    %v3116 = vpack.c.b16 %v3060, %v3056
    %v3117 = vpack.c.b16 %v3061, %v3057
    %v3118 = vpack.c.b16 %v3062, %v3058
    %v3119 = vpack.c.b16 %v3063, %v3059
    %v3120 = vpack.c.b16 %v3068, %v3064
    %v3121 = vpack.c.b16 %v3069, %v3065
    %v3122 = vpack.c.b16 %v3070, %v3066
    %v3123 = vpack.c.b16 %v3071, %v3067
    %v3124 = vpack.c.b16 %v3076, %v3072
    %v3125 = vpack.c.b16 %v3077, %v3073
    %v3126 = vpack.c.b16 %v3078, %v3074
    %v3127 = vpack.c.b16 %v3079, %v3075
    %v3128 = vpack.c.b16 %v3084, %v3080
    %v3129 = vpack.c.b16 %v3085, %v3081
    %v3130 = vpack.c.b16 %v3086, %v3082
    %v3131 = vpack.c.b16 %v3087, %v3083
    %v3132 = vpack.c.b16 %v3092, %v3088
    %v3133 = vpack.c.b16 %v3093, %v3089
    %v3134 = vpack.c.b16 %v3094, %v3090
    %v3135 = vpack.c.b16 %v3095, %v3091
    %v3136 = vpack.c.b16 %v3100, %v3096
    %v3137 = vpack.c.b16 %v3101, %v3097
    %v3138 = vpack.c.b16 %v3102, %v3098
    %v3139 = vpack.c.b16 %v3103, %v3099
    %v3140 = vpack.c.b16 %v3108, %v3104
    %v3141 = vpack.c.b16 %v3109, %v3105
    %v3142 = vpack.c.b16 %v3110, %v3106
    %v3143 = vpack.c.b16 %v3111, %v3107
    %3176 = vmatprep.subr.bf16.mxu0 %v3113
    %3177 = vmatpush1.bf16.msra.mxu0 %v3112
    %3178 = vmatprep.subr.bf16.mxu0 %v3117
    %3179 = vmatpush1.bf16.msra.mxu0 %v3116
    %3180 = vmatprep.subr.bf16.mxu0 %v3121
    %3181 = vmatpush1.bf16.msra.mxu0 %v3120
    %3182 = vmatprep.subr.bf16.mxu0 %v3125
    %3183 = vmatpush1.bf16.msra.mxu0 %v3124
    %3184 = vmatprep.subr.bf16.mxu0 %v3129
    %3185 = vmatpush1.bf16.msra.mxu0 %v3128
    %3186 = vmatprep.subr.bf16.mxu0 %v3133
    %3187 = vmatpush1.bf16.msra.mxu0 %v3132
    %3188 = vmatprep.subr.bf16.mxu0 %v3137
    %3189 = vmatpush1.bf16.msra.mxu0 %v3136
    %3190 = vmatprep.subr.bf16.mxu0 %v3141
    %3191 = vmatpush1.bf16.msra.mxu0 %v3140
    %3192 = vmatprep.subr.bf16.mxu0 0
    %3193 = vmatpush1.bf16.msra.mxu0 0
    %3194 = vmatprep.subr.bf16.mxu0 0
    %3195 = vmatpush1.bf16.msra.mxu0 0
    %3196 = vmatprep.subr.bf16.mxu0 0
    %3197 = vmatpush1.bf16.msra.mxu0 0
    %3198 = vmatprep.subr.bf16.mxu0 0
    %3199 = vmatpush1.bf16.msra.mxu0 0
    %3200 = vmatprep.subr.bf16.mxu0 0
    %3201 = vmatpush1.bf16.msra.mxu0 0
    %3202 = vmatprep.subr.bf16.mxu0 0
    %3203 = vmatpush1.bf16.msra.mxu0 0
    %3204 = vmatprep.subr.bf16.mxu0 0
    %3205 = vmatpush1.bf16.msra.mxu0 0
    %3206 = vmatprep.subr.bf16.mxu0 0
    %3207 = vmatpush1.bf16.msra.mxu0 0
    %3208 = vmatprep.mubr.bf16.mxu0 0
    %3209 = vmatmul.mubr.bf16.gmra.mrb[0].mxu0 %v2958
    %v3210 = vpop.f32.mrb[0].mxu0
    %v3211 = vadd.f32 %v2999, %v3210
    %v3212 = vpop.f32.mrb[0].mxu0
    %v3213 = vadd.f32 %v3003, %v3212
    %v3214 = vpop.f32.mrb[0].mxu0
    %v3215 = vadd.f32 %v2999, %v3214
    %v3216 = vpop.f32.mrb[0].mxu0
    %v3217 = vadd.f32 %v3003, %v3216
    %3218 = vmatprep.mubr.bf16.mxu0 0
    %3219 = vmatmul.mubr.bf16.gmra.mrb[0].mxu0 %v2959
    %v3220 = vpop.f32.mrb[0].mxu0
    %v3221 = vadd.f32 %v2999, %v3220
    %v3222 = vpop.f32.mrb[0].mxu0
    %v3223 = vadd.f32 %v3003, %v3222
    %v3224 = vpop.f32.mrb[0].mxu0
    %v3225 = vadd.f32 %v2999, %v3224
    %v3226 = vpop.f32.mrb[0].mxu0
    %v3227 = vadd.f32 %v3003, %v3226
    %3228 = vmatprep.mubr.bf16.mxu0 0
    %3229 = vmatmul.mubr.bf16.gmra.mrb[0].mxu0 %v2960
    %v3230 = vpop.f32.mrb[0].mxu0
    %v3231 = vadd.f32 %v2999, %v3230
    %v3232 = vpop.f32.mrb[0].mxu0
    %v3233 = vadd.f32 %v3003, %v3232
    %v3234 = vpop.f32.mrb[0].mxu0
    %v3235 = vadd.f32 %v2999, %v3234
    %v3236 = vpop.f32.mrb[0].mxu0
    %v3237 = vadd.f32 %v3003, %v3236
    %3238 = vmatprep.mubr.bf16.mxu0 0
    %3239 = vmatmul.mubr.bf16.gmra.mrb[0].mxu0 %v2961
    %v3240 = vpop.f32.mrb[0].mxu0
    %v3241 = vadd.f32 %v2999, %v3240
    %v3242 = vpop.f32.mrb[0].mxu0
    %v3243 = vadd.f32 %v3003, %v3242
    %v3244 = vpop.f32.mrb[0].mxu0
    %v3245 = vadd.f32 %v2999, %v3244
    %v3246 = vpop.f32.mrb[0].mxu0
    %v3247 = vadd.f32 %v3003, %v3246
    %3248 = vdwg.mxu0
    %3249 = vmatprep.subr.bf16.mxu0 %v3115
    %3250 = vmatpush1.bf16.msra.mxu0 %v3114
    %3251 = vmatprep.subr.bf16.mxu0 %v3119
    %3252 = vmatpush1.bf16.msra.mxu0 %v3118
    %3253 = vmatprep.subr.bf16.mxu0 %v3123
    %3254 = vmatpush1.bf16.msra.mxu0 %v3122
    %3255 = vmatprep.subr.bf16.mxu0 %v3127
    %3256 = vmatpush1.bf16.msra.mxu0 %v3126
    %3257 = vmatprep.subr.bf16.mxu0 %v3131
    %3258 = vmatpush1.bf16.msra.mxu0 %v3130
    %3259 = vmatprep.subr.bf16.mxu0 %v3135
    %3260 = vmatpush1.bf16.msra.mxu0 %v3134
    %3261 = vmatprep.subr.bf16.mxu0 %v3139
    %3262 = vmatpush1.bf16.msra.mxu0 %v3138
    %3263 = vmatprep.subr.bf16.mxu0 %v3143
    %3264 = vmatpush1.bf16.msra.mxu0 %v3142
    %3265 = vmatprep.subr.bf16.mxu0 0
    %3266 = vmatpush1.bf16.msra.mxu0 0
    %3267 = vmatprep.subr.bf16.mxu0 0
    %3268 = vmatpush1.bf16.msra.mxu0 0
    %3269 = vmatprep.subr.bf16.mxu0 0
    %3270 = vmatpush1.bf16.msra.mxu0 0
    %3271 = vmatprep.subr.bf16.mxu0 0
    %3272 = vmatpush1.bf16.msra.mxu0 0
    %3273 = vmatprep.subr.bf16.mxu0 0
    %3274 = vmatpush1.bf16.msra.mxu0 0
    %3275 = vmatprep.subr.bf16.mxu0 0
    %3276 = vmatpush1.bf16.msra.mxu0 0
    %3277 = vmatprep.subr.bf16.mxu0 0
    %3278 = vmatpush1.bf16.msra.mxu0 0
    %3279 = vmatprep.subr.bf16.mxu0 0
    %3280 = vmatpush1.bf16.msra.mxu0 0
    %3281 = vmatprep.mubr.bf16.mxu0 0
    %3282 = vmatmul.mubr.bf16.gmra.mrb[0].mxu0 %v2958
    %v3283 = vpop.f32.mrb[0].mxu0
    %v3284 = vadd.f32 %v3007, %v3283
    %v3285 = vpop.f32.mrb[0].mxu0
    %v3286 = vadd.f32 %v3011, %v3285
    %v3287 = vpop.f32.mrb[0].mxu0
    %v3288 = vadd.f32 %v3007, %v3287
    %v3289 = vpop.f32.mrb[0].mxu0
    %v3290 = vadd.f32 %v3011, %v3289
    %3291 = vmatprep.mubr.bf16.mxu0 0
    %3292 = vmatmul.mubr.bf16.gmra.mrb[0].mxu0 %v2959
    %v3293 = vpop.f32.mrb[0].mxu0
    %v3294 = vadd.f32 %v3007, %v3293
    %v3295 = vpop.f32.mrb[0].mxu0
    %v3296 = vadd.f32 %v3011, %v3295
    %v3297 = vpop.f32.mrb[0].mxu0
    %v3298 = vadd.f32 %v3007, %v3297
    %v3299 = vpop.f32.mrb[0].mxu0
    %v3300 = vadd.f32 %v3011, %v3299
    %3301 = vmatprep.mubr.bf16.mxu0 0
    %3302 = vmatmul.mubr.bf16.gmra.mrb[0].mxu0 %v2960
    %v3303 = vpop.f32.mrb[0].mxu0
    %v3304 = vadd.f32 %v3007, %v3303
    %v3305 = vpop.f32.mrb[0].mxu0
    %v3306 = vadd.f32 %v3011, %v3305
    %v3307 = vpop.f32.mrb[0].mxu0
    %v3308 = vadd.f32 %v3007, %v3307
    %v3309 = vpop.f32.mrb[0].mxu0
    %v3310 = vadd.f32 %v3011, %v3309
    %3311 = vmatprep.mubr.bf16.mxu0 0
    %3312 = vmatmul.mubr.bf16.gmra.mrb[0].mxu0 %v2961
    %v3313 = vpop.f32.mrb[0].mxu0
    %v3314 = vadd.f32 %v3007, %v3313
    %v3315 = vpop.f32.mrb[0].mxu0
    %v3316 = vadd.f32 %v3011, %v3315
    %v3317 = vpop.f32.mrb[0].mxu0
    %v3318 = vadd.f32 %v3007, %v3317
    %v3319 = vpop.f32.mrb[0].mxu0
    %v3320 = vadd.f32 %v3011, %v3319
    %3321 = vdwg.mxu0
    %3322 = vst [vmem:[#allocation2] sm:$0xff] %v3211
    %3323 = vst [vmem:[#allocation2 + $0x8] sm:$0xff] %v3213
    %3324 = vst [vmem:[#allocation2 + $0x10] sm:$0xff] %v3284
    %3325 = vst [vmem:[#allocation2 + $0x18] sm:$0xff] %v3286
    %3326 = vst [vmem:[#allocation2 + $0x20] sm:$0xff] %v3215
    %3327 = vst [vmem:[#allocation2 + $0x28] sm:$0xff] %v3217
    %3328 = vst [vmem:[#allocation2 + $0x30] sm:$0xff] %v3288
    %3329 = vst [vmem:[#allocation2 + $0x38] sm:$0xff] %v3290
    %3330 = vst [vmem:[#allocation2 + $0x40] sm:$0xff] %v3221
    %3331 = vst [vmem:[#allocation2 + $0x48] sm:$0xff] %v3223
    %3332 = vst [vmem:[#allocation2 + $0x50] sm:$0xff] %v3294
    %3333 = vst [vmem:[#allocation2 + $0x58] sm:$0xff] %v3296
    %3334 = vst [vmem:[#allocation2 + $0x60] sm:$0xff] %v3225
    %3335 = vst [vmem:[#allocation2 + $0x68] sm:$0xff] %v3227
    %3336 = vst [vmem:[#allocation2 + $0x70] sm:$0xff] %v3298
    %3337 = vst [vmem:[#allocation2 + $0x78] sm:$0xff] %v3300
    %3338 = vst [vmem:[#allocation2 + $0x80] sm:$0xff] %v3231
    %3339 = vst [vmem:[#allocation2 + $0x88] sm:$0xff] %v3233
    %3340 = vst [vmem:[#allocation2 + $0x90] sm:$0xff] %v3304
    %3341 = vst [vmem:[#allocation2 + $0x98] sm:$0xff] %v3306
    %3342 = vst [vmem:[#allocation2 + $0xa0] sm:$0xff] %v3235
    %3343 = vst [vmem:[#allocation2 + $0xa8] sm:$0xff] %v3237
    %3344 = vst [vmem:[#allocation2 + $0xb0] sm:$0xff] %v3308
    %3345 = vst [vmem:[#allocation2 + $0xb8] sm:$0xff] %v3310
    %3346 = vst [vmem:[#allocation2 + $0xc0] sm:$0xff] %v3241
    %3347 = vst [vmem:[#allocation2 + $0xc8] sm:$0xff] %v3243
    %3348 = vst [vmem:[#allocation2 + $0xd0] sm:$0xff] %v3314
    %3349 = vst [vmem:[#allocation2 + $0xd8] sm:$0xff] %v3316
    %3350 = vst [vmem:[#allocation2 + $0xe0] sm:$0xff] %v3245
    %3351 = vst [vmem:[#allocation2 + $0xe8] sm:$0xff] %v3247
    %3352 = vst [vmem:[#allocation2 + $0xf0] sm:$0xff] %v3318
    %3353 = vst [vmem:[#allocation2 + $0xf8] sm:$0xff] %v3320
    %s3354 = scalar_lea.vmem %s9, 8
    %v3355 = vld [vmem:[%s3354] sm:$0xff]
    %s3356 = scalar_lea.vmem %s10, 8
    %v3357 = vld [vmem:[%s3356] sm:$0xff]
    %v3358 = vld [vmem:[#allocation2] sm:$0xff]
    %v3359 = vld [vmem:[#allocation2 + $0x8] sm:$0xff]
    %v3360 = vld [vmem:[#allocation2 + $0x10] sm:$0xff]
    %v3361 = vld [vmem:[#allocation2 + $0x18] sm:$0xff]
    %v3362 = vpack.c.bf16 %v3355, %v3355
    %v3363 = vld [vmem:[#allocation9] sm:$0xff]
    %v3364 = vld [vmem:[#allocation9 + $0x8] sm:$0xff]
    %v3365 = vld [vmem:[#allocation9 + $0x10] sm:$0xff]
    %v3366 = vld [vmem:[#allocation9 + $0x18] sm:$0xff]
    %v3367 = vld [vmem:[#allocation9 + $0x20] sm:$0xff]
    %v3368 = vld [vmem:[#allocation9 + $0x28] sm:$0xff]
    %v3369 = vld [vmem:[#allocation9 + $0x30] sm:$0xff]
    %v3370 = vld [vmem:[#allocation9 + $0x38] sm:$0xff]
    %v3371 = vld [vmem:[#allocation9 + $0x40] sm:$0xff]
    %v3372 = vld [vmem:[#allocation9 + $0x48] sm:$0xff]
    %v3373 = vld [vmem:[#allocation9 + $0x50] sm:$0xff]
    %v3374 = vld [vmem:[#allocation9 + $0x58] sm:$0xff]
    %v3375 = vld [vmem:[#allocation9 + $0x60] sm:$0xff]
    %v3376 = vld [vmem:[#allocation9 + $0x68] sm:$0xff]
    %v3377 = vld [vmem:[#allocation9 + $0x70] sm:$0xff]
    %v3378 = vld [vmem:[#allocation9 + $0x78] sm:$0xff]
    %v3379 = vld [vmem:[#allocation9 + $0x80] sm:$0xff]
    %v3380 = vld [vmem:[#allocation9 + $0x88] sm:$0xff]
    %v3381 = vld [vmem:[#allocation9 + $0x90] sm:$0xff]
    %v3382 = vld [vmem:[#allocation9 + $0x98] sm:$0xff]
    %v3383 = vld [vmem:[#allocation9 + $0xa0] sm:$0xff]
    %v3384 = vld [vmem:[#allocation9 + $0xa8] sm:$0xff]
    %v3385 = vld [vmem:[#allocation9 + $0xb0] sm:$0xff]
    %v3386 = vld [vmem:[#allocation9 + $0xb8] sm:$0xff]
    %v3387 = vld [vmem:[#allocation9 + $0xc0] sm:$0xff]
    %v3388 = vld [vmem:[#allocation9 + $0xc8] sm:$0xff]
    %v3389 = vld [vmem:[#allocation9 + $0xd0] sm:$0xff]
    %v3390 = vld [vmem:[#allocation9 + $0xd8] sm:$0xff]
    %v3391 = vld [vmem:[#allocation9 + $0xe0] sm:$0xff]
    %v3392 = vld [vmem:[#allocation9 + $0xe8] sm:$0xff]
    %v3393 = vld [vmem:[#allocation9 + $0xf0] sm:$0xff]
    %v3394 = vld [vmem:[#allocation9 + $0xf8] sm:$0xff]
    %v3427 = vunpack.c.l.b16 %v3363
    %v3428 = vunpack.c.h.b16 %v3363
    %v3429 = vunpack.c.l.b16 %v3364
    %v3430 = vunpack.c.h.b16 %v3364
    %v3431 = vunpack.c.l.b16 %v3365
    %v3432 = vunpack.c.h.b16 %v3365
    %v3433 = vunpack.c.l.b16 %v3366
    %v3434 = vunpack.c.h.b16 %v3366
    %v3435 = vunpack.c.l.b16 %v3367
    %v3436 = vunpack.c.h.b16 %v3367
    %v3437 = vunpack.c.l.b16 %v3368
    %v3438 = vunpack.c.h.b16 %v3368
    %v3439 = vunpack.c.l.b16 %v3369
    %v3440 = vunpack.c.h.b16 %v3369
    %v3441 = vunpack.c.l.b16 %v3370
    %v3442 = vunpack.c.h.b16 %v3370
    %v3443 = vunpack.c.l.b16 %v3371
    %v3444 = vunpack.c.h.b16 %v3371
    %v3445 = vunpack.c.l.b16 %v3372
    %v3446 = vunpack.c.h.b16 %v3372
    %v3447 = vunpack.c.l.b16 %v3373
    %v3448 = vunpack.c.h.b16 %v3373
    %v3449 = vunpack.c.l.b16 %v3374
    %v3450 = vunpack.c.h.b16 %v3374
    %v3451 = vunpack.c.l.b16 %v3375
    %v3452 = vunpack.c.h.b16 %v3375
    %v3453 = vunpack.c.l.b16 %v3376
    %v3454 = vunpack.c.h.b16 %v3376
    %v3455 = vunpack.c.l.b16 %v3377
    %v3456 = vunpack.c.h.b16 %v3377
    %v3457 = vunpack.c.l.b16 %v3378
    %v3458 = vunpack.c.h.b16 %v3378
    %v3459 = vunpack.c.l.b16 %v3379
    %v3460 = vunpack.c.h.b16 %v3379
    %v3461 = vunpack.c.l.b16 %v3380
    %v3462 = vunpack.c.h.b16 %v3380
    %v3463 = vunpack.c.l.b16 %v3381
    %v3464 = vunpack.c.h.b16 %v3381
    %v3465 = vunpack.c.l.b16 %v3382
    %v3466 = vunpack.c.h.b16 %v3382
    %v3467 = vunpack.c.l.b16 %v3383
    %v3468 = vunpack.c.h.b16 %v3383
    %v3469 = vunpack.c.l.b16 %v3384
    %v3470 = vunpack.c.h.b16 %v3384
    %v3471 = vunpack.c.l.b16 %v3385
    %v3472 = vunpack.c.h.b16 %v3385
    %v3473 = vunpack.c.l.b16 %v3386
    %v3474 = vunpack.c.h.b16 %v3386
    %v3475 = vunpack.c.l.b16 %v3387
    %v3476 = vunpack.c.h.b16 %v3387
    %v3477 = vunpack.c.l.b16 %v3388
    %v3478 = vunpack.c.h.b16 %v3388
    %v3479 = vunpack.c.l.b16 %v3389
    %v3480 = vunpack.c.h.b16 %v3389
    %v3481 = vunpack.c.l.b16 %v3390
    %v3482 = vunpack.c.h.b16 %v3390
    %v3483 = vunpack.c.l.b16 %v3391
    %v3484 = vunpack.c.h.b16 %v3391
    %v3485 = vunpack.c.l.b16 %v3392
    %v3486 = vunpack.c.h.b16 %v3392
    %v3487 = vunpack.c.l.b16 %v3393
    %v3488 = vunpack.c.h.b16 %v3393
    %v3489 = vunpack.c.l.b16 %v3394
    %v3490 = vunpack.c.h.b16 %v3394
    %v3491 = vpack.c.b16 %v3431, %v3427
    %v3492 = vpack.c.b16 %v3432, %v3428
    %v3493 = vpack.c.b16 %v3433, %v3429
    %v3494 = vpack.c.b16 %v3434, %v3430
    %v3495 = vpack.c.b16 %v3439, %v3435
    %v3496 = vpack.c.b16 %v3440, %v3436
    %v3497 = vpack.c.b16 %v3441, %v3437
    %v3498 = vpack.c.b16 %v3442, %v3438
    %v3499 = vpack.c.b16 %v3447, %v3443
    %v3500 = vpack.c.b16 %v3448, %v3444
    %v3501 = vpack.c.b16 %v3449, %v3445
    %v3502 = vpack.c.b16 %v3450, %v3446
    %v3503 = vpack.c.b16 %v3455, %v3451
    %v3504 = vpack.c.b16 %v3456, %v3452
    %v3505 = vpack.c.b16 %v3457, %v3453
    %v3506 = vpack.c.b16 %v3458, %v3454
    %v3507 = vpack.c.b16 %v3463, %v3459
    %v3508 = vpack.c.b16 %v3464, %v3460
    %v3509 = vpack.c.b16 %v3465, %v3461
    %v3510 = vpack.c.b16 %v3466, %v3462
    %v3511 = vpack.c.b16 %v3471, %v3467
    %v3512 = vpack.c.b16 %v3472, %v3468
    %v3513 = vpack.c.b16 %v3473, %v3469
    %v3514 = vpack.c.b16 %v3474, %v3470
    %v3515 = vpack.c.b16 %v3479, %v3475
    %v3516 = vpack.c.b16 %v3480, %v3476
    %v3517 = vpack.c.b16 %v3481, %v3477
    %v3518 = vpack.c.b16 %v3482, %v3478
    %v3519 = vpack.c.b16 %v3487, %v3483
    %v3520 = vpack.c.b16 %v3488, %v3484
    %v3521 = vpack.c.b16 %v3489, %v3485
    %v3522 = vpack.c.b16 %v3490, %v3486
    %3555 = vmatprep.subr.bf16.mxu0 %v3492
    %3556 = vmatpush1.bf16.msra.mxu0 %v3491
    %3557 = vmatprep.subr.bf16.mxu0 %v3496
    %3558 = vmatpush1.bf16.msra.mxu0 %v3495
    %3559 = vmatprep.subr.bf16.mxu0 %v3500
    %3560 = vmatpush1.bf16.msra.mxu0 %v3499
    %3561 = vmatprep.subr.bf16.mxu0 %v3504
    %3562 = vmatpush1.bf16.msra.mxu0 %v3503
    %3563 = vmatprep.subr.bf16.mxu0 %v3508
    %3564 = vmatpush1.bf16.msra.mxu0 %v3507
    %3565 = vmatprep.subr.bf16.mxu0 %v3512
    %3566 = vmatpush1.bf16.msra.mxu0 %v3511
    %3567 = vmatprep.subr.bf16.mxu0 %v3516
    %3568 = vmatpush1.bf16.msra.mxu0 %v3515
    %3569 = vmatprep.subr.bf16.mxu0 %v3520
    %3570 = vmatpush1.bf16.msra.mxu0 %v3519
    %3571 = vmatprep.subr.bf16.mxu0 0
    %3572 = vmatpush1.bf16.msra.mxu0 0
    %3573 = vmatprep.subr.bf16.mxu0 0
    %3574 = vmatpush1.bf16.msra.mxu0 0
    %3575 = vmatprep.subr.bf16.mxu0 0
    %3576 = vmatpush1.bf16.msra.mxu0 0
    %3577 = vmatprep.subr.bf16.mxu0 0
    %3578 = vmatpush1.bf16.msra.mxu0 0
    %3579 = vmatprep.subr.bf16.mxu0 0
    %3580 = vmatpush1.bf16.msra.mxu0 0
    %3581 = vmatprep.subr.bf16.mxu0 0
    %3582 = vmatpush1.bf16.msra.mxu0 0
    %3583 = vmatprep.subr.bf16.mxu0 0
    %3584 = vmatpush1.bf16.msra.mxu0 0
    %3585 = vmatprep.subr.bf16.mxu0 0
    %3586 = vmatpush1.bf16.msra.mxu0 0
    %3587 = vmatprep.mubr.bf16.mxu0 0
    %3588 = vmatmul.mubr.bf16.gmra.mrb[0].mxu0 %v3362
    %v3589 = vpop.f32.mrb[0].mxu0
    %v3590 = vadd.f32 0.0, %v3589
    %v3591 = vpop.f32.mrb[0].mxu0
    %v3592 = vadd.f32 0.0, %v3591
    %v3593 = vpop.f32.mrb[0].mxu0
    %v3594 = vpop.f32.mrb[0].mxu0
    %3595 = vdwg.mxu0
    %3596 = vmatprep.subr.bf16.mxu0 %v3494
    %3597 = vmatpush1.bf16.msra.mxu0 %v3493
    %3598 = vmatprep.subr.bf16.mxu0 %v3498
    %3599 = vmatpush1.bf16.msra.mxu0 %v3497
    %3600 = vmatprep.subr.bf16.mxu0 %v3502
    %3601 = vmatpush1.bf16.msra.mxu0 %v3501
    %3602 = vmatprep.subr.bf16.mxu0 %v3506
    %3603 = vmatpush1.bf16.msra.mxu0 %v3505
    %3604 = vmatprep.subr.bf16.mxu0 %v3510
    %3605 = vmatpush1.bf16.msra.mxu0 %v3509
    %3606 = vmatprep.subr.bf16.mxu0 %v3514
    %3607 = vmatpush1.bf16.msra.mxu0 %v3513
    %3608 = vmatprep.subr.bf16.mxu0 %v3518
    %3609 = vmatpush1.bf16.msra.mxu0 %v3517
    %3610 = vmatprep.subr.bf16.mxu0 %v3522
    %3611 = vmatpush1.bf16.msra.mxu0 %v3521
    %3612 = vmatprep.subr.bf16.mxu0 0
    %3613 = vmatpush1.bf16.msra.mxu0 0
    %3614 = vmatprep.subr.bf16.mxu0 0
    %3615 = vmatpush1.bf16.msra.mxu0 0
    %3616 = vmatprep.subr.bf16.mxu0 0
    %3617 = vmatpush1.bf16.msra.mxu0 0
    %3618 = vmatprep.subr.bf16.mxu0 0
    %3619 = vmatpush1.bf16.msra.mxu0 0
    %3620 = vmatprep.subr.bf16.mxu0 0
    %3621 = vmatpush1.bf16.msra.mxu0 0
    %3622 = vmatprep.subr.bf16.mxu0 0
    %3623 = vmatpush1.bf16.msra.mxu0 0
    %3624 = vmatprep.subr.bf16.mxu0 0
    %3625 = vmatpush1.bf16.msra.mxu0 0
    %3626 = vmatprep.subr.bf16.mxu0 0
    %3627 = vmatpush1.bf16.msra.mxu0 0
    %3628 = vmatprep.mubr.bf16.mxu0 0
    %3629 = vmatmul.mubr.bf16.gmra.mrb[0].mxu0 %v3362
    %v3630 = vpop.f32.mrb[0].mxu0
    %v3631 = vadd.f32 0.0, %v3630
    %v3632 = vpop.f32.mrb[0].mxu0
    %v3633 = vadd.f32 0.0, %v3632
    %v3634 = vpop.f32.mrb[0].mxu0
    %v3635 = vpop.f32.mrb[0].mxu0
    %3636 = vdwg.mxu0
    %v3637 = vadd.f32 %v3358, %v3590
    %v3638 = vadd.f32 %v3359, %v3592
    %v3639 = vadd.f32 %v3360, %v3631
    %v3640 = vadd.f32 %v3361, %v3633
    %v3641 = vmul.f32 %v3637, 0.5
    %v3642 = vtanh.pop %v3641
    %v3643 = vmul.f32 %v3642, 0.5
    %v3644 = vadd.f32 %v3643, 0.5
    %v3645 = vmul.f32 %v3638, 0.5
    %v3646 = vtanh.pop %v3645
    %v3647 = vmul.f32 %v3646, 0.5
    %v3648 = vadd.f32 %v3647, 0.5
    %v3649 = vtanh.pop %v3639
    %v3650 = vmul.f32 %v3640, 0.5
    %v3651 = vtanh.pop %v3650
    %v3652 = vmul.f32 %v3651, 0.5
    %v3653 = vadd.f32 %v3652, 0.5
    %v3654 = vmul.f32 %v3648, %v3357
    %v3655 = vmul.f32 %v3644, %v3649
    %v3656 = vadd.f32 %v3654, %v3655
    %v3657 = vtanh.pop %v3656
    %v3658 = vmul.f32 %v3653, %v3657
    %v3659 = vld [vmem:[%s822] sm:$0xff]
    %v3660 = vld [vmem:[%s822 + $0x8] sm:$0xff]
    %v3661 = vld [vmem:[%s822 + $0x10] sm:$0xff]
    %v3662 = vld [vmem:[%s822 + $0x18] sm:$0xff]
    %v3663 = vpack.c.bf16 %v3658, %v3658
    %3664 = vmatprep.subr.bf16.mxu0 %v3492
    %3665 = vmatpush1.bf16.msra.mxu0 %v3491
    %3666 = vmatprep.subr.bf16.mxu0 %v3496
    %3667 = vmatpush1.bf16.msra.mxu0 %v3495
    %3668 = vmatprep.subr.bf16.mxu0 %v3500
    %3669 = vmatpush1.bf16.msra.mxu0 %v3499
    %3670 = vmatprep.subr.bf16.mxu0 %v3504
    %3671 = vmatpush1.bf16.msra.mxu0 %v3503
    %3672 = vmatprep.subr.bf16.mxu0 %v3508
    %3673 = vmatpush1.bf16.msra.mxu0 %v3507
    %3674 = vmatprep.subr.bf16.mxu0 %v3512
    %3675 = vmatpush1.bf16.msra.mxu0 %v3511
    %3676 = vmatprep.subr.bf16.mxu0 %v3516
    %3677 = vmatpush1.bf16.msra.mxu0 %v3515
    %3678 = vmatprep.subr.bf16.mxu0 %v3520
    %3679 = vmatpush1.bf16.msra.mxu0 %v3519
    %3680 = vmatprep.subr.bf16.mxu0 0
    %3681 = vmatpush1.bf16.msra.mxu0 0
    %3682 = vmatprep.subr.bf16.mxu0 0
    %3683 = vmatpush1.bf16.msra.mxu0 0
    %3684 = vmatprep.subr.bf16.mxu0 0
    %3685 = vmatpush1.bf16.msra.mxu0 0
    %3686 = vmatprep.subr.bf16.mxu0 0
    %3687 = vmatpush1.bf16.msra.mxu0 0
    %3688 = vmatprep.subr.bf16.mxu0 0
    %3689 = vmatpush1.bf16.msra.mxu0 0
    %3690 = vmatprep.subr.bf16.mxu0 0
    %3691 = vmatpush1.bf16.msra.mxu0 0
    %3692 = vmatprep.subr.bf16.mxu0 0
    %3693 = vmatpush1.bf16.msra.mxu0 0
    %3694 = vmatprep.subr.bf16.mxu0 0
    %3695 = vmatpush1.bf16.msra.mxu0 0
    %3696 = vmatprep.mubr.bf16.mxu0 0
    %3697 = vmatmul.mubr.bf16.gmra.mrb[0].mxu0 %v3663
    %v3698 = vpop.f32.mrb[0].mxu0
    %v3699 = vadd.f32 0.0, %v3698
    %v3700 = vpop.f32.mrb[0].mxu0
    %v3701 = vadd.f32 0.0, %v3700
    %v3702 = vpop.f32.mrb[0].mxu0
    %v3703 = vpop.f32.mrb[0].mxu0
    %3704 = vdwg.mxu0
    %3705 = vmatprep.subr.bf16.mxu0 %v3494
    %3706 = vmatpush1.bf16.msra.mxu0 %v3493
    %3707 = vmatprep.subr.bf16.mxu0 %v3498
    %3708 = vmatpush1.bf16.msra.mxu0 %v3497
    %3709 = vmatprep.subr.bf16.mxu0 %v3502
    %3710 = vmatpush1.bf16.msra.mxu0 %v3501
    %3711 = vmatprep.subr.bf16.mxu0 %v3506
    %3712 = vmatpush1.bf16.msra.mxu0 %v3505
    %3713 = vmatprep.subr.bf16.mxu0 %v3510
    %3714 = vmatpush1.bf16.msra.mxu0 %v3509
    %3715 = vmatprep.subr.bf16.mxu0 %v3514
    %3716 = vmatpush1.bf16.msra.mxu0 %v3513
    %3717 = vmatprep.subr.bf16.mxu0 %v3518
    %3718 = vmatpush1.bf16.msra.mxu0 %v3517
    %3719 = vmatprep.subr.bf16.mxu0 %v3522
    %3720 = vmatpush1.bf16.msra.mxu0 %v3521
    %3721 = vmatprep.subr.bf16.mxu0 0
    %3722 = vmatpush1.bf16.msra.mxu0 0
    %3723 = vmatprep.subr.bf16.mxu0 0
    %3724 = vmatpush1.bf16.msra.mxu0 0
    %3725 = vmatprep.subr.bf16.mxu0 0
    %3726 = vmatpush1.bf16.msra.mxu0 0
    %3727 = vmatprep.subr.bf16.mxu0 0
    %3728 = vmatpush1.bf16.msra.mxu0 0
    %3729 = vmatprep.subr.bf16.mxu0 0
    %3730 = vmatpush1.bf16.msra.mxu0 0
    %3731 = vmatprep.subr.bf16.mxu0 0
    %3732 = vmatpush1.bf16.msra.mxu0 0
    %3733 = vmatprep.subr.bf16.mxu0 0
    %3734 = vmatpush1.bf16.msra.mxu0 0
    %3735 = vmatprep.subr.bf16.mxu0 0
    %3736 = vmatpush1.bf16.msra.mxu0 0
    %3737 = vmatprep.mubr.bf16.mxu0 0
    %3738 = vmatmul.mubr.bf16.gmra.mrb[0].mxu0 %v3663
    %v3739 = vpop.f32.mrb[0].mxu0
    %v3740 = vadd.f32 0.0, %v3739
    %v3741 = vpop.f32.mrb[0].mxu0
    %v3742 = vadd.f32 0.0, %v3741
    %v3743 = vpop.f32.mrb[0].mxu0
    %v3744 = vpop.f32.mrb[0].mxu0
    %3745 = vdwg.mxu0
    %v3746 = vadd.f32 %v3659, %v3699
    %v3747 = vadd.f32 %v3660, %v3701
    %v3748 = vadd.f32 %v3661, %v3740
    %v3749 = vadd.f32 %v3662, %v3742
    %v3750 = vmul.f32 %v3746, 0.5
    %v3751 = vtanh.pop %v3750
    %v3752 = vmul.f32 %v3751, 0.5
    %v3753 = vadd.f32 %v3752, 0.5
    %v3754 = vmul.f32 %v3747, 0.5
    %v3755 = vtanh.pop %v3754
    %v3756 = vmul.f32 %v3755, 0.5
    %v3757 = vadd.f32 %v3756, 0.5
    %v3758 = vtanh.pop %v3748
    %v3759 = vmul.f32 %v3749, 0.5
    %v3760 = vtanh.pop %v3759
    %v3761 = vmul.f32 %v3760, 0.5
    %v3762 = vadd.f32 %v3761, 0.5
    %v3763 = vmul.f32 %v3757, %v3656
    %v3764 = vmul.f32 %v3753, %v3758
    %v3765 = vadd.f32 %v3763, %v3764
    %v3766 = vtanh.pop %v3765
    %v3767 = vmul.f32 %v3762, %v3766
    %v3768 = vld [vmem:[%s1126] sm:$0xff]
    %v3769 = vld [vmem:[%s1126 + $0x8] sm:$0xff]
    %v3770 = vld [vmem:[%s1126 + $0x10] sm:$0xff]
    %v3771 = vld [vmem:[%s1126 + $0x18] sm:$0xff]
    %v3772 = vpack.c.bf16 %v3767, %v3767
    %3773 = vmatprep.subr.bf16.mxu0 %v3492
    %3774 = vmatpush1.bf16.msra.mxu0 %v3491
    %3775 = vmatprep.subr.bf16.mxu0 %v3496
    %3776 = vmatpush1.bf16.msra.mxu0 %v3495
    %3777 = vmatprep.subr.bf16.mxu0 %v3500
    %3778 = vmatpush1.bf16.msra.mxu0 %v3499
    %3779 = vmatprep.subr.bf16.mxu0 %v3504
    %3780 = vmatpush1.bf16.msra.mxu0 %v3503
    %3781 = vmatprep.subr.bf16.mxu0 %v3508
    %3782 = vmatpush1.bf16.msra.mxu0 %v3507
    %3783 = vmatprep.subr.bf16.mxu0 %v3512
    %3784 = vmatpush1.bf16.msra.mxu0 %v3511
    %3785 = vmatprep.subr.bf16.mxu0 %v3516
    %3786 = vmatpush1.bf16.msra.mxu0 %v3515
    %3787 = vmatprep.subr.bf16.mxu0 %v3520
    %3788 = vmatpush1.bf16.msra.mxu0 %v3519
    %3789 = vmatprep.subr.bf16.mxu0 0
    %3790 = vmatpush1.bf16.msra.mxu0 0
    %3791 = vmatprep.subr.bf16.mxu0 0
    %3792 = vmatpush1.bf16.msra.mxu0 0
    %3793 = vmatprep.subr.bf16.mxu0 0
    %3794 = vmatpush1.bf16.msra.mxu0 0
    %3795 = vmatprep.subr.bf16.mxu0 0
    %3796 = vmatpush1.bf16.msra.mxu0 0
    %3797 = vmatprep.subr.bf16.mxu0 0
    %3798 = vmatpush1.bf16.msra.mxu0 0
    %3799 = vmatprep.subr.bf16.mxu0 0
    %3800 = vmatpush1.bf16.msra.mxu0 0
    %3801 = vmatprep.subr.bf16.mxu0 0
    %3802 = vmatpush1.bf16.msra.mxu0 0
    %3803 = vmatprep.subr.bf16.mxu0 0
    %3804 = vmatpush1.bf16.msra.mxu0 0
    %3805 = vmatprep.mubr.bf16.mxu0 0
    %3806 = vmatmul.mubr.bf16.gmra.mrb[0].mxu0 %v3772
    %v3807 = vpop.f32.mrb[0].mxu0
    %v3808 = vadd.f32 0.0, %v3807
    %v3809 = vpop.f32.mrb[0].mxu0
    %v3810 = vadd.f32 0.0, %v3809
    %v3811 = vpop.f32.mrb[0].mxu0
    %v3812 = vpop.f32.mrb[0].mxu0
    %3813 = vdwg.mxu0
    %3814 = vmatprep.subr.bf16.mxu0 %v3494
    %3815 = vmatpush1.bf16.msra.mxu0 %v3493
    %3816 = vmatprep.subr.bf16.mxu0 %v3498
    %3817 = vmatpush1.bf16.msra.mxu0 %v3497
    %3818 = vmatprep.subr.bf16.mxu0 %v3502
    %3819 = vmatpush1.bf16.msra.mxu0 %v3501
    %3820 = vmatprep.subr.bf16.mxu0 %v3506
    %3821 = vmatpush1.bf16.msra.mxu0 %v3505
    %3822 = vmatprep.subr.bf16.mxu0 %v3510
    %3823 = vmatpush1.bf16.msra.mxu0 %v3509
    %3824 = vmatprep.subr.bf16.mxu0 %v3514
    %3825 = vmatpush1.bf16.msra.mxu0 %v3513
    %3826 = vmatprep.subr.bf16.mxu0 %v3518
    %3827 = vmatpush1.bf16.msra.mxu0 %v3517
    %3828 = vmatprep.subr.bf16.mxu0 %v3522
    %3829 = vmatpush1.bf16.msra.mxu0 %v3521
    %3830 = vmatprep.subr.bf16.mxu0 0
    %3831 = vmatpush1.bf16.msra.mxu0 0
    %3832 = vmatprep.subr.bf16.mxu0 0
    %3833 = vmatpush1.bf16.msra.mxu0 0
    %3834 = vmatprep.subr.bf16.mxu0 0
    %3835 = vmatpush1.bf16.msra.mxu0 0
    %3836 = vmatprep.subr.bf16.mxu0 0
    %3837 = vmatpush1.bf16.msra.mxu0 0
    %3838 = vmatprep.subr.bf16.mxu0 0
    %3839 = vmatpush1.bf16.msra.mxu0 0
    %3840 = vmatprep.subr.bf16.mxu0 0
    %3841 = vmatpush1.bf16.msra.mxu0 0
    %3842 = vmatprep.subr.bf16.mxu0 0
    %3843 = vmatpush1.bf16.msra.mxu0 0
    %3844 = vmatprep.subr.bf16.mxu0 0
    %3845 = vmatpush1.bf16.msra.mxu0 0
    %3846 = vmatprep.mubr.bf16.mxu0 0
    %3847 = vmatmul.mubr.bf16.gmra.mrb[0].mxu0 %v3772
    %v3848 = vpop.f32.mrb[0].mxu0
    %v3849 = vadd.f32 0.0, %v3848
    %v3850 = vpop.f32.mrb[0].mxu0
    %v3851 = vadd.f32 0.0, %v3850
    %v3852 = vpop.f32.mrb[0].mxu0
    %v3853 = vpop.f32.mrb[0].mxu0
    %3854 = vdwg.mxu0
    %v3855 = vadd.f32 %v3768, %v3808
    %v3856 = vadd.f32 %v3769, %v3810
    %v3857 = vadd.f32 %v3770, %v3849
    %v3858 = vadd.f32 %v3771, %v3851
    %v3859 = vmul.f32 %v3855, 0.5
    %v3860 = vtanh.pop %v3859
    %v3861 = vmul.f32 %v3860, 0.5
    %v3862 = vadd.f32 %v3861, 0.5
    %v3863 = vmul.f32 %v3856, 0.5
    %v3864 = vtanh.pop %v3863
    %v3865 = vmul.f32 %v3864, 0.5
    %v3866 = vadd.f32 %v3865, 0.5
    %v3867 = vtanh.pop %v3857
    %v3868 = vmul.f32 %v3858, 0.5
    %v3869 = vtanh.pop %v3868
    %v3870 = vmul.f32 %v3869, 0.5
    %v3871 = vadd.f32 %v3870, 0.5
    %v3872 = vmul.f32 %v3866, %v3765
    %v3873 = vmul.f32 %v3862, %v3867
    %v3874 = vadd.f32 %v3872, %v3873
    %v3875 = vtanh.pop %v3874
    %v3876 = vmul.f32 %v3871, %v3875
    %v3877 = vld [vmem:[%s1430] sm:$0xff]
    %v3878 = vld [vmem:[%s1430 + $0x8] sm:$0xff]
    %v3879 = vld [vmem:[%s1430 + $0x10] sm:$0xff]
    %v3880 = vld [vmem:[%s1430 + $0x18] sm:$0xff]
    %v3881 = vpack.c.bf16 %v3876, %v3876
    %3882 = vmatprep.subr.bf16.mxu0 %v3492
    %3883 = vmatpush1.bf16.msra.mxu0 %v3491
    %3884 = vmatprep.subr.bf16.mxu0 %v3496
    %3885 = vmatpush1.bf16.msra.mxu0 %v3495
    %3886 = vmatprep.subr.bf16.mxu0 %v3500
    %3887 = vmatpush1.bf16.msra.mxu0 %v3499
    %3888 = vmatprep.subr.bf16.mxu0 %v3504
    %3889 = vmatpush1.bf16.msra.mxu0 %v3503
    %3890 = vmatprep.subr.bf16.mxu0 %v3508
    %3891 = vmatpush1.bf16.msra.mxu0 %v3507
    %3892 = vmatprep.subr.bf16.mxu0 %v3512
    %3893 = vmatpush1.bf16.msra.mxu0 %v3511
    %3894 = vmatprep.subr.bf16.mxu0 %v3516
    %3895 = vmatpush1.bf16.msra.mxu0 %v3515
    %3896 = vmatprep.subr.bf16.mxu0 %v3520
    %3897 = vmatpush1.bf16.msra.mxu0 %v3519
    %3898 = vmatprep.subr.bf16.mxu0 0
    %3899 = vmatpush1.bf16.msra.mxu0 0
    %3900 = vmatprep.subr.bf16.mxu0 0
    %3901 = vmatpush1.bf16.msra.mxu0 0
    %3902 = vmatprep.subr.bf16.mxu0 0
    %3903 = vmatpush1.bf16.msra.mxu0 0
    %3904 = vmatprep.subr.bf16.mxu0 0
    %3905 = vmatpush1.bf16.msra.mxu0 0
    %3906 = vmatprep.subr.bf16.mxu0 0
    %3907 = vmatpush1.bf16.msra.mxu0 0
    %3908 = vmatprep.subr.bf16.mxu0 0
    %3909 = vmatpush1.bf16.msra.mxu0 0
    %3910 = vmatprep.subr.bf16.mxu0 0
    %3911 = vmatpush1.bf16.msra.mxu0 0
    %3912 = vmatprep.subr.bf16.mxu0 0
    %3913 = vmatpush1.bf16.msra.mxu0 0
    %3914 = vmatprep.mubr.bf16.mxu0 0
    %3915 = vmatmul.mubr.bf16.gmra.mrb[0].mxu0 %v3881
    %v3916 = vpop.f32.mrb[0].mxu0
    %v3917 = vadd.f32 0.0, %v3916
    %v3918 = vpop.f32.mrb[0].mxu0
    %v3919 = vadd.f32 0.0, %v3918
    %v3920 = vpop.f32.mrb[0].mxu0
    %v3921 = vpop.f32.mrb[0].mxu0
    %3922 = vdwg.mxu0
    %3923 = vmatprep.subr.bf16.mxu0 %v3494
    %3924 = vmatpush1.bf16.msra.mxu0 %v3493
    %3925 = vmatprep.subr.bf16.mxu0 %v3498
    %3926 = vmatpush1.bf16.msra.mxu0 %v3497
    %3927 = vmatprep.subr.bf16.mxu0 %v3502
    %3928 = vmatpush1.bf16.msra.mxu0 %v3501
    %3929 = vmatprep.subr.bf16.mxu0 %v3506
    %3930 = vmatpush1.bf16.msra.mxu0 %v3505
    %3931 = vmatprep.subr.bf16.mxu0 %v3510
    %3932 = vmatpush1.bf16.msra.mxu0 %v3509
    %3933 = vmatprep.subr.bf16.mxu0 %v3514
    %3934 = vmatpush1.bf16.msra.mxu0 %v3513
    %3935 = vmatprep.subr.bf16.mxu0 %v3518
    %3936 = vmatpush1.bf16.msra.mxu0 %v3517
    %3937 = vmatprep.subr.bf16.mxu0 %v3522
    %3938 = vmatpush1.bf16.msra.mxu0 %v3521
    %3939 = vmatprep.subr.bf16.mxu0 0
    %3940 = vmatpush1.bf16.msra.mxu0 0
    %3941 = vmatprep.subr.bf16.mxu0 0
    %3942 = vmatpush1.bf16.msra.mxu0 0
    %3943 = vmatprep.subr.bf16.mxu0 0
    %3944 = vmatpush1.bf16.msra.mxu0 0
    %3945 = vmatprep.subr.bf16.mxu0 0
    %3946 = vmatpush1.bf16.msra.mxu0 0
    %3947 = vmatprep.subr.bf16.mxu0 0
    %3948 = vmatpush1.bf16.msra.mxu0 0
    %3949 = vmatprep.subr.bf16.mxu0 0
    %3950 = vmatpush1.bf16.msra.mxu0 0
    %3951 = vmatprep.subr.bf16.mxu0 0
    %3952 = vmatpush1.bf16.msra.mxu0 0
    %3953 = vmatprep.subr.bf16.mxu0 0
    %3954 = vmatpush1.bf16.msra.mxu0 0
    %3955 = vmatprep.mubr.bf16.mxu0 0
    %3956 = vmatmul.mubr.bf16.gmra.mrb[0].mxu0 %v3881
    %v3957 = vpop.f32.mrb[0].mxu0
    %v3958 = vadd.f32 0.0, %v3957
    %v3959 = vpop.f32.mrb[0].mxu0
    %v3960 = vadd.f32 0.0, %v3959
    %v3961 = vpop.f32.mrb[0].mxu0
    %v3962 = vpop.f32.mrb[0].mxu0
    %3963 = vdwg.mxu0
    %v3964 = vadd.f32 %v3877, %v3917
    %v3965 = vadd.f32 %v3878, %v3919
    %v3966 = vadd.f32 %v3879, %v3958
    %v3967 = vadd.f32 %v3880, %v3960
    %v3968 = vmul.f32 %v3964, 0.5
    %v3969 = vtanh.pop %v3968
    %v3970 = vmul.f32 %v3969, 0.5
    %v3971 = vadd.f32 %v3970, 0.5
    %v3972 = vmul.f32 %v3965, 0.5
    %v3973 = vtanh.pop %v3972
    %v3974 = vmul.f32 %v3973, 0.5
    %v3975 = vadd.f32 %v3974, 0.5
    %v3976 = vtanh.pop %v3966
    %v3977 = vmul.f32 %v3967, 0.5
    %v3978 = vtanh.pop %v3977
    %v3979 = vmul.f32 %v3978, 0.5
    %v3980 = vadd.f32 %v3979, 0.5
    %v3981 = vmul.f32 %v3975, %v3874
    %v3982 = vmul.f32 %v3971, %v3976
    %v3983 = vadd.f32 %v3981, %v3982
    %v3984 = vtanh.pop %v3983
    %v3985 = vmul.f32 %v3980, %v3984
    %v3986 = vld [vmem:[%s1734] sm:$0xff]
    %v3987 = vld [vmem:[%s1734 + $0x8] sm:$0xff]
    %v3988 = vld [vmem:[%s1734 + $0x10] sm:$0xff]
    %v3989 = vld [vmem:[%s1734 + $0x18] sm:$0xff]
    %v3990 = vpack.c.bf16 %v3985, %v3985
    %3991 = vmatprep.subr.bf16.mxu0 %v3492
    %3992 = vmatpush1.bf16.msra.mxu0 %v3491
    %3993 = vmatprep.subr.bf16.mxu0 %v3496
    %3994 = vmatpush1.bf16.msra.mxu0 %v3495
    %3995 = vmatprep.subr.bf16.mxu0 %v3500
    %3996 = vmatpush1.bf16.msra.mxu0 %v3499
    %3997 = vmatprep.subr.bf16.mxu0 %v3504
    %3998 = vmatpush1.bf16.msra.mxu0 %v3503
    %3999 = vmatprep.subr.bf16.mxu0 %v3508
    %4000 = vmatpush1.bf16.msra.mxu0 %v3507
    %4001 = vmatprep.subr.bf16.mxu0 %v3512
    %4002 = vmatpush1.bf16.msra.mxu0 %v3511
    %4003 = vmatprep.subr.bf16.mxu0 %v3516
    %4004 = vmatpush1.bf16.msra.mxu0 %v3515
    %4005 = vmatprep.subr.bf16.mxu0 %v3520
    %4006 = vmatpush1.bf16.msra.mxu0 %v3519
    %4007 = vmatprep.subr.bf16.mxu0 0
    %4008 = vmatpush1.bf16.msra.mxu0 0
    %4009 = vmatprep.subr.bf16.mxu0 0
    %4010 = vmatpush1.bf16.msra.mxu0 0
    %4011 = vmatprep.subr.bf16.mxu0 0
    %4012 = vmatpush1.bf16.msra.mxu0 0
    %4013 = vmatprep.subr.bf16.mxu0 0
    %4014 = vmatpush1.bf16.msra.mxu0 0
    %4015 = vmatprep.subr.bf16.mxu0 0
    %4016 = vmatpush1.bf16.msra.mxu0 0
    %4017 = vmatprep.subr.bf16.mxu0 0
    %4018 = vmatpush1.bf16.msra.mxu0 0
    %4019 = vmatprep.subr.bf16.mxu0 0
    %4020 = vmatpush1.bf16.msra.mxu0 0
    %4021 = vmatprep.subr.bf16.mxu0 0
    %4022 = vmatpush1.bf16.msra.mxu0 0
    %4023 = vmatprep.mubr.bf16.mxu0 0
    %4024 = vmatmul.mubr.bf16.gmra.mrb[0].mxu0 %v3990
    %v4025 = vpop.f32.mrb[0].mxu0
    %v4026 = vadd.f32 0.0, %v4025
    %v4027 = vpop.f32.mrb[0].mxu0
    %v4028 = vadd.f32 0.0, %v4027
    %v4029 = vpop.f32.mrb[0].mxu0
    %v4030 = vpop.f32.mrb[0].mxu0
    %4031 = vdwg.mxu0
    %4032 = vmatprep.subr.bf16.mxu0 %v3494
    %4033 = vmatpush1.bf16.msra.mxu0 %v3493
    %4034 = vmatprep.subr.bf16.mxu0 %v3498
    %4035 = vmatpush1.bf16.msra.mxu0 %v3497
    %4036 = vmatprep.subr.bf16.mxu0 %v3502
    %4037 = vmatpush1.bf16.msra.mxu0 %v3501
    %4038 = vmatprep.subr.bf16.mxu0 %v3506
    %4039 = vmatpush1.bf16.msra.mxu0 %v3505
    %4040 = vmatprep.subr.bf16.mxu0 %v3510
    %4041 = vmatpush1.bf16.msra.mxu0 %v3509
    %4042 = vmatprep.subr.bf16.mxu0 %v3514
    %4043 = vmatpush1.bf16.msra.mxu0 %v3513
    %4044 = vmatprep.subr.bf16.mxu0 %v3518
    %4045 = vmatpush1.bf16.msra.mxu0 %v3517
    %4046 = vmatprep.subr.bf16.mxu0 %v3522
    %4047 = vmatpush1.bf16.msra.mxu0 %v3521
    %4048 = vmatprep.subr.bf16.mxu0 0
    %4049 = vmatpush1.bf16.msra.mxu0 0
    %4050 = vmatprep.subr.bf16.mxu0 0
    %4051 = vmatpush1.bf16.msra.mxu0 0
    %4052 = vmatprep.subr.bf16.mxu0 0
    %4053 = vmatpush1.bf16.msra.mxu0 0
    %4054 = vmatprep.subr.bf16.mxu0 0
    %4055 = vmatpush1.bf16.msra.mxu0 0
    %4056 = vmatprep.subr.bf16.mxu0 0
    %4057 = vmatpush1.bf16.msra.mxu0 0
    %4058 = vmatprep.subr.bf16.mxu0 0
    %4059 = vmatpush1.bf16.msra.mxu0 0
    %4060 = vmatprep.subr.bf16.mxu0 0
    %4061 = vmatpush1.bf16.msra.mxu0 0
    %4062 = vmatprep.subr.bf16.mxu0 0
    %4063 = vmatpush1.bf16.msra.mxu0 0
    %4064 = vmatprep.mubr.bf16.mxu0 0
    %4065 = vmatmul.mubr.bf16.gmra.mrb[0].mxu0 %v3990
    %v4066 = vpop.f32.mrb[0].mxu0
    %v4067 = vadd.f32 0.0, %v4066
    %v4068 = vpop.f32.mrb[0].mxu0
    %v4069 = vadd.f32 0.0, %v4068
    %v4070 = vpop.f32.mrb[0].mxu0
    %v4071 = vpop.f32.mrb[0].mxu0
    %4072 = vdwg.mxu0
    %v4073 = vadd.f32 %v3986, %v4026
    %v4074 = vadd.f32 %v3987, %v4028
    %v4075 = vadd.f32 %v3988, %v4067
    %v4076 = vadd.f32 %v3989, %v4069
    %v4077 = vmul.f32 %v4073, 0.5
    %v4078 = vtanh.pop %v4077
    %v4079 = vmul.f32 %v4078, 0.5
    %v4080 = vadd.f32 %v4079, 0.5
    %v4081 = vmul.f32 %v4074, 0.5
    %v4082 = vtanh.pop %v4081
    %v4083 = vmul.f32 %v4082, 0.5
    %v4084 = vadd.f32 %v4083, 0.5
    %v4085 = vtanh.pop %v4075
    %v4086 = vmul.f32 %v4076, 0.5
    %v4087 = vtanh.pop %v4086
    %v4088 = vmul.f32 %v4087, 0.5
    %v4089 = vadd.f32 %v4088, 0.5
    %v4090 = vmul.f32 %v4084, %v3983
    %v4091 = vmul.f32 %v4080, %v4085
    %v4092 = vadd.f32 %v4090, %v4091
    %v4093 = vtanh.pop %v4092
    %v4094 = vmul.f32 %v4089, %v4093
    %v4095 = vld [vmem:[%s2038] sm:$0xff]
    %v4096 = vld [vmem:[%s2038 + $0x8] sm:$0xff]
    %v4097 = vld [vmem:[%s2038 + $0x10] sm:$0xff]
    %v4098 = vld [vmem:[%s2038 + $0x18] sm:$0xff]
    %v4099 = vpack.c.bf16 %v4094, %v4094
    %4100 = vmatprep.subr.bf16.mxu0 %v3492
    %4101 = vmatpush1.bf16.msra.mxu0 %v3491
    %4102 = vmatprep.subr.bf16.mxu0 %v3496
    %4103 = vmatpush1.bf16.msra.mxu0 %v3495
    %4104 = vmatprep.subr.bf16.mxu0 %v3500
    %4105 = vmatpush1.bf16.msra.mxu0 %v3499
    %4106 = vmatprep.subr.bf16.mxu0 %v3504
    %4107 = vmatpush1.bf16.msra.mxu0 %v3503
    %4108 = vmatprep.subr.bf16.mxu0 %v3508
    %4109 = vmatpush1.bf16.msra.mxu0 %v3507
    %4110 = vmatprep.subr.bf16.mxu0 %v3512
    %4111 = vmatpush1.bf16.msra.mxu0 %v3511
    %4112 = vmatprep.subr.bf16.mxu0 %v3516
    %4113 = vmatpush1.bf16.msra.mxu0 %v3515
    %4114 = vmatprep.subr.bf16.mxu0 %v3520
    %4115 = vmatpush1.bf16.msra.mxu0 %v3519
    %4116 = vmatprep.subr.bf16.mxu0 0
    %4117 = vmatpush1.bf16.msra.mxu0 0
    %4118 = vmatprep.subr.bf16.mxu0 0
    %4119 = vmatpush1.bf16.msra.mxu0 0
    %4120 = vmatprep.subr.bf16.mxu0 0
    %4121 = vmatpush1.bf16.msra.mxu0 0
    %4122 = vmatprep.subr.bf16.mxu0 0
    %4123 = vmatpush1.bf16.msra.mxu0 0
    %4124 = vmatprep.subr.bf16.mxu0 0
    %4125 = vmatpush1.bf16.msra.mxu0 0
    %4126 = vmatprep.subr.bf16.mxu0 0
    %4127 = vmatpush1.bf16.msra.mxu0 0
    %4128 = vmatprep.subr.bf16.mxu0 0
    %4129 = vmatpush1.bf16.msra.mxu0 0
    %4130 = vmatprep.subr.bf16.mxu0 0
    %4131 = vmatpush1.bf16.msra.mxu0 0
    %4132 = vmatprep.mubr.bf16.mxu0 0
    %4133 = vmatmul.mubr.bf16.gmra.mrb[0].mxu0 %v4099
    %v4134 = vpop.f32.mrb[0].mxu0
    %v4135 = vadd.f32 0.0, %v4134
    %v4136 = vpop.f32.mrb[0].mxu0
    %v4137 = vadd.f32 0.0, %v4136
    %v4138 = vpop.f32.mrb[0].mxu0
    %v4139 = vpop.f32.mrb[0].mxu0
    %4140 = vdwg.mxu0
    %4141 = vmatprep.subr.bf16.mxu0 %v3494
    %4142 = vmatpush1.bf16.msra.mxu0 %v3493
    %4143 = vmatprep.subr.bf16.mxu0 %v3498
    %4144 = vmatpush1.bf16.msra.mxu0 %v3497
    %4145 = vmatprep.subr.bf16.mxu0 %v3502
    %4146 = vmatpush1.bf16.msra.mxu0 %v3501
    %4147 = vmatprep.subr.bf16.mxu0 %v3506
    %4148 = vmatpush1.bf16.msra.mxu0 %v3505
    %4149 = vmatprep.subr.bf16.mxu0 %v3510
    %4150 = vmatpush1.bf16.msra.mxu0 %v3509
    %4151 = vmatprep.subr.bf16.mxu0 %v3514
    %4152 = vmatpush1.bf16.msra.mxu0 %v3513
    %4153 = vmatprep.subr.bf16.mxu0 %v3518
    %4154 = vmatpush1.bf16.msra.mxu0 %v3517
    %4155 = vmatprep.subr.bf16.mxu0 %v3522
    %4156 = vmatpush1.bf16.msra.mxu0 %v3521
    %4157 = vmatprep.subr.bf16.mxu0 0
    %4158 = vmatpush1.bf16.msra.mxu0 0
    %4159 = vmatprep.subr.bf16.mxu0 0
    %4160 = vmatpush1.bf16.msra.mxu0 0
    %4161 = vmatprep.subr.bf16.mxu0 0
    %4162 = vmatpush1.bf16.msra.mxu0 0
    %4163 = vmatprep.subr.bf16.mxu0 0
    %4164 = vmatpush1.bf16.msra.mxu0 0
    %4165 = vmatprep.subr.bf16.mxu0 0
    %4166 = vmatpush1.bf16.msra.mxu0 0
    %4167 = vmatprep.subr.bf16.mxu0 0
    %4168 = vmatpush1.bf16.msra.mxu0 0
    %4169 = vmatprep.subr.bf16.mxu0 0
    %4170 = vmatpush1.bf16.msra.mxu0 0
    %4171 = vmatprep.subr.bf16.mxu0 0
    %4172 = vmatpush1.bf16.msra.mxu0 0
    %4173 = vmatprep.mubr.bf16.mxu0 0
    %4174 = vmatmul.mubr.bf16.gmra.mrb[0].mxu0 %v4099
    %v4175 = vpop.f32.mrb[0].mxu0
    %v4176 = vadd.f32 0.0, %v4175
    %v4177 = vpop.f32.mrb[0].mxu0
    %v4178 = vadd.f32 0.0, %v4177
    %v4179 = vpop.f32.mrb[0].mxu0
    %v4180 = vpop.f32.mrb[0].mxu0
    %4181 = vdwg.mxu0
    %v4182 = vadd.f32 %v4095, %v4135
    %v4183 = vadd.f32 %v4096, %v4137
    %v4184 = vadd.f32 %v4097, %v4176
    %v4185 = vadd.f32 %v4098, %v4178
    %v4186 = vmul.f32 %v4182, 0.5
    %v4187 = vtanh.pop %v4186
    %v4188 = vmul.f32 %v4187, 0.5
    %v4189 = vadd.f32 %v4188, 0.5
    %v4190 = vmul.f32 %v4183, 0.5
    %v4191 = vtanh.pop %v4190
    %v4192 = vmul.f32 %v4191, 0.5
    %v4193 = vadd.f32 %v4192, 0.5
    %v4194 = vtanh.pop %v4184
    %v4195 = vmul.f32 %v4185, 0.5
    %v4196 = vtanh.pop %v4195
    %v4197 = vmul.f32 %v4196, 0.5
    %v4198 = vadd.f32 %v4197, 0.5
    %v4199 = vmul.f32 %v4193, %v4092
    %v4200 = vmul.f32 %v4189, %v4194
    %v4201 = vadd.f32 %v4199, %v4200
    %v4202 = vtanh.pop %v4201
    %v4203 = vmul.f32 %v4198, %v4202
    %v4204 = vld [vmem:[%s2342] sm:$0xff]
    %v4205 = vld [vmem:[%s2342 + $0x8] sm:$0xff]
    %v4206 = vld [vmem:[%s2342 + $0x10] sm:$0xff]
    %v4207 = vld [vmem:[%s2342 + $0x18] sm:$0xff]
    %v4208 = vpack.c.bf16 %v4203, %v4203
    %4209 = vmatprep.subr.bf16.mxu0 %v3492
    %4210 = vmatpush1.bf16.msra.mxu0 %v3491
    %4211 = vmatprep.subr.bf16.mxu0 %v3496
    %4212 = vmatpush1.bf16.msra.mxu0 %v3495
    %4213 = vmatprep.subr.bf16.mxu0 %v3500
    %4214 = vmatpush1.bf16.msra.mxu0 %v3499
    %4215 = vmatprep.subr.bf16.mxu0 %v3504
    %4216 = vmatpush1.bf16.msra.mxu0 %v3503
    %4217 = vmatprep.subr.bf16.mxu0 %v3508
    %4218 = vmatpush1.bf16.msra.mxu0 %v3507
    %4219 = vmatprep.subr.bf16.mxu0 %v3512
    %4220 = vmatpush1.bf16.msra.mxu0 %v3511
    %4221 = vmatprep.subr.bf16.mxu0 %v3516
    %4222 = vmatpush1.bf16.msra.mxu0 %v3515
    %4223 = vmatprep.subr.bf16.mxu0 %v3520
    %4224 = vmatpush1.bf16.msra.mxu0 %v3519
    %4225 = vmatprep.subr.bf16.mxu0 0
    %4226 = vmatpush1.bf16.msra.mxu0 0
    %4227 = vmatprep.subr.bf16.mxu0 0
    %4228 = vmatpush1.bf16.msra.mxu0 0
    %4229 = vmatprep.subr.bf16.mxu0 0
    %4230 = vmatpush1.bf16.msra.mxu0 0
    %4231 = vmatprep.subr.bf16.mxu0 0
    %4232 = vmatpush1.bf16.msra.mxu0 0
    %4233 = vmatprep.subr.bf16.mxu0 0
    %4234 = vmatpush1.bf16.msra.mxu0 0
    %4235 = vmatprep.subr.bf16.mxu0 0
    %4236 = vmatpush1.bf16.msra.mxu0 0
    %4237 = vmatprep.subr.bf16.mxu0 0
    %4238 = vmatpush1.bf16.msra.mxu0 0
    %4239 = vmatprep.subr.bf16.mxu0 0
    %4240 = vmatpush1.bf16.msra.mxu0 0
    %4241 = vmatprep.mubr.bf16.mxu0 0
    %4242 = vmatmul.mubr.bf16.gmra.mrb[0].mxu0 %v4208
    %v4243 = vpop.f32.mrb[0].mxu0
    %v4244 = vadd.f32 0.0, %v4243
    %v4245 = vpop.f32.mrb[0].mxu0
    %v4246 = vadd.f32 0.0, %v4245
    %v4247 = vpop.f32.mrb[0].mxu0
    %v4248 = vpop.f32.mrb[0].mxu0
    %4249 = vdwg.mxu0
    %4250 = vmatprep.subr.bf16.mxu0 %v3494
    %4251 = vmatpush1.bf16.msra.mxu0 %v3493
    %4252 = vmatprep.subr.bf16.mxu0 %v3498
    %4253 = vmatpush1.bf16.msra.mxu0 %v3497
    %4254 = vmatprep.subr.bf16.mxu0 %v3502
    %4255 = vmatpush1.bf16.msra.mxu0 %v3501
    %4256 = vmatprep.subr.bf16.mxu0 %v3506
    %4257 = vmatpush1.bf16.msra.mxu0 %v3505
    %4258 = vmatprep.subr.bf16.mxu0 %v3510
    %4259 = vmatpush1.bf16.msra.mxu0 %v3509
    %4260 = vmatprep.subr.bf16.mxu0 %v3514
    %4261 = vmatpush1.bf16.msra.mxu0 %v3513
    %4262 = vmatprep.subr.bf16.mxu0 %v3518
    %4263 = vmatpush1.bf16.msra.mxu0 %v3517
    %4264 = vmatprep.subr.bf16.mxu0 %v3522
    %4265 = vmatpush1.bf16.msra.mxu0 %v3521
    %4266 = vmatprep.subr.bf16.mxu0 0
    %4267 = vmatpush1.bf16.msra.mxu0 0
    %4268 = vmatprep.subr.bf16.mxu0 0
    %4269 = vmatpush1.bf16.msra.mxu0 0
    %4270 = vmatprep.subr.bf16.mxu0 0
    %4271 = vmatpush1.bf16.msra.mxu0 0
    %4272 = vmatprep.subr.bf16.mxu0 0
    %4273 = vmatpush1.bf16.msra.mxu0 0
    %4274 = vmatprep.subr.bf16.mxu0 0
    %4275 = vmatpush1.bf16.msra.mxu0 0
    %4276 = vmatprep.subr.bf16.mxu0 0
    %4277 = vmatpush1.bf16.msra.mxu0 0
    %4278 = vmatprep.subr.bf16.mxu0 0
    %4279 = vmatpush1.bf16.msra.mxu0 0
    %4280 = vmatprep.subr.bf16.mxu0 0
    %4281 = vmatpush1.bf16.msra.mxu0 0
    %4282 = vmatprep.mubr.bf16.mxu0 0
    %4283 = vmatmul.mubr.bf16.gmra.mrb[0].mxu0 %v4208
    %v4284 = vpop.f32.mrb[0].mxu0
    %v4285 = vadd.f32 0.0, %v4284
    %v4286 = vpop.f32.mrb[0].mxu0
    %v4287 = vadd.f32 0.0, %v4286
    %v4288 = vpop.f32.mrb[0].mxu0
    %v4289 = vpop.f32.mrb[0].mxu0
    %4290 = vdwg.mxu0
    %v4291 = vadd.f32 %v4204, %v4244
    %v4292 = vadd.f32 %v4205, %v4246
    %v4293 = vadd.f32 %v4206, %v4285
    %v4294 = vadd.f32 %v4207, %v4287
    %v4295 = vmul.f32 %v4291, 0.5
    %v4296 = vtanh.pop %v4295
    %v4297 = vmul.f32 %v4296, 0.5
    %v4298 = vadd.f32 %v4297, 0.5
    %v4299 = vmul.f32 %v4292, 0.5
    %v4300 = vtanh.pop %v4299
    %v4301 = vmul.f32 %v4300, 0.5
    %v4302 = vadd.f32 %v4301, 0.5
    %v4303 = vtanh.pop %v4293
    %v4304 = vmul.f32 %v4294, 0.5
    %v4305 = vtanh.pop %v4304
    %v4306 = vmul.f32 %v4305, 0.5
    %v4307 = vadd.f32 %v4306, 0.5
    %v4308 = vmul.f32 %v4302, %v4201
    %v4309 = vmul.f32 %v4298, %v4303
    %v4310 = vadd.f32 %v4308, %v4309
    %v4311 = vtanh.pop %v4310
    %v4312 = vmul.f32 %v4307, %v4311
    %v4313 = vld [vmem:[%s2646] sm:$0xff]
    %v4314 = vld [vmem:[%s2646 + $0x8] sm:$0xff]
    %v4315 = vld [vmem:[%s2646 + $0x10] sm:$0xff]
    %v4316 = vld [vmem:[%s2646 + $0x18] sm:$0xff]
    %v4317 = vpack.c.bf16 %v4312, %v4312
    %4318 = vmatprep.subr.bf16.mxu0 %v3492
    %4319 = vmatpush1.bf16.msra.mxu0 %v3491
    %4320 = vmatprep.subr.bf16.mxu0 %v3496
    %4321 = vmatpush1.bf16.msra.mxu0 %v3495
    %4322 = vmatprep.subr.bf16.mxu0 %v3500
    %4323 = vmatpush1.bf16.msra.mxu0 %v3499
    %4324 = vmatprep.subr.bf16.mxu0 %v3504
    %4325 = vmatpush1.bf16.msra.mxu0 %v3503
    %4326 = vmatprep.subr.bf16.mxu0 %v3508
    %4327 = vmatpush1.bf16.msra.mxu0 %v3507
    %4328 = vmatprep.subr.bf16.mxu0 %v3512
    %4329 = vmatpush1.bf16.msra.mxu0 %v3511
    %4330 = vmatprep.subr.bf16.mxu0 %v3516
    %4331 = vmatpush1.bf16.msra.mxu0 %v3515
    %4332 = vmatprep.subr.bf16.mxu0 %v3520
    %4333 = vmatpush1.bf16.msra.mxu0 %v3519
    %4334 = vmatprep.subr.bf16.mxu0 0
    %4335 = vmatpush1.bf16.msra.mxu0 0
    %4336 = vmatprep.subr.bf16.mxu0 0
    %4337 = vmatpush1.bf16.msra.mxu0 0
    %4338 = vmatprep.subr.bf16.mxu0 0
    %4339 = vmatpush1.bf16.msra.mxu0 0
    %4340 = vmatprep.subr.bf16.mxu0 0
    %4341 = vmatpush1.bf16.msra.mxu0 0
    %4342 = vmatprep.subr.bf16.mxu0 0
    %4343 = vmatpush1.bf16.msra.mxu0 0
    %4344 = vmatprep.subr.bf16.mxu0 0
    %4345 = vmatpush1.bf16.msra.mxu0 0
    %4346 = vmatprep.subr.bf16.mxu0 0
    %4347 = vmatpush1.bf16.msra.mxu0 0
    %4348 = vmatprep.subr.bf16.mxu0 0
    %4349 = vmatpush1.bf16.msra.mxu0 0
    %4350 = vmatprep.mubr.bf16.mxu0 0
    %4351 = vmatmul.mubr.bf16.gmra.mrb[0].mxu0 %v4317
    %v4352 = vpop.f32.mrb[0].mxu0
    %v4353 = vadd.f32 0.0, %v4352
    %v4354 = vpop.f32.mrb[0].mxu0
    %v4355 = vadd.f32 0.0, %v4354
    %v4356 = vpop.f32.mrb[0].mxu0
    %v4357 = vpop.f32.mrb[0].mxu0
    %4358 = vdwg.mxu0
    %4359 = vmatprep.subr.bf16.mxu0 %v3494
    %4360 = vmatpush1.bf16.msra.mxu0 %v3493
    %4361 = vmatprep.subr.bf16.mxu0 %v3498
    %4362 = vmatpush1.bf16.msra.mxu0 %v3497
    %4363 = vmatprep.subr.bf16.mxu0 %v3502
    %4364 = vmatpush1.bf16.msra.mxu0 %v3501
    %4365 = vmatprep.subr.bf16.mxu0 %v3506
    %4366 = vmatpush1.bf16.msra.mxu0 %v3505
    %4367 = vmatprep.subr.bf16.mxu0 %v3510
    %4368 = vmatpush1.bf16.msra.mxu0 %v3509
    %4369 = vmatprep.subr.bf16.mxu0 %v3514
    %4370 = vmatpush1.bf16.msra.mxu0 %v3513
    %4371 = vmatprep.subr.bf16.mxu0 %v3518
    %4372 = vmatpush1.bf16.msra.mxu0 %v3517
    %4373 = vmatprep.subr.bf16.mxu0 %v3522
    %4374 = vmatpush1.bf16.msra.mxu0 %v3521
    %4375 = vmatprep.subr.bf16.mxu0 0
    %4376 = vmatpush1.bf16.msra.mxu0 0
    %4377 = vmatprep.subr.bf16.mxu0 0
    %4378 = vmatpush1.bf16.msra.mxu0 0
    %4379 = vmatprep.subr.bf16.mxu0 0
    %4380 = vmatpush1.bf16.msra.mxu0 0
    %4381 = vmatprep.subr.bf16.mxu0 0
    %4382 = vmatpush1.bf16.msra.mxu0 0
    %4383 = vmatprep.subr.bf16.mxu0 0
    %4384 = vmatpush1.bf16.msra.mxu0 0
    %4385 = vmatprep.subr.bf16.mxu0 0
    %4386 = vmatpush1.bf16.msra.mxu0 0
    %4387 = vmatprep.subr.bf16.mxu0 0
    %4388 = vmatpush1.bf16.msra.mxu0 0
    %4389 = vmatprep.subr.bf16.mxu0 0
    %4390 = vmatpush1.bf16.msra.mxu0 0
    %4391 = vmatprep.mubr.bf16.mxu0 0
    %4392 = vmatmul.mubr.bf16.gmra.mrb[0].mxu0 %v4317
    %v4393 = vpop.f32.mrb[0].mxu0
    %v4394 = vadd.f32 0.0, %v4393
    %v4395 = vpop.f32.mrb[0].mxu0
    %v4396 = vadd.f32 0.0, %v4395
    %v4397 = vpop.f32.mrb[0].mxu0
    %v4398 = vpop.f32.mrb[0].mxu0
    %4399 = vdwg.mxu0
    %v4400 = vadd.f32 %v4313, %v4353
    %v4401 = vadd.f32 %v4314, %v4355
    %v4402 = vadd.f32 %v4315, %v4394
    %v4403 = vadd.f32 %v4316, %v4396
    %v4404 = vmul.f32 %v4400, 0.5
    %v4405 = vtanh.pop %v4404
    %v4406 = vmul.f32 %v4405, 0.5
    %v4407 = vadd.f32 %v4406, 0.5
    %v4408 = vmul.f32 %v4401, 0.5
    %v4409 = vtanh.pop %v4408
    %v4410 = vmul.f32 %v4409, 0.5
    %v4411 = vadd.f32 %v4410, 0.5
    %v4412 = vtanh.pop %v4402
    %v4413 = vmul.f32 %v4403, 0.5
    %v4414 = vtanh.pop %v4413
    %v4415 = vmul.f32 %v4414, 0.5
    %v4416 = vadd.f32 %v4415, 0.5
    %v4417 = vmul.f32 %v4411, %v4310
    %v4418 = vmul.f32 %v4407, %v4412
    %v4419 = vadd.f32 %v4417, %v4418
    %v4420 = vtanh.pop %v4419
    %v4421 = vmul.f32 %v4416, %v4420
    %v4422 = vpack.c.bf16 %v4421, %v4421
    %v4423 = vld [vmem:[%s7] sm:$0xf]
    %v4424 = vld [vmem:[%s7 + $0x4] sm:$0xf]
    %v4425 = vld [vmem:[%s7 + $0x8] sm:$0xf]
    %v4426 = vld [vmem:[%s7 + $0xc] sm:$0xf]
    %v4427 = vld [vmem:[%s7 + $0x10] sm:$0xf]
    %v4428 = vld [vmem:[%s7 + $0x14] sm:$0xf]
    %v4429 = vld [vmem:[%s7 + $0x18] sm:$0xf]
    %v4430 = vld [vmem:[%s7 + $0x1c] sm:$0xf]
    %v4431 = vld [vmem:[%s7 + $0x20] sm:$0xf]
    %v4432 = vld [vmem:[%s7 + $0x24] sm:$0xf]
    %v4433 = vld [vmem:[%s7 + $0x28] sm:$0xf]
    %v4434 = vld [vmem:[%s7 + $0x2c] sm:$0xf]
    %v4435 = vld [vmem:[%s7 + $0x30] sm:$0xf]
    %v4436 = vld [vmem:[%s7 + $0x34] sm:$0xf]
    %v4437 = vld [vmem:[%s7 + $0x38] sm:$0xf]
    %v4438 = vld [vmem:[%s7 + $0x3c] sm:$0xf]
    %v4439 = vld [vmem:[%s8] sm:$0x1]
    %v4441 = vlaneseq
    %v4442 = vshrl.u32 %v4441, 7
    %v4443 = vsub.s32 0, %v4442
    %v4444 = vrot.slane %v4439, %v4443
    %v4462 = vunpack.c.l.b16 %v4423
    %v4463 = vunpack.c.l.b16 %v4424
    %v4464 = vunpack.c.l.b16 %v4425
    %v4465 = vunpack.c.l.b16 %v4426
    %v4466 = vunpack.c.l.b16 %v4427
    %v4467 = vunpack.c.l.b16 %v4428
    %v4468 = vunpack.c.l.b16 %v4429
    %v4469 = vunpack.c.l.b16 %v4430
    %v4470 = vunpack.c.l.b16 %v4431
    %v4471 = vunpack.c.l.b16 %v4432
    %v4472 = vunpack.c.l.b16 %v4433
    %v4473 = vunpack.c.l.b16 %v4434
    %v4474 = vunpack.c.l.b16 %v4435
    %v4475 = vunpack.c.l.b16 %v4436
    %v4476 = vunpack.c.l.b16 %v4437
    %v4477 = vunpack.c.l.b16 %v4438
    %v4478 = vpack.c.b16 %v4463, %v4462
    %v4479 = vpack.c.b16 %v4465, %v4464
    %v4480 = vpack.c.b16 %v4467, %v4466
    %v4481 = vpack.c.b16 %v4469, %v4468
    %v4482 = vpack.c.b16 %v4471, %v4470
    %v4483 = vpack.c.b16 %v4473, %v4472
    %v4484 = vpack.c.b16 %v4475, %v4474
    %v4485 = vpack.c.b16 %v4477, %v4476
    %4494 = vmatprep.subr.bf16.mxu0 0
    %4495 = vmatpush1.bf16.msra.mxu0 %v4478
    %4496 = vmatprep.subr.bf16.mxu0 0
    %4497 = vmatpush1.bf16.msra.mxu0 %v4479
    %4498 = vmatprep.subr.bf16.mxu0 0
    %4499 = vmatpush1.bf16.msra.mxu0 %v4480
    %4500 = vmatprep.subr.bf16.mxu0 0
    %4501 = vmatpush1.bf16.msra.mxu0 %v4481
    %4502 = vmatprep.subr.bf16.mxu0 0
    %4503 = vmatpush1.bf16.msra.mxu0 %v4482
    %4504 = vmatprep.subr.bf16.mxu0 0
    %4505 = vmatpush1.bf16.msra.mxu0 %v4483
    %4506 = vmatprep.subr.bf16.mxu0 0
    %4507 = vmatpush1.bf16.msra.mxu0 %v4484
    %4508 = vmatprep.subr.bf16.mxu0 0
    %4509 = vmatpush1.bf16.msra.mxu0 %v4485
    %4510 = vmatprep.subr.bf16.mxu0 0
    %4511 = vmatpush1.bf16.msra.mxu0 0
    %4512 = vmatprep.subr.bf16.mxu0 0
    %4513 = vmatpush1.bf16.msra.mxu0 0
    %4514 = vmatprep.subr.bf16.mxu0 0
    %4515 = vmatpush1.bf16.msra.mxu0 0
    %4516 = vmatprep.subr.bf16.mxu0 0
    %4517 = vmatpush1.bf16.msra.mxu0 0
    %4518 = vmatprep.subr.bf16.mxu0 0
    %4519 = vmatpush1.bf16.msra.mxu0 0
    %4520 = vmatprep.subr.bf16.mxu0 0
    %4521 = vmatpush1.bf16.msra.mxu0 0
    %4522 = vmatprep.subr.bf16.mxu0 0
    %4523 = vmatpush1.bf16.msra.mxu0 0
    %4524 = vmatprep.subr.bf16.mxu0 0
    %4525 = vmatpush1.bf16.msra.mxu0 0
    %4526 = vmatprep.mubr.bf16.mxu0 0
    %4527 = vmatmul.mubr.bf16.gmra.mrb[0].mxu0 %v4422
    %v4528 = vpop.f32.mrb[0].mxu0
    %v4529 = vadd.f32 %v4444, %v4528
    %v4530 = vpop.f32.mrb[0].mxu0
    %v4531 = vpop.f32.mrb[0].mxu0
    %v4532 = vpop.f32.mrb[0].mxu0
    %4533 = vdwg.mxu0
    %4534 = vst [vmem:[%s11] sm:$0xff] %v4529
    // Predicated region
    $region62: #{lstm_forward.1} parent=1 // pred_check
      _
    $region63: #{lstm_forward.1} parent=1 // pred_check_branch
      %4536 = sbr.rel (0) target = $region65
    $region64: #{lstm_forward.1} parent=1 // pred_region
      _
    $region65: #{lstm_forward.1} parent=1 // pred_fallthru
      _
    // Predicated region
    $region66: #{lstm_forward.1} parent=1 // pred_check
      _
    $region67: #{lstm_forward.1} parent=1 // pred_check_branch
      %4538 = sbr.rel (0) target = $region69
    $region68: #{lstm_forward.1} parent=1 // pred_region
      _
    $region69: #{lstm_forward.1} parent=1 // pred_fallthru
      _
    %4539 = vsyncpa [#allocation5], 1
    %4540 = vsyncpa [#allocation7], 1
    %4541 = vsyncpa [#allocation10], 1

</llo_original>
